<compile_context>
chip_gen: v7x
topology: tpu7x:2x2x1
jax: 0.10.0
libtpu: 0.0.40
codegen_flags: <defaults>
</compile_context>

<pallas_src>
import functools
import math

import jax
import jax.numpy as jnp
from jax.experimental import pallas as pl
from jax.experimental.pallas import tpu as pltpu


# ----------------------------------------------------------------------------
# Pallas kernel
# ----------------------------------------------------------------------------
def _cdae_kernel(num_layers, x_ref, uemb_ref, *wb_and_out):
    """Fused CDAE forward for one batch tile.

    Refs:
      x_ref    : (TB, D_in_p)      input tile (bf16)
      uemb_ref : (TB, D_h0_p)      gathered user embedding (f32, zeros if unused)
      wb_and_out : w0, b0, w1, b1, ..., w{L-1}, b{L-1}, out_ref
                   w_i: (d_in_i_p, d_out_i_p) bf16, b_i: (1, d_out_i_p) f32
      out_ref  : (TB, D_out_p)
    """
    out_ref = wb_and_out[-1]
    wb = wb_and_out[:-1]

    x = x_ref[...].astype(jnp.float32)

    # F.normalize(input): x / max(||x||_2, eps), rewritten with rsqrt so the
    # transcendental lands on the EUP slot and the remaining work is one vmul.
    sq = jnp.sum(x * x, axis=-1, keepdims=True)
    h = x * jax.lax.rsqrt(jnp.maximum(sq, 1e-24))   # == x / max(||x||, 1e-12)

    # TODO(synk): self.drop / self.dd are nn.Dropout -> identity at eval time
    # (use_dropout=False); stochastic training-time dropout is not implemented.

    for i in range(num_layers):
        w = wb[2 * i][...]                     # (d_in_p, d_out_p) bf16
        b = wb[2 * i + 1][...]                 # (1, d_out_p) f32
        h = jnp.dot(h.astype(w.dtype), w,
                    preferred_element_type=jnp.float32) + b
        if i == 0:
            h = h + uemb_ref[...].astype(jnp.float32)   # per-user bias V_u(user)
        if i != num_layers - 1:
            h = jnp.tanh(h)

    out_ref[...] = h.astype(out_ref.dtype)


# ----------------------------------------------------------------------------
# Helpers
# ----------------------------------------------------------------------------
def _round_up(n, m):
    return ((n + m - 1) // m) * m


def _pick_tile_b(B, max_tile=512):
    """Largest batch tile that is a multiple of 16 (bf16 sublane packing),
    divides B, is <= max_tile, and leaves >= 2 grid steps when possible
    (pipelining + megacore sharding on v7x)."""
    cands = [t for t in range(16, min(B, max_tile) + 1, 16) if B % t == 0]
    if not cands:
        return B            # tiny/odd batch: a full-array block is always legal
    multi = [t for t in cands if B // t >= 2]
    return max(multi) if multi else max(cands)


def _pad_cdae_params(weights, biases, compute_dtype, lane=128):
    """Zero-pad every layer width to a multiple of `lane` and cast weights to the
    matmul compute dtype.  Zero padding is exact (see header note)."""
    wp, bp = [], []
    d_in_p = _round_up(weights[0].shape[0], lane)
    for w, b in zip(weights, biases):
        di, do = w.shape
        do_p = _round_up(do, lane)
        w_pad = jnp.zeros((d_in_p, do_p), compute_dtype).at[:di, :do].set(
            w.astype(compute_dtype))
        b_pad = jnp.zeros((1, do_p), jnp.float32).at[:, :do].set(
            b.reshape(1, -1).astype(jnp.float32))
        wp.append(w_pad)
        bp.append(b_pad)
        d_in_p = do_p
    return wp, bp


# ----------------------------------------------------------------------------
# Wrapper
# ----------------------------------------------------------------------------
def cdae_forward(x, user_emb, weights, biases, *, tile_b=None,
                 compute_dtype=jnp.bfloat16, out_dtype=jnp.float32,
                 single_buffer_weights=True):
    """x: (B, D_in), user_emb: (B, dims[1]),
    weights[i]: (d_in_i, d_out_i), biases[i]: (1, d_out_i).

    In production, pad/cast the parameters once (outside this call) and keep x
    in bf16 in HBM; it is done here per-call only to keep the demo self-contained.
    """
    B, D_in = x.shape
    num_layers = len(weights)
    D_out = weights[-1].shape[1]

    # --- parameter / activation layout: bf16 weights, 128-lane padded widths ---
    wp, bp = _pad_cdae_params(weights, biases, compute_dtype)
    D_in_p = wp[0].shape[0]
    D_h0_p = wp[0].shape[1]
    D_out_p = wp[-1].shape[1]

    x_c = x.astype(compute_dtype)
    if D_in_p != D_in:
        x_c = jnp.zeros((B, D_in_p), compute_dtype).at[:, :D_in].set(x_c)
    ue = user_emb.astype(jnp.float32)
    if D_h0_p != user_emb.shape[1]:
        ue = jnp.zeros((B, D_h0_p), jnp.float32).at[:, :user_emb.shape[1]].set(ue)

    # --- batch tiling / grid ---
    if tile_b is None:
        tile_b = _pick_tile_b(B)
    assert B % tile_b == 0
    grid = (B // tile_b,)

    # --- VMEM budget (explicit limit) and cost estimate ---
    cbytes = jnp.dtype(compute_dtype).itemsize
    obytes = jnp.dtype(out_dtype).itemsize
    param_bytes = (sum(int(w.size) * w.dtype.itemsize for w in wp)
                   + sum(int(b.size) * b.dtype.itemsize for b in bp))
    block_bytes = (2 * tile_b * D_in_p * cbytes        # x tile, double-buffered
                   + 2 * tile_b * D_h0_p * 4           # user-emb tile
                   + 2 * tile_b * D_out_p * obytes)    # out tile
    act_bytes = 4 * tile_b * (D_in_p + sum(int(w.shape[1]) for w in wp))  # f32 temps
    needed = 2 * param_bytes + block_bytes + 2 * act_bytes
    vmem_limit = int(min(max(needed + (2 << 20), 16 << 20), 48 << 20))
    # TODO(synk): for very large item counts (D_in >> 10k) a K/N-tiled path for the
    # first/last matmul (second "arbitrary" grid axis + VMEM accumulator) is needed;
    # this kernel assumes the padded weights and one (tile_b, D_in_p) tile fit VMEM.

    flops = 2 * B * sum(int(w.shape[0]) * int(w.shape[1]) for w in wp)
    transcendentals = B * (sum(int(w.shape[1]) for w in wp[:-1]) + 1)
    bytes_accessed = (int(x_c.size) * cbytes + int(ue.size) * 4
                      + param_bytes + B * D_out_p * obytes)
    cost = pl.CostEstimate(flops=int(flops),
                           transcendentals=int(transcendentals),
                           bytes_accessed=int(bytes_accessed))

    kernel = functools.partial(_cdae_kernel, num_layers)
    args = [x_c, ue]
    for w, b in zip(wp, bp):
        args += [w, b]

    def build(buffer_params_once):
        def const_spec(shape):
            if buffer_params_once:
                # constant index_map -> never re-fetched; single buffer halves
                # VMEM residency of the (potentially large) weights.
                return pl.BlockSpec(shape, lambda i: (0, 0),
                                    pipeline_mode=pl.Buffered(1))
            return pl.BlockSpec(shape, lambda i: (0, 0))

        in_specs = [
            pl.BlockSpec((tile_b, D_in_p), lambda i: (i, 0)),    # x
            pl.BlockSpec((tile_b, D_h0_p), lambda i: (i, 0)),    # user embedding
        ]
        for w, b in zip(wp, bp):
            in_specs.append(const_spec(w.shape))
            in_specs.append(const_spec(b.shape))
        out_spec = pl.BlockSpec((tile_b, D_out_p), lambda i: (i, 0))

        return pl.pallas_call(
            kernel,
            out_shape=jax.ShapeDtypeStruct((B, D_out_p), out_dtype),
            grid=grid,
            in_specs=in_specs,
            out_specs=out_spec,
            compiler_params=pltpu.CompilerParams(
                dimension_semantics=("parallel",),
                vmem_limit_bytes=vmem_limit),
            cost_estimate=cost,
        )

    if single_buffer_weights:
        try:
            out = jax.block_until_ready(build(True)(*args))
        except Exception:
            # pipeline_mode not supported by this jax build -> default buffering.
            out = build(False)(*args)
    else:
        out = build(False)(*args)

    if D_out_p != D_out:
        out = out[:, :D_out]
    return out


# ----------------------------------------------------------------------------
# Deterministic parameter initialization (mirrors CDAE.init_weights)
# ----------------------------------------------------------------------------
def init_cdae_params(key, p_dims, n_users):
    q_dims = p_dims[::-1]
    dims = q_dims + p_dims[1:]          # e.g. [128, 64, 32, 64, 128]
    weights, biases = [], []
    for d_in, d_out in zip(dims[:-1], dims[1:]):
        key, kw, kb = jax.random.split(key, 3)
        # xavier_uniform_ on PyTorch weight (d_out, d_in); store transposed (d_in, d_out)
        limit = jnp.sqrt(6.0 / (d_in + d_out))
        w = jax.random.uniform(kw, (d_in, d_out), jnp.float32, -limit, limit)
        b = 0.001 * jax.random.normal(kb, (1, d_out), jnp.float32)
        b = jnp.clip(b, -0.001, 0.001)
        weights.append(w)
        biases.append(b)
    key, ke = jax.random.split(key)
    v_u = 0.001 * jax.random.normal(ke, (n_users, p_dims[-2]), jnp.float32)
    return dims, weights, biases, v_u


# ----------------------------------------------------------------------------
# Pure-JAX reference (mirrors the kernel's bf16-matmul / f32-accumulate precision)
# ----------------------------------------------------------------------------
def cdae_reference(x, user_emb, weights, biases, compute_dtype=jnp.bfloat16):
    x = x.astype(compute_dtype).astype(jnp.float32)
    sq = jnp.sum(x * x, axis=-1, keepdims=True)
    h = x * jax.lax.rsqrt(jnp.maximum(sq, 1e-24))
    n = len(weights)
    for i, (w, b) in enumerate(zip(weights, biases)):
        h = jnp.dot(h.astype(compute_dtype), w.astype(compute_dtype),
                    preferred_element_type=jnp.float32) + b.astype(jnp.float32)
        if i == 0:
            h = h + user_emb.astype(jnp.float32)
        if i != n - 1:
            h = jnp.tanh(h)
    return h


if __name__ == "__main__":
    # Small, module-consistent shapes:
    #   p_dims = [32, 64, 128] -> dims = [128, 64, 32, 64, 128]
    #   input (B, p_dims[-1]) = (256, 128); user embedding dim = p_dims[-2] = 64
    #   tile_b is auto-chosen (128) -> grid=(2,) so the pipeline / megacore path runs.
    p_dims = [32, 64, 128]
    n_users = 50
    B = 256

    key = jax.random.PRNGKey(0)
    key, kx, ku = jax.random.split(key, 3)

    dims, weights, biases, v_u = init_cdae_params(key, p_dims, n_users)

    x = (jax.random.uniform(kx, (B, p_dims[-1]), jnp.float32) > 0.7).astype(jnp.float32)
    user = jax.random.randint(ku, (B,), 0, n_users)
    user_emb = v_u[user]                # gather done in JAX glue; added inside kernel

    out = cdae_forward(x, user_emb, weights, biases)
    out = jax.block_until_ready(out)

    ref = cdae_reference(x, user_emb, weights, biases)
    assert out.shape == (B, dims[-1]), (out.shape, (B, dims[-1]))
    max_err = float(jnp.max(jnp.abs(out - ref)))
    assert jnp.allclose(out, ref, atol=5e-3, rtol=5e-3), \
        f"mismatch vs JAX reference (max abs err {max_err})"

    print("KERNEL_OK")
</pallas_src>

<mosaic_0001>
module attributes {stable_mosaic.version = 11 : i64} {
  func.func @_cdae_kernel(%arg0: i32, %arg1: memref<128x128xbf16, #tpu.memory_space<vmem>>, %arg2: memref<128x128xf32, #tpu.memory_space<vmem>>, %arg3: memref<128x128xbf16, #tpu.memory_space<vmem>>, %arg4: memref<1x128xf32, #tpu.memory_space<vmem>>, %arg5: memref<128x128xbf16, #tpu.memory_space<vmem>>, %arg6: memref<1x128xf32, #tpu.memory_space<vmem>>, %arg7: memref<128x128xbf16, #tpu.memory_space<vmem>>, %arg8: memref<1x128xf32, #tpu.memory_space<vmem>>, %arg9: memref<128x128xbf16, #tpu.memory_space<vmem>>, %arg10: memref<1x128xf32, #tpu.memory_space<vmem>>, %arg11: memref<128x128xf32, #tpu.memory_space<vmem>>) attributes {dimension_semantics = [#tpu.dimension_semantics<parallel>], iteration_bounds = array<i64: 2>, scalar_prefetch = 0 : i64, scratch_operands = 0 : i64, tpu.core_type = #tpu.core_type<tc>, window_params = [{transform_indices = @transform_0, window_bounds = array<i64: 128, 128>}, {transform_indices = @transform_1, window_bounds = array<i64: 128, 128>}, {pipeline_mode = #tpu.pipeline_mode<synchronous>, transform_indices = @transform_2, window_bounds = array<i64: 128, 128>}, {pipeline_mode = #tpu.pipeline_mode<synchronous>, transform_indices = @transform_3, window_bounds = array<i64: 1, 128>}, {pipeline_mode = #tpu.pipeline_mode<synchronous>, transform_indices = @transform_4, window_bounds = array<i64: 128, 128>}, {pipeline_mode = #tpu.pipeline_mode<synchronous>, transform_indices = @transform_5, window_bounds = array<i64: 1, 128>}, {pipeline_mode = #tpu.pipeline_mode<synchronous>, transform_indices = @transform_6, window_bounds = array<i64: 128, 128>}, {pipeline_mode = #tpu.pipeline_mode<synchronous>, transform_indices = @transform_7, window_bounds = array<i64: 1, 128>}, {pipeline_mode = #tpu.pipeline_mode<synchronous>, transform_indices = @transform_8, window_bounds = array<i64: 128, 128>}, {pipeline_mode = #tpu.pipeline_mode<synchronous>, transform_indices = @transform_9, window_bounds = array<i64: 1, 128>}, {transform_indices = @transform_10, window_bounds = array<i64: 128, 128>}]} {
    %c0 = arith.constant 0 : index
    %c0_0 = arith.constant 0 : index
    %0 = vector.load %arg1[%c0, %c0_0] : memref<128x128xbf16, #tpu.memory_space<vmem>>, vector<128x128xbf16>
    %1 = arith.extf %0 : vector<128x128xbf16> to vector<128x128xf32>
    %2 = arith.mulf %1, %1 : vector<128x128xf32>
    %cst = arith.constant dense<0.000000e+00> : vector<128xf32>
    %3 = vector.multi_reduction <add>, %2, %cst [1] : vector<128x128xf32> to vector<128xf32>
    %4 = vector.shape_cast %3 : vector<128xf32> to vector<128x1xf32>
    %cst_1 = arith.constant 1.000000e-24 : f32
    %5 = vector.broadcast %cst_1 : f32 to vector<128x1xf32>
    %6 = arith.maximumf %4, %5 : vector<128x1xf32>
    %7 = math.rsqrt %6 : vector<128x1xf32>
    %8 = vector.broadcast %7 : vector<128x1xf32> to vector<128x128xf32>
    %9 = arith.mulf %1, %8 : vector<128x128xf32>
    %c0_2 = arith.constant 0 : index
    %c0_3 = arith.constant 0 : index
    %10 = vector.load %arg3[%c0_2, %c0_3] : memref<128x128xbf16, #tpu.memory_space<vmem>>, vector<128x128xbf16>
    %c0_4 = arith.constant 0 : index
    %c0_5 = arith.constant 0 : index
    %11 = vector.load %arg4[%c0_4, %c0_5] : memref<1x128xf32, #tpu.memory_space<vmem>>, vector<1x128xf32>
    %12 = arith.truncf %9 : vector<128x128xf32> to vector<128x128xbf16>
    %cst_6 = arith.constant dense<0.000000e+00> : vector<128x128xf32>
    %13 = tpu.matmul %12, %10, %cst_6 {dimension_numbers = #tpu.dot_dimension_numbers<[1], [0], [0], [1], [0, 0, 1, 1], [], []>} : vector<128x128xbf16>, vector<128x128xbf16>, vector<128x128xf32> -> vector<128x128xf32>
    %14 = vector.broadcast %11 : vector<1x128xf32> to vector<128x128xf32>
    %15 = arith.addf %13, %14 : vector<128x128xf32>
    %c0_7 = arith.constant 0 : index
    %c0_8 = arith.constant 0 : index
    %16 = vector.load %arg2[%c0_7, %c0_8] : memref<128x128xf32, #tpu.memory_space<vmem>>, vector<128x128xf32>
    %17 = arith.addf %15, %16 : vector<128x128xf32>
    %18 = math.tanh %17 : vector<128x128xf32>
    %c0_9 = arith.constant 0 : index
    %c0_10 = arith.constant 0 : index
    %19 = vector.load %arg5[%c0_9, %c0_10] : memref<128x128xbf16, #tpu.memory_space<vmem>>, vector<128x128xbf16>
    %c0_11 = arith.constant 0 : index
    %c0_12 = arith.constant 0 : index
    %20 = vector.load %arg6[%c0_11, %c0_12] : memref<1x128xf32, #tpu.memory_space<vmem>>, vector<1x128xf32>
    %21 = arith.truncf %18 : vector<128x128xf32> to vector<128x128xbf16>
    %cst_13 = arith.constant dense<0.000000e+00> : vector<128x128xf32>
    %22 = tpu.matmul %21, %19, %cst_13 {dimension_numbers = #tpu.dot_dimension_numbers<[1], [0], [0], [1], [0, 0, 1, 1], [], []>} : vector<128x128xbf16>, vector<128x128xbf16>, vector<128x128xf32> -> vector<128x128xf32>
    %23 = vector.broadcast %20 : vector<1x128xf32> to vector<128x128xf32>
    %24 = arith.addf %22, %23 : vector<128x128xf32>
    %25 = math.tanh %24 : vector<128x128xf32>
    %c0_14 = arith.constant 0 : index
    %c0_15 = arith.constant 0 : index
    %26 = vector.load %arg7[%c0_14, %c0_15] : memref<128x128xbf16, #tpu.memory_space<vmem>>, vector<128x128xbf16>
    %c0_16 = arith.constant 0 : index
    %c0_17 = arith.constant 0 : index
    %27 = vector.load %arg8[%c0_16, %c0_17] : memref<1x128xf32, #tpu.memory_space<vmem>>, vector<1x128xf32>
    %28 = arith.truncf %25 : vector<128x128xf32> to vector<128x128xbf16>
    %cst_18 = arith.constant dense<0.000000e+00> : vector<128x128xf32>
    %29 = tpu.matmul %28, %26, %cst_18 {dimension_numbers = #tpu.dot_dimension_numbers<[1], [0], [0], [1], [0, 0, 1, 1], [], []>} : vector<128x128xbf16>, vector<128x128xbf16>, vector<128x128xf32> -> vector<128x128xf32>
    %30 = vector.broadcast %27 : vector<1x128xf32> to vector<128x128xf32>
    %31 = arith.addf %29, %30 : vector<128x128xf32>
    %32 = math.tanh %31 : vector<128x128xf32>
    %c0_19 = arith.constant 0 : index
    %c0_20 = arith.constant 0 : index
    %33 = vector.load %arg9[%c0_19, %c0_20] : memref<128x128xbf16, #tpu.memory_space<vmem>>, vector<128x128xbf16>
    %c0_21 = arith.constant 0 : index
    %c0_22 = arith.constant 0 : index
    %34 = vector.load %arg10[%c0_21, %c0_22] : memref<1x128xf32, #tpu.memory_space<vmem>>, vector<1x128xf32>
    %35 = arith.truncf %32 : vector<128x128xf32> to vector<128x128xbf16>
    %cst_23 = arith.constant dense<0.000000e+00> : vector<128x128xf32>
    %36 = tpu.matmul %35, %33, %cst_23 {dimension_numbers = #tpu.dot_dimension_numbers<[1], [0], [0], [1], [0, 0, 1, 1], [], []>} : vector<128x128xbf16>, vector<128x128xbf16>, vector<128x128xf32> -> vector<128x128xf32>
    %37 = vector.broadcast %34 : vector<1x128xf32> to vector<128x128xf32>
    %38 = arith.addf %36, %37 : vector<128x128xf32>
    %c0_24 = arith.constant 0 : index
    %c0_25 = arith.constant 0 : index
    %39 = vector.load %arg11[%c0_24, %c0_25] : memref<128x128xf32, #tpu.memory_space<vmem>>, vector<128x128xf32>
    tpu.vector_store %arg11[%c0_24, %c0_25], %38 {strides = array<i32>} : memref<128x128xf32, #tpu.memory_space<vmem>>, vector<128x128xf32>,
    return
  }
  func.func @transform_0(%arg0: i32) -> (i32, i32) {
    %c0_i32 = arith.constant 0 : i32
    %c0_i32_0 = arith.constant 0 : i32
    return %arg0, %c0_i32 : i32, i32
  }
  func.func @transform_1(%arg0: i32) -> (i32, i32) {
    %c0_i32 = arith.constant 0 : i32
    %c0_i32_0 = arith.constant 0 : i32
    return %arg0, %c0_i32 : i32, i32
  }
  func.func @transform_2(%arg0: i32) -> (i32, i32) {
    %c0_i32 = arith.constant 0 : i32
    %c0_i32_0 = arith.constant 0 : i32
    %c0_i32_1 = arith.constant 0 : i32
    return %c0_i32, %c0_i32_0 : i32, i32
  }
  func.func @transform_3(%arg0: i32) -> (i32, i32) {
    %c0_i32 = arith.constant 0 : i32
    %c0_i32_0 = arith.constant 0 : i32
    %c0_i32_1 = arith.constant 0 : i32
    return %c0_i32, %c0_i32_0 : i32, i32
  }
  func.func @transform_4(%arg0: i32) -> (i32, i32) {
    %c0_i32 = arith.constant 0 : i32
    %c0_i32_0 = arith.constant 0 : i32
    %c0_i32_1 = arith.constant 0 : i32
    return %c0_i32, %c0_i32_0 : i32, i32
  }
  func.func @transform_5(%arg0: i32) -> (i32, i32) {
    %c0_i32 = arith.constant 0 : i32
    %c0_i32_0 = arith.constant 0 : i32
    %c0_i32_1 = arith.constant 0 : i32
    return %c0_i32, %c0_i32_0 : i32, i32
  }
  func.func @transform_6(%arg0: i32) -> (i32, i32) {
    %c0_i32 = arith.constant 0 : i32
    %c0_i32_0 = arith.constant 0 : i32
    %c0_i32_1 = arith.constant 0 : i32
    return %c0_i32, %c0_i32_0 : i32, i32
  }
  func.func @transform_7(%arg0: i32) -> (i32, i32) {
    %c0_i32 = arith.constant 0 : i32
    %c0_i32_0 = arith.constant 0 : i32
    %c0_i32_1 = arith.constant 0 : i32
    return %c0_i32, %c0_i32_0 : i32, i32
  }
  func.func @transform_8(%arg0: i32) -> (i32, i32) {
    %c0_i32 = arith.constant 0 : i32
    %c0_i32_0 = arith.constant 0 : i32
    %c0_i32_1 = arith.constant 0 : i32
    return %c0_i32, %c0_i32_0 : i32, i32
  }
  func.func @transform_9(%arg0: i32) -> (i32, i32) {
    %c0_i32 = arith.constant 0 : i32
    %c0_i32_0 = arith.constant 0 : i32
    %c0_i32_1 = arith.constant 0 : i32
    return %c0_i32, %c0_i32_0 : i32, i32
  }
  func.func @transform_10(%arg0: i32) -> (i32, i32) {
    %c0_i32 = arith.constant 0 : i32
    %c0_i32_0 = arith.constant 0 : i32
    return %arg0, %c0_i32 : i32, i32
  }
}

module attributes {stable_mosaic.version = 11 : i64} {
  func.func @_cdae_kernel(%arg0: i32, %arg1: memref<128x128xbf16, #tpu.memory_space<vmem>>, %arg2: memref<128x128xf32, #tpu.memory_space<vmem>>, %arg3: memref<128x128xbf16, #tpu.memory_space<vmem>>, %arg4: memref<1x128xf32, #tpu.memory_space<vmem>>, %arg5: memref<128x128xbf16, #tpu.memory_space<vmem>>, %arg6: memref<1x128xf32, #tpu.memory_space<vmem>>, %arg7: memref<128x128xbf16, #tpu.memory_space<vmem>>, %arg8: memref<1x128xf32, #tpu.memory_space<vmem>>, %arg9: memref<128x128xbf16, #tpu.memory_space<vmem>>, %arg10: memref<1x128xf32, #tpu.memory_space<vmem>>, %arg11: memref<128x128xf32, #tpu.memory_space<vmem>>) attributes {dimension_semantics = [#tpu.dimension_semantics<parallel>], iteration_bounds = array<i64: 2>, scalar_prefetch = 0 : i64, scratch_operands = 0 : i64, tpu.core_type = #tpu.core_type<tc>, window_params = [{transform_indices = @transform_0, window_bounds = array<i64: 128, 128>}, {transform_indices = @transform_1, window_bounds = array<i64: 128, 128>}, {pipeline_mode = #tpu.pipeline_mode<synchronous>, transform_indices = @transform_2, window_bounds = array<i64: 128, 128>}, {pipeline_mode = #tpu.pipeline_mode<synchronous>, transform_indices = @transform_3, window_bounds = array<i64: 1, 128>}, {pipeline_mode = #tpu.pipeline_mode<synchronous>, transform_indices = @transform_4, window_bounds = array<i64: 128, 128>}, {pipeline_mode = #tpu.pipeline_mode<synchronous>, transform_indices = @transform_5, window_bounds = array<i64: 1, 128>}, {pipeline_mode = #tpu.pipeline_mode<synchronous>, transform_indices = @transform_6, window_bounds = array<i64: 128, 128>}, {pipeline_mode = #tpu.pipeline_mode<synchronous>, transform_indices = @transform_7, window_bounds = array<i64: 1, 128>}, {pipeline_mode = #tpu.pipeline_mode<synchronous>, transform_indices = @transform_8, window_bounds = array<i64: 128, 128>}, {pipeline_mode = #tpu.pipeline_mode<synchronous>, transform_indices = @transform_9, window_bounds = array<i64: 1, 128>}, {transform_indices = @transform_10, window_bounds = array<i64: 128, 128>}]} {
    %c0 = arith.constant 0 : index
    %c0_0 = arith.constant 0 : index
    %0 = vector.load %arg1[%c0, %c0_0] : memref<128x128xbf16, #tpu.memory_space<vmem>>, vector<128x128xbf16>
    %1 = arith.extf %0 : vector<128x128xbf16> to vector<128x128xf32>
    %2 = arith.mulf %1, %1 : vector<128x128xf32>
    %cst = arith.constant dense<0.000000e+00> : vector<128xf32>
    %3 = vector.multi_reduction <add>, %2, %cst [1] : vector<128x128xf32> to vector<128xf32>
    %4 = vector.shape_cast %3 : vector<128xf32> to vector<128x1xf32>
    %cst_1 = arith.constant 1.000000e-24 : f32
    %5 = vector.broadcast %cst_1 : f32 to vector<128x1xf32>
    %6 = arith.maximumf %4, %5 : vector<128x1xf32>
    %7 = math.rsqrt %6 : vector<128x1xf32>
    %8 = vector.broadcast %7 : vector<128x1xf32> to vector<128x128xf32>
    %9 = arith.mulf %1, %8 : vector<128x128xf32>
    %c0_2 = arith.constant 0 : index
    %c0_3 = arith.constant 0 : index
    %10 = vector.load %arg3[%c0_2, %c0_3] : memref<128x128xbf16, #tpu.memory_space<vmem>>, vector<128x128xbf16>
    %c0_4 = arith.constant 0 : index
    %c0_5 = arith.constant 0 : index
    %11 = vector.load %arg4[%c0_4, %c0_5] : memref<1x128xf32, #tpu.memory_space<vmem>>, vector<1x128xf32>
    %12 = arith.truncf %9 : vector<128x128xf32> to vector<128x128xbf16>
    %cst_6 = arith.constant dense<0.000000e+00> : vector<128x128xf32>
    %13 = tpu.matmul %12, %10, %cst_6 {dimension_numbers = #tpu.dot_dimension_numbers<[1], [0], [0], [1], [0, 0, 1, 1], [], []>} : vector<128x128xbf16>, vector<128x128xbf16>, vector<128x128xf32> -> vector<128x128xf32>
    %14 = vector.broadcast %11 : vector<1x128xf32> to vector<128x128xf32>
    %15 = arith.addf %13, %14 : vector<128x128xf32>
    %c0_7 = arith.constant 0 : index
    %c0_8 = arith.constant 0 : index
    %16 = vector.load %arg2[%c0_7, %c0_8] : memref<128x128xf32, #tpu.memory_space<vmem>>, vector<128x128xf32>
    %17 = arith.addf %15, %16 : vector<128x128xf32>
    %18 = math.tanh %17 : vector<128x128xf32>
    %c0_9 = arith.constant 0 : index
    %c0_10 = arith.constant 0 : index
    %19 = vector.load %arg5[%c0_9, %c0_10] : memref<128x128xbf16, #tpu.memory_space<vmem>>, vector<128x128xbf16>
    %c0_11 = arith.constant 0 : index
    %c0_12 = arith.constant 0 : index
    %20 = vector.load %arg6[%c0_11, %c0_12] : memref<1x128xf32, #tpu.memory_space<vmem>>, vector<1x128xf32>
    %21 = arith.truncf %18 : vector<128x128xf32> to vector<128x128xbf16>
    %cst_13 = arith.constant dense<0.000000e+00> : vector<128x128xf32>
    %22 = tpu.matmul %21, %19, %cst_13 {dimension_numbers = #tpu.dot_dimension_numbers<[1], [0], [0], [1], [0, 0, 1, 1], [], []>} : vector<128x128xbf16>, vector<128x128xbf16>, vector<128x128xf32> -> vector<128x128xf32>
    %23 = vector.broadcast %20 : vector<1x128xf32> to vector<128x128xf32>
    %24 = arith.addf %22, %23 : vector<128x128xf32>
    %25 = math.tanh %24 : vector<128x128xf32>
    %c0_14 = arith.constant 0 : index
    %c0_15 = arith.constant 0 : index
    %26 = vector.load %arg7[%c0_14, %c0_15] : memref<128x128xbf16, #tpu.memory_space<vmem>>, vector<128x128xbf16>
    %c0_16 = arith.constant 0 : index
    %c0_17 = arith.constant 0 : index
    %27 = vector.load %arg8[%c0_16, %c0_17] : memref<1x128xf32, #tpu.memory_space<vmem>>, vector<1x128xf32>
    %28 = arith.truncf %25 : vector<128x128xf32> to vector<128x128xbf16>
    %cst_18 = arith.constant dense<0.000000e+00> : vector<128x128xf32>
    %29 = tpu.matmul %28, %26, %cst_18 {dimension_numbers = #tpu.dot_dimension_numbers<[1], [0], [0], [1], [0, 0, 1, 1], [], []>} : vector<128x128xbf16>, vector<128x128xbf16>, vector<128x128xf32> -> vector<128x128xf32>
    %30 = vector.broadcast %27 : vector<1x128xf32> to vector<128x128xf32>
    %31 = arith.addf %29, %30 : vector<128x128xf32>
    %32 = math.tanh %31 : vector<128x128xf32>
    %c0_19 = arith.constant 0 : index
    %c0_20 = arith.constant 0 : index
    %33 = vector.load %arg9[%c0_19, %c0_20] : memref<128x128xbf16, #tpu.memory_space<vmem>>, vector<128x128xbf16>
    %c0_21 = arith.constant 0 : index
    %c0_22 = arith.constant 0 : index
    %34 = vector.load %arg10[%c0_21, %c0_22] : memref<1x128xf32, #tpu.memory_space<vmem>>, vector<1x128xf32>
    %35 = arith.truncf %32 : vector<128x128xf32> to vector<128x128xbf16>
    %cst_23 = arith.constant dense<0.000000e+00> : vector<128x128xf32>
    %36 = tpu.matmul %35, %33, %cst_23 {dimension_numbers = #tpu.dot_dimension_numbers<[1], [0], [0], [1], [0, 0, 1, 1], [], []>} : vector<128x128xbf16>, vector<128x128xbf16>, vector<128x128xf32> -> vector<128x128xf32>
    %37 = vector.broadcast %34 : vector<1x128xf32> to vector<128x128xf32>
    %38 = arith.addf %36, %37 : vector<128x128xf32>
    %c0_24 = arith.constant 0 : index
    %c0_25 = arith.constant 0 : index
    %39 = vector.load %arg11[%c0_24, %c0_25] : memref<128x128xf32, #tpu.memory_space<vmem>>, vector<128x128xf32>
    tpu.vector_store %arg11[%c0_24, %c0_25], %38 {strides = array<i32>} : memref<128x128xf32, #tpu.memory_space<vmem>>, vector<128x128xf32>,
    return
  }
  func.func @transform_0(%arg0: i32) -> (i32, i32) {
    %c0_i32 = arith.constant 0 : i32
    %c0_i32_0 = arith.constant 0 : i32
    return %arg0, %c0_i32 : i32, i32
  }
  func.func @transform_1(%arg0: i32) -> (i32, i32) {
    %c0_i32 = arith.constant 0 : i32
    %c0_i32_0 = arith.constant 0 : i32
    return %arg0, %c0_i32 : i32, i32
  }
  func.func @transform_2(%arg0: i32) -> (i32, i32) {
    %c0_i32 = arith.constant 0 : i32
    %c0_i32_0 = arith.constant 0 : i32
    %c0_i32_1 = arith.constant 0 : i32
    return %c0_i32, %c0_i32_0 : i32, i32
  }
  func.func @transform_3(%arg0: i32) -> (i32, i32) {
    %c0_i32 = arith.constant 0 : i32
    %c0_i32_0 = arith.constant 0 : i32
    %c0_i32_1 = arith.constant 0 : i32
    return %c0_i32, %c0_i32_0 : i32, i32
  }
  func.func @transform_4(%arg0: i32) -> (i32, i32) {
    %c0_i32 = arith.constant 0 : i32
    %c0_i32_0 = arith.constant 0 : i32
    %c0_i32_1 = arith.constant 0 : i32
    return %c0_i32, %c0_i32_0 : i32, i32
  }
  func.func @transform_5(%arg0: i32) -> (i32, i32) {
    %c0_i32 = arith.constant 0 : i32
    %c0_i32_0 = arith.constant 0 : i32
    %c0_i32_1 = arith.constant 0 : i32
    return %c0_i32, %c0_i32_0 : i32, i32
  }
  func.func @transform_6(%arg0: i32) -> (i32, i32) {
    %c0_i32 = arith.constant 0 : i32
    %c0_i32_0 = arith.constant 0 : i32
    %c0_i32_1 = arith.constant 0 : i32
    return %c0_i32, %c0_i32_0 : i32, i32
  }
  func.func @transform_7(%arg0: i32) -> (i32, i32) {
    %c0_i32 = arith.constant 0 : i32
    %c0_i32_0 = arith.constant 0 : i32
    %c0_i32_1 = arith.constant 0 : i32
    return %c0_i32, %c0_i32_0 : i32, i32
  }
  func.func @transform_8(%arg0: i32) -> (i32, i32) {
    %c0_i32 = arith.constant 0 : i32
    %c0_i32_0 = arith.constant 0 : i32
    %c0_i32_1 = arith.constant 0 : i32
    return %c0_i32, %c0_i32_0 : i32, i32
  }
  func.func @transform_9(%arg0: i32) -> (i32, i32) {
    %c0_i32 = arith.constant 0 : i32
    %c0_i32_0 = arith.constant 0 : i32
    %c0_i32_1 = arith.constant 0 : i32
    return %c0_i32, %c0_i32_0 : i32, i32
  }
  func.func @transform_10(%arg0: i32) -> (i32, i32) {
    %c0_i32 = arith.constant 0 : i32
    %c0_i32_0 = arith.constant 0 : i32
    return %arg0, %c0_i32 : i32, i32
  }
}

</mosaic_0001>

<llo_original>
// kernel: tpu_custom_call.1
$region0: #{tpu_custom_call.1}
  #allocation0 [shape = 'u32[]', space=smem, size = 0x4, offset = 0x4, fixed_abs, tag = 'smem constant byte address 0x4 - core index']
  #allocation1 [shape = 'u32[144,128]{1,0:T(1,128)}', space=vmem, size = 0x12000, scoped, tag = 'internal scratch']
  %s0 = inlined_call_operand.hbm [shape: bf16[256,128], index: 0, kind: input, shape index: {}]
  %s1 = inlined_call_operand.hbm [shape: f32[256,128], index: 1, kind: input, shape index: {}]
  %s2 = inlined_call_operand.hbm [shape: bf16[128,128], index: 2, kind: input, shape index: {}]
  %s3 = inlined_call_operand.vmem [shape: f32[1,128], index: 3, kind: input, shape index: {}]
  %s4 = inlined_call_operand.hbm [shape: bf16[128,128], index: 4, kind: input, shape index: {}]
  %s5 = inlined_call_operand.vmem [shape: f32[1,128], index: 5, kind: input, shape index: {}]
  %s6 = inlined_call_operand.hbm [shape: bf16[128,128], index: 6, kind: input, shape index: {}]
  %s7 = inlined_call_operand.vmem [shape: f32[1,128], index: 7, kind: input, shape index: {}]
  %s8 = inlined_call_operand.hbm [shape: bf16[128,128], index: 8, kind: input, shape index: {}]
  %s9 = inlined_call_operand.vmem [shape: f32[1,128], index: 9, kind: input, shape index: {}]
  %s10 = inlined_call_operand.hbm [shape: f32[256,128], index: 10, kind: output, shape index: {}]
  %s11 = sld [smem:[#allocation0]]
  $region97: #{tpu_custom_call.1} parent=0
    _
  %s13 = ssub.s32 1, %s11
  %s14 = scalar_select 0, %s13, %s11
  $region1: #{tpu_custom_call.1} parent=0
    #allocation2 [shape = 'u8[65536]{0}', space=vmem, size = 0x10000, scoped, tag = 'input window, operand 0']
    #allocation3 [shape = 's32[2]{0}', space=sflag, size = 0x8, scoped, tag = 'scoped memory for tpu_custom_call.1']
    #allocation4 [shape = 's32[2]{0}', space=sflag, size = 0x8, scoped, tag = 'scoped memory for tpu_custom_call.1']
    #allocation5 [shape = 'u8[131072]{0}', space=vmem, size = 0x20000, scoped, tag = 'input window, operand 1']
    #allocation6 [shape = 's32[2]{0}', space=sflag, size = 0x8, scoped, tag = 'scoped memory for tpu_custom_call.1']
    #allocation7 [shape = 'u8[32768]{0}', space=vmem, size = 0x8000, scoped, tag = 'input window, operand 2, single buffered']
    #allocation8 [shape = 'u8[32768]{0}', space=vmem, size = 0x8000, scoped, tag = 'input window, operand 4, single buffered']
    #allocation9 [shape = 's32[1]{0}', space=sflag, size = 0x4, scoped, tag = 'scoped memory for tpu_custom_call.1']
    #allocation10 [shape = 'u8[32768]{0}', space=vmem, size = 0x8000, scoped, tag = 'input window, operand 6, single buffered']
    #allocation11 [shape = 'u8[32768]{0}', space=vmem, size = 0x8000, scoped, tag = 'input window, operand 8, single buffered']
    #allocation12 [shape = 's32[1]{0}', space=sflag, size = 0x4, scoped, tag = 'scoped memory for tpu_custom_call.1']
    #allocation13 [shape = 'u8[131072]{0}', space=vmem, size = 0x20000, scoped, tag = 'output window, operand 0']
    %15 = vsyncpa [#allocation3], 0
    %s16 = scalar_lea.sflag [#allocation3], 1
    %17 = vsyncpa %s16, 0
    %18 = vsyncpa [#allocation6], 0
    %s19 = scalar_lea.sflag [#allocation6], 1
    %20 = vsyncpa %s19, 0
    %21 = vsyncpa [#allocation9], 0
    %22 = vsyncpa [#allocation12], 0
    %23 = vsyncpa [#allocation4], 0
    %s24 = scalar_lea.sflag [#allocation4], 1
    %25 = vsyncpa %s24, 0
    loop: start=0, step=1, limit=4
    $region2: #{tpu_custom_call.1} parent=1 // loop_pre_header
      _
    $region3: #{tpu_custom_call.1} parent=1 // loop_header
      %s27 = sphi 0, %s31
      %p28 = scmp.ge.s32.totalorder %s27, 4
      %s37 = sphi 0, %s39
      %s40 = sphi 0, %s37
      %s41 = sphi 0, %s40
      %s57 = sphi 0, %s41
      %s63 = sphi 0, %s65
      %s66 = sphi 0, %s63
      %s67 = sphi 0, %s66
      %s83 = sphi 0, %s67
      %s87 = sphi 0, %s87
      %s89 = sphi 0, %s87
      %s90 = sphi 0, %s89
      %s104 = sphi 0, %s90
      %s108 = sphi 0, %s108
      %s110 = sphi 0, %s108
      %s111 = sphi 0, %s110
      %s125 = sphi 0, %s111
      %s129 = sphi 0, %s129
      %s131 = sphi 0, %s129
      %s132 = sphi 0, %s131
      %s146 = sphi 0, %s132
      %s150 = sphi 0, %s150
      %s152 = sphi 0, %s150
      %s153 = sphi 0, %s152
      %s167 = sphi 0, %s153
      %s171 = sphi 0, %s171
      %s173 = sphi 0, %s171
      %s174 = sphi 0, %s173
      %s188 = sphi 0, %s174
      %s192 = sphi 0, %s192
      %s194 = sphi 0, %s192
      %s195 = sphi 0, %s194
      %s209 = sphi 0, %s195
      %s213 = sphi 0, %s213
      %s215 = sphi 0, %s213
      %s216 = sphi 0, %s215
      %s230 = sphi 0, %s216
      %s234 = sphi 0, %s234
      %s236 = sphi 0, %s234
      %s237 = sphi 0, %s236
      %s251 = sphi 0, %s237
      %s257 = sphi 0, %s259
      %s260 = sphi 0, %s257
      %s261 = sphi 0, %s260
      %s277 = sphi 0, %s261
    $region4: #{tpu_custom_call.1} parent=1 // loop_header_branch
      %30 = sbr.rel (%p28) target = $region8
    $region5: #{tpu_custom_call.1} parent=1 // loop_body
      %s32 = ssub.s32 %s27, 1
      %s33 = ssub.s32 %s27, 2
      %s34 = sadd.s32 %s27, 1
      %s35 = ssub.s32 %s27, %s34
      %p36 = scmp.eq.s32.totalorder %s35, 0
      %s38 = sadd.s32 %s37, 1
      %s39 = scalar_select %p36, %s37, %s38
      %p42 = pneg %p36
      %p43 = scmp.eq.s32.totalorder %s27, 1
      %p44 = por %p42, %p43
      %p45 = scmp.ne.s32.totalorder %s37, %s40
      %p46 = scmp.eq.s32.totalorder %s27, 0
      %p47 = por %p45, %p46
      %p48 = scmp.ne.s32.totalorder %s37, %s40
      %p49 = scmp.eq.s32.totalorder %s32, 1
      %p50 = por %p48, %p49
      %p51 = scmp.ne.s32.totalorder %s40, %s41
      %p52 = scmp.eq.s32.totalorder %s32, 0
      %p53 = por %p51, %p52
      %p54 = scmp.ne.s32.totalorder %s40, %s41
      %p55 = scmp.eq.s32.totalorder %s33, 1
      %p56 = por %p54, %p55
      %p58 = scmp.ne.s32.totalorder %s41, %s57
      %p59 = scmp.eq.s32.totalorder %s33, 0
      %p60 = por %p58, %p59
      %s61 = ssub.s32 %s27, %s34
      %p62 = scmp.eq.s32.totalorder %s61, 0
      %s64 = sadd.s32 %s63, 1
      %s65 = scalar_select %p62, %s63, %s64
      %p68 = pneg %p62
      %p69 = scmp.eq.s32.totalorder %s27, 1
      %p70 = por %p68, %p69
      %p71 = scmp.ne.s32.totalorder %s63, %s66
      %p72 = scmp.eq.s32.totalorder %s27, 0
      %p73 = por %p71, %p72
      %p74 = scmp.ne.s32.totalorder %s63, %s66
      %p75 = scmp.eq.s32.totalorder %s32, 1
      %p76 = por %p74, %p75
      %p77 = scmp.ne.s32.totalorder %s66, %s67
      %p78 = scmp.eq.s32.totalorder %s32, 0
      %p79 = por %p77, %p78
      %p80 = scmp.ne.s32.totalorder %s66, %s67
      %p81 = scmp.eq.s32.totalorder %s33, 1
      %p82 = por %p80, %p81
      %p84 = scmp.ne.s32.totalorder %s67, %s83
      %p85 = scmp.eq.s32.totalorder %s33, 0
      %p86 = por %p84, %p85
      %s88 = sadd.s32 %s87, 1
      %p91 = scmp.eq.s32.totalorder %s27, 1
      %p92 = scmp.ne.s32.totalorder %s87, %s89
      %p93 = scmp.eq.s32.totalorder %s27, 0
      %p94 = por %p92, %p93
      %p95 = scmp.ne.s32.totalorder %s87, %s89
      %p96 = scmp.eq.s32.totalorder %s32, 1
      %p97 = por %p95, %p96
      %p98 = scmp.ne.s32.totalorder %s89, %s90
      %p99 = scmp.eq.s32.totalorder %s32, 0
      %p100 = por %p98, %p99
      %p101 = scmp.ne.s32.totalorder %s89, %s90
      %p102 = scmp.eq.s32.totalorder %s33, 1
      %p103 = por %p101, %p102
      %p105 = scmp.ne.s32.totalorder %s90, %s104
      %p106 = scmp.eq.s32.totalorder %s33, 0
      %p107 = por %p105, %p106
      %s109 = sadd.s32 %s108, 1
      %p112 = scmp.eq.s32.totalorder %s27, 1
      %p113 = scmp.ne.s32.totalorder %s108, %s110
      %p114 = scmp.eq.s32.totalorder %s27, 0
      %p115 = por %p113, %p114
      %p116 = scmp.ne.s32.totalorder %s108, %s110
      %p117 = scmp.eq.s32.totalorder %s32, 1
      %p118 = por %p116, %p117
      %p119 = scmp.ne.s32.totalorder %s110, %s111
      %p120 = scmp.eq.s32.totalorder %s32, 0
      %p121 = por %p119, %p120
      %p122 = scmp.ne.s32.totalorder %s110, %s111
      %p123 = scmp.eq.s32.totalorder %s33, 1
      %p124 = por %p122, %p123
      %p126 = scmp.ne.s32.totalorder %s111, %s125
      %p127 = scmp.eq.s32.totalorder %s33, 0
      %p128 = por %p126, %p127
      %s130 = sadd.s32 %s129, 1
      %p133 = scmp.eq.s32.totalorder %s27, 1
      %p134 = scmp.ne.s32.totalorder %s129, %s131
      %p135 = scmp.eq.s32.totalorder %s27, 0
      %p136 = por %p134, %p135
      %p137 = scmp.ne.s32.totalorder %s129, %s131
      %p138 = scmp.eq.s32.totalorder %s32, 1
      %p139 = por %p137, %p138
      %p140 = scmp.ne.s32.totalorder %s131, %s132
      %p141 = scmp.eq.s32.totalorder %s32, 0
      %p142 = por %p140, %p141
      %p143 = scmp.ne.s32.totalorder %s131, %s132
      %p144 = scmp.eq.s32.totalorder %s33, 1
      %p145 = por %p143, %p144
      %p147 = scmp.ne.s32.totalorder %s132, %s146
      %p148 = scmp.eq.s32.totalorder %s33, 0
      %p149 = por %p147, %p148
      %s151 = sadd.s32 %s150, 1
      %p154 = scmp.eq.s32.totalorder %s27, 1
      %p155 = scmp.ne.s32.totalorder %s150, %s152
      %p156 = scmp.eq.s32.totalorder %s27, 0
      %p157 = por %p155, %p156
      %p158 = scmp.ne.s32.totalorder %s150, %s152
      %p159 = scmp.eq.s32.totalorder %s32, 1
      %p160 = por %p158, %p159
      %p161 = scmp.ne.s32.totalorder %s152, %s153
      %p162 = scmp.eq.s32.totalorder %s32, 0
      %p163 = por %p161, %p162
      %p164 = scmp.ne.s32.totalorder %s152, %s153
      %p165 = scmp.eq.s32.totalorder %s33, 1
      %p166 = por %p164, %p165
      %p168 = scmp.ne.s32.totalorder %s153, %s167
      %p169 = scmp.eq.s32.totalorder %s33, 0
      %p170 = por %p168, %p169
      %s172 = sadd.s32 %s171, 1
      %p175 = scmp.eq.s32.totalorder %s27, 1
      %p176 = scmp.ne.s32.totalorder %s171, %s173
      %p177 = scmp.eq.s32.totalorder %s27, 0
      %p178 = por %p176, %p177
      %p179 = scmp.ne.s32.totalorder %s171, %s173
      %p180 = scmp.eq.s32.totalorder %s32, 1
      %p181 = por %p179, %p180
      %p182 = scmp.ne.s32.totalorder %s173, %s174
      %p183 = scmp.eq.s32.totalorder %s32, 0
      %p184 = por %p182, %p183
      %p185 = scmp.ne.s32.totalorder %s173, %s174
      %p186 = scmp.eq.s32.totalorder %s33, 1
      %p187 = por %p185, %p186
      %p189 = scmp.ne.s32.totalorder %s174, %s188
      %p190 = scmp.eq.s32.totalorder %s33, 0
      %p191 = por %p189, %p190
      %s193 = sadd.s32 %s192, 1
      %p196 = scmp.eq.s32.totalorder %s27, 1
      %p197 = scmp.ne.s32.totalorder %s192, %s194
      %p198 = scmp.eq.s32.totalorder %s27, 0
      %p199 = por %p197, %p198
      %p200 = scmp.ne.s32.totalorder %s192, %s194
      %p201 = scmp.eq.s32.totalorder %s32, 1
      %p202 = por %p200, %p201
      %p203 = scmp.ne.s32.totalorder %s194, %s195
      %p204 = scmp.eq.s32.totalorder %s32, 0
      %p205 = por %p203, %p204
      %p206 = scmp.ne.s32.totalorder %s194, %s195
      %p207 = scmp.eq.s32.totalorder %s33, 1
      %p208 = por %p206, %p207
      %p210 = scmp.ne.s32.totalorder %s195, %s209
      %p211 = scmp.eq.s32.totalorder %s33, 0
      %p212 = por %p210, %p211
      %s214 = sadd.s32 %s213, 1
      %p217 = scmp.eq.s32.totalorder %s27, 1
      %p218 = scmp.ne.s32.totalorder %s213, %s215
      %p219 = scmp.eq.s32.totalorder %s27, 0
      %p220 = por %p218, %p219
      %p221 = scmp.ne.s32.totalorder %s213, %s215
      %p222 = scmp.eq.s32.totalorder %s32, 1
      %p223 = por %p221, %p222
      %p224 = scmp.ne.s32.totalorder %s215, %s216
      %p225 = scmp.eq.s32.totalorder %s32, 0
      %p226 = por %p224, %p225
      %p227 = scmp.ne.s32.totalorder %s215, %s216
      %p228 = scmp.eq.s32.totalorder %s33, 1
      %p229 = por %p227, %p228
      %p231 = scmp.ne.s32.totalorder %s216, %s230
      %p232 = scmp.eq.s32.totalorder %s33, 0
      %p233 = por %p231, %p232
      %s235 = sadd.s32 %s234, 1
      %p238 = scmp.eq.s32.totalorder %s27, 1
      %p239 = scmp.ne.s32.totalorder %s234, %s236
      %p240 = scmp.eq.s32.totalorder %s27, 0
      %p241 = por %p239, %p240
      %p242 = scmp.ne.s32.totalorder %s234, %s236
      %p243 = scmp.eq.s32.totalorder %s32, 1
      %p244 = por %p242, %p243
      %p245 = scmp.ne.s32.totalorder %s236, %s237
      %p246 = scmp.eq.s32.totalorder %s32, 0
      %p247 = por %p245, %p246
      %p248 = scmp.ne.s32.totalorder %s236, %s237
      %p249 = scmp.eq.s32.totalorder %s33, 1
      %p250 = por %p248, %p249
      %p252 = scmp.ne.s32.totalorder %s237, %s251
      %p253 = scmp.eq.s32.totalorder %s33, 0
      %p254 = por %p252, %p253
      %s255 = ssub.s32 %s27, %s34
      %p256 = scmp.eq.s32.totalorder %s255, 0
      %s258 = sadd.s32 %s257, 1
      %s259 = scalar_select %p256, %s257, %s258
      %p262 = pneg %p256
      %p263 = scmp.eq.s32.totalorder %s27, 1
      %p264 = por %p262, %p263
      %p265 = scmp.ne.s32.totalorder %s257, %s260
      %p266 = scmp.eq.s32.totalorder %s27, 0
      %p267 = por %p265, %p266
      %p268 = scmp.ne.s32.totalorder %s257, %s260
      %p269 = scmp.eq.s32.totalorder %s32, 1
      %p270 = por %p268, %p269
      %p271 = scmp.ne.s32.totalorder %s260, %s261
      %p272 = scmp.eq.s32.totalorder %s32, 0
      %p273 = por %p271, %p272
      %p274 = scmp.ne.s32.totalorder %s260, %s261
      %p275 = scmp.eq.s32.totalorder %s33, 1
      %p276 = por %p274, %p275
      %p278 = scmp.ne.s32.totalorder %s261, %s277
      %p279 = scmp.eq.s32.totalorder %s33, 0
      %p280 = por %p278, %p279
      %p281 = scmp.le.s32.totalorder 1, %s27
      %p282 = scmp.lt.s32.totalorder %s27, 3
      %p283 = pnand %p281, %p282
      %p284 = pneg %p283
      // Predicated region
      $region9: #{tpu_custom_call.1} parent=5 // pred_check
        _
      $region10: #{tpu_custom_call.1} parent=5 // pred_check_branch
        %286 = sbr.rel (%p283) target = $region12
      $region11: #{tpu_custom_call.1} parent=5 // pred_region
        %s287 = ssub.s32 %s27, 1
        // Predicated region
        $region13: #{tpu_custom_call.1} parent=11 // pred_check
          %p288 = pneg %p100
        $region14: #{tpu_custom_call.1} parent=11 // pred_check_branch
          %290 = sbr.rel (%p288) target = $region16
        $region15: #{tpu_custom_call.1} parent=11 // pred_region
          %s292 = ssub.s32 1024, 1024
          %293 = vsyncadd [#allocation6], %s292
          %s294 = sshll.u32 [#allocation7], 4
          %s295 = int_to_ptr.vmem [resolvable:$true] %s294
          %300 = dma.hbm_to_vmem [thread:$0]  %s2, 1024, %s295, [#allocation6], 64, 64, 4
        $region16: #{tpu_custom_call.1} parent=11 // pred_fallthru
          _
        // Predicated region
        $region17: #{tpu_custom_call.1} parent=11 // pred_check
          %p301 = pneg %p121
        $region18: #{tpu_custom_call.1} parent=11 // pred_check_branch
          %303 = sbr.rel (%p301) target = $region20
        $region19: #{tpu_custom_call.1} parent=11 // pred_region
          _
        $region20: #{tpu_custom_call.1} parent=11 // pred_fallthru
          _
        // Predicated region
        $region21: #{tpu_custom_call.1} parent=11 // pred_check
          %p304 = pneg %p142
        $region22: #{tpu_custom_call.1} parent=11 // pred_check_branch
          %306 = sbr.rel (%p304) target = $region24
        $region23: #{tpu_custom_call.1} parent=11 // pred_region
          %s308 = ssub.s32 1024, 1024
          %309 = vsyncadd [#allocation9], %s308
          %s310 = sshll.u32 [#allocation8], 4
          %s311 = int_to_ptr.vmem [resolvable:$true] %s310
          %316 = dma.hbm_to_vmem [thread:$0]  %s4, 1024, %s311, [#allocation9], 64, 64, 4
        $region24: #{tpu_custom_call.1} parent=11 // pred_fallthru
          _
        // Predicated region
        $region25: #{tpu_custom_call.1} parent=11 // pred_check
          %p317 = pneg %p163
        $region26: #{tpu_custom_call.1} parent=11 // pred_check_branch
          %319 = sbr.rel (%p317) target = $region28
        $region27: #{tpu_custom_call.1} parent=11 // pred_region
          _
        $region28: #{tpu_custom_call.1} parent=11 // pred_fallthru
          _
        // Predicated region
        $region29: #{tpu_custom_call.1} parent=11 // pred_check
          %p320 = pneg %p184
        $region30: #{tpu_custom_call.1} parent=11 // pred_check_branch
          %322 = sbr.rel (%p320) target = $region32
        $region31: #{tpu_custom_call.1} parent=11 // pred_region
          %s324 = ssub.s32 1024, 1024
          %325 = vsyncadd [#allocation9], %s324
          %s326 = sshll.u32 [#allocation10], 4
          %s327 = int_to_ptr.vmem [resolvable:$true] %s326
          %332 = dma.hbm_to_vmem [thread:$0]  %s6, 1024, %s327, [#allocation9], 64, 64, 4
        $region32: #{tpu_custom_call.1} parent=11 // pred_fallthru
          _
        // Predicated region
        $region33: #{tpu_custom_call.1} parent=11 // pred_check
          %p333 = pneg %p205
        $region34: #{tpu_custom_call.1} parent=11 // pred_check_branch
          %335 = sbr.rel (%p333) target = $region36
        $region35: #{tpu_custom_call.1} parent=11 // pred_region
          _
        $region36: #{tpu_custom_call.1} parent=11 // pred_fallthru
          _
        // Predicated region
        $region37: #{tpu_custom_call.1} parent=11 // pred_check
          %p336 = pneg %p226
        $region38: #{tpu_custom_call.1} parent=11 // pred_check_branch
          %338 = sbr.rel (%p336) target = $region40
        $region39: #{tpu_custom_call.1} parent=11 // pred_region
          %s340 = ssub.s32 1024, 1024
          %341 = vsyncadd [#allocation12], %s340
          %s342 = sshll.u32 [#allocation11], 4
          %s343 = int_to_ptr.vmem [resolvable:$true] %s342
          %348 = dma.hbm_to_vmem [thread:$0]  %s8, 1024, %s343, [#allocation12], 64, 64, 4
        $region40: #{tpu_custom_call.1} parent=11 // pred_fallthru
          _
        // Predicated region
        $region41: #{tpu_custom_call.1} parent=11 // pred_check
          %p349 = pneg %p247
        $region42: #{tpu_custom_call.1} parent=11 // pred_check_branch
          %351 = sbr.rel (%p349) target = $region44
        $region43: #{tpu_custom_call.1} parent=11 // pred_region
          _
        $region44: #{tpu_custom_call.1} parent=11 // pred_fallthru
          _
      $region12: #{tpu_custom_call.1} parent=5 // pred_fallthru
        _
      %p352 = scmp.lt.s32.totalorder %s27, 2
      // Predicated region
      $region45: #{tpu_custom_call.1} parent=5 // pred_check
        %p353 = pneg %p352
      $region46: #{tpu_custom_call.1} parent=5 // pred_check_branch
        %355 = sbr.rel (%p353) target = $region48
      $region47: #{tpu_custom_call.1} parent=5 // pred_region
        // Predicated region
        $region49: #{tpu_custom_call.1} parent=47 // pred_check
          %p356 = pneg %p47
        $region50: #{tpu_custom_call.1} parent=47 // pred_check_branch
          %358 = sbr.rel (%p356) target = $region52
        $region51: #{tpu_custom_call.1} parent=47 // pred_region
          %s359 = sand.u32 %s37, 1
          %s360 = scalar_lea.sflag [#allocation3], %s359
          %s361 = sand.u32 %s37, 1
          %s362 = smul.addr %s361, 64
          %s363 = scalar_lea.vmem [#allocation2], %s362
          %s364 = smul.u32 16, %s27
          %s366 = ssub.s32 1024, 1024
          %367 = vsyncadd %s360, %s366
          %s368 = smul.addr %s364, 64
          %s369 = scalar_lea.hbm %s0, %s368
          %s370 = sshll.u32 %s363, 4
          %s371 = int_to_ptr.vmem [resolvable:$true] %s370
          %376 = dma.hbm_to_vmem [thread:$0]  %s369, 1024, %s371, %s360, 64, 64, 4
        $region52: #{tpu_custom_call.1} parent=47 // pred_fallthru
          _
        // Predicated region
        $region53: #{tpu_custom_call.1} parent=47 // pred_check
          %p377 = pneg %p73
        $region54: #{tpu_custom_call.1} parent=47 // pred_check_branch
          %379 = sbr.rel (%p377) target = $region56
        $region55: #{tpu_custom_call.1} parent=47 // pred_region
          %s380 = sand.u32 %s27, 1
          %s381 = scalar_lea.sflag [#allocation6], %s380
          %s382 = sand.u32 %s63, 1
          %s383 = smul.addr %s382, 128
          %s384 = scalar_lea.vmem [#allocation5], %s383
          %s385 = smul.u32 16, %s27
          %s387 = ssub.s32 2048, 2048
          %388 = vsyncadd %s381, %s387
          %s389 = smul.addr %s385, 128
          %s390 = scalar_lea.hbm %s1, %s389
          %s391 = sshll.u32 %s384, 4
          %s392 = int_to_ptr.vmem [resolvable:$true] %s391
          %397 = dma.hbm_to_vmem [thread:$0]  %s390, 2048, %s392, %s381, 128, 128, 8
        $region56: #{tpu_custom_call.1} parent=47 // pred_fallthru
          _
      $region48: #{tpu_custom_call.1} parent=5 // pred_fallthru
        _
      %p398 = scmp.le.s32.totalorder 1, %s27
      %p399 = scmp.lt.s32.totalorder %s27, 3
      %p400 = pnand %p398, %p399
      %p401 = pneg %p400
      // Predicated region
      $region57: #{tpu_custom_call.1} parent=5 // pred_check
        _
      $region58: #{tpu_custom_call.1} parent=5 // pred_check_branch
        %403 = sbr.rel (%p400) target = $region60
      $region59: #{tpu_custom_call.1} parent=5 // pred_region
        %s404 = ssub.s32 %s27, 1
        %s405 = sand.u32 %s40, 1
        %s406 = scalar_lea.sflag [#allocation3], %s405
        %s407 = sand.u32 %s40, 1
        %s408 = smul.addr %s407, 64
        %s409 = scalar_lea.vmem [#allocation2], %s408
        // Predicated region
        $region61: #{tpu_custom_call.1} parent=59 // pred_check
          %p410 = pneg %p53
        $region62: #{tpu_custom_call.1} parent=59 // pred_check_branch
          %412 = sbr.rel (%p410) target = $region64
        $region63: #{tpu_custom_call.1} parent=59 // pred_region
          %413 = dma.done %s406, 1024
        $region64: #{tpu_custom_call.1} parent=59 // pred_fallthru
          _
        %s414 = sand.u32 %s32, 1
        %s415 = scalar_lea.sflag [#allocation6], %s414
        %s416 = sand.u32 %s66, 1
        %s417 = smul.addr %s416, 128
        %s418 = scalar_lea.vmem [#allocation5], %s417
        // Predicated region
        $region65: #{tpu_custom_call.1} parent=59 // pred_check
          %p419 = pneg %p79
        $region66: #{tpu_custom_call.1} parent=59 // pred_check_branch
          %421 = sbr.rel (%p419) target = $region68
        $region67: #{tpu_custom_call.1} parent=59 // pred_region
          %422 = dma.done %s415, 2048
        $region68: #{tpu_custom_call.1} parent=59 // pred_fallthru
          _
        // Predicated region
        $region69: #{tpu_custom_call.1} parent=59 // pred_check
          %p423 = pneg %p100
        $region70: #{tpu_custom_call.1} parent=59 // pred_check_branch
          %425 = sbr.rel (%p423) target = $region72
        $region71: #{tpu_custom_call.1} parent=59 // pred_region
          %426 = dma.done [#allocation6], 1024
        $region72: #{tpu_custom_call.1} parent=59 // pred_fallthru
          _
        // Predicated region
        $region73: #{tpu_custom_call.1} parent=59 // pred_check
          %p427 = pneg %p142
        $region74: #{tpu_custom_call.1} parent=59 // pred_check_branch
          %429 = sbr.rel (%p427) target = $region76
        $region75: #{tpu_custom_call.1} parent=59 // pred_region
          %430 = dma.done [#allocation9], 1024
        $region76: #{tpu_custom_call.1} parent=59 // pred_fallthru
          _
        // Predicated region
        $region77: #{tpu_custom_call.1} parent=59 // pred_check
          %p431 = pneg %p184
        $region78: #{tpu_custom_call.1} parent=59 // pred_check_branch
          %433 = sbr.rel (%p431) target = $region80
        $region79: #{tpu_custom_call.1} parent=59 // pred_region
          %434 = dma.done [#allocation9], 1024
        $region80: #{tpu_custom_call.1} parent=59 // pred_fallthru
          _
        // Predicated region
        $region81: #{tpu_custom_call.1} parent=59 // pred_check
          %p435 = pneg %p226
        $region82: #{tpu_custom_call.1} parent=59 // pred_check_branch
          %437 = sbr.rel (%p435) target = $region84
        $region83: #{tpu_custom_call.1} parent=59 // pred_region
          %438 = dma.done [#allocation12], 1024
        $region84: #{tpu_custom_call.1} parent=59 // pred_fallthru
          _
        %s439 = sand.u32 %s40, 1
        %s440 = scalar_lea.sflag [#allocation3], %s439
        %s441 = sand.u32 %s40, 1
        %s442 = smul.addr %s441, 64
        %s443 = scalar_lea.vmem [#allocation2], %s442
        %p444 = pneg %p53
        %p445 = pneg %p50
        %s446 = sand.u32 %s32, 1
        %s447 = scalar_lea.sflag [#allocation6], %s446
        %s448 = sand.u32 %s66, 1
        %s449 = smul.addr %s448, 128
        %s450 = scalar_lea.vmem [#allocation5], %s449
        %p451 = pneg %p79
        %p452 = pneg %p76
        %p453 = pneg %p100
        %p454 = pneg %p97
        %p455 = pneg %p121
        %p456 = pneg %p118
        %p457 = pneg %p142
        %p458 = pneg %p139
        %p459 = pneg %p163
        %p460 = pneg %p160
        %p461 = pneg %p184
        %p462 = pneg %p181
        %p463 = pneg %p205
        %p464 = pneg %p202
        %p465 = pneg %p226
        %p466 = pneg %p223
        %p467 = pneg %p247
        %p468 = pneg %p244
        %p469 = pneg %p273
        %p470 = pneg %p270
        %s471 = sand.u32 %s260, 1
        %s472 = scalar_lea.sflag [#allocation4], %s471
        %s473 = sand.u32 %s260, 1
        %s474 = smul.addr %s473, 128
        %s475 = scalar_lea.vmem [#allocation13], %s474
        %s476 = smul.u32 16, %s32
        %s477 = smul.u32 16, %s32
        %s478 = smul.u32 16, %s32
        %v480 = vld [vmem:[%s409] sm:$0xf]
        %v481 = vld [vmem:[%s409 + $0x4] sm:$0xf]
        %v482 = vld [vmem:[%s409 + $0x8] sm:$0xf]
        %v483 = vld [vmem:[%s409 + $0xc] sm:$0xf]
        %v484 = vld [vmem:[%s409 + $0x10] sm:$0xf]
        %v485 = vld [vmem:[%s409 + $0x14] sm:$0xf]
        %v486 = vld [vmem:[%s409 + $0x18] sm:$0xf]
        %v487 = vld [vmem:[%s409 + $0x1c] sm:$0xf]
        %v488 = vld [vmem:[%s409 + $0x20] sm:$0xf]
        %v489 = vld [vmem:[%s409 + $0x24] sm:$0xf]
        %v490 = vld [vmem:[%s409 + $0x28] sm:$0xf]
        %v491 = vld [vmem:[%s409 + $0x2c] sm:$0xf]
        %v492 = vld [vmem:[%s409 + $0x30] sm:$0xf]
        %v493 = vld [vmem:[%s409 + $0x34] sm:$0xf]
        %v494 = vld [vmem:[%s409 + $0x38] sm:$0xf]
        %v495 = vld [vmem:[%s409 + $0x3c] sm:$0xf]
        %v496 = vunpack.c.l.bf16 %v480
        %v497 = vunpack.c.l.bf16 %v481
        %v498 = vunpack.c.l.bf16 %v482
        %v499 = vunpack.c.l.bf16 %v483
        %v500 = vunpack.c.l.bf16 %v484
        %v501 = vunpack.c.l.bf16 %v485
        %v502 = vunpack.c.l.bf16 %v486
        %v503 = vunpack.c.l.bf16 %v487
        %v504 = vunpack.c.l.bf16 %v488
        %v505 = vunpack.c.l.bf16 %v489
        %v506 = vunpack.c.l.bf16 %v490
        %v507 = vunpack.c.l.bf16 %v491
        %v508 = vunpack.c.l.bf16 %v492
        %v509 = vunpack.c.l.bf16 %v493
        %v510 = vunpack.c.l.bf16 %v494
        %v511 = vunpack.c.l.bf16 %v495
        %v512 = vmul.f32 %v496, %v496
        %v513 = vmul.f32 %v497, %v497
        %v514 = vmul.f32 %v498, %v498
        %v515 = vmul.f32 %v499, %v499
        %v516 = vmul.f32 %v500, %v500
        %v517 = vmul.f32 %v501, %v501
        %v518 = vmul.f32 %v502, %v502
        %v519 = vmul.f32 %v503, %v503
        %v520 = vmul.f32 %v504, %v504
        %v521 = vmul.f32 %v505, %v505
        %v522 = vmul.f32 %v506, %v506
        %v523 = vmul.f32 %v507, %v507
        %v524 = vmul.f32 %v508, %v508
        %v525 = vmul.f32 %v509, %v509
        %v526 = vmul.f32 %v510, %v510
        %v527 = vmul.f32 %v511, %v511
        %528 = vadd.xlane.f32.xlu0 %v512
        %v529 = vpop.xlane.xlu0 %528
        %530 = vadd.xlane.f32.xlu0 %v513
        %v531 = vpop.xlane.xlu0 %530
        %532 = vadd.xlane.f32.xlu0 %v514
        %v533 = vpop.xlane.xlu0 %532
        %534 = vadd.xlane.f32.xlu0 %v515
        %v535 = vpop.xlane.xlu0 %534
        %536 = vadd.xlane.f32.xlu0 %v516
        %v537 = vpop.xlane.xlu0 %536
        %538 = vadd.xlane.f32.xlu0 %v517
        %v539 = vpop.xlane.xlu0 %538
        %540 = vadd.xlane.f32.xlu0 %v518
        %v541 = vpop.xlane.xlu0 %540
        %542 = vadd.xlane.f32.xlu0 %v519
        %v543 = vpop.xlane.xlu0 %542
        %544 = vadd.xlane.f32.xlu0 %v520
        %v545 = vpop.xlane.xlu0 %544
        %546 = vadd.xlane.f32.xlu0 %v521
        %v547 = vpop.xlane.xlu0 %546
        %548 = vadd.xlane.f32.xlu0 %v522
        %v549 = vpop.xlane.xlu0 %548
        %550 = vadd.xlane.f32.xlu0 %v523
        %v551 = vpop.xlane.xlu0 %550
        %552 = vadd.xlane.f32.xlu0 %v524
        %v553 = vpop.xlane.xlu0 %552
        %554 = vadd.xlane.f32.xlu0 %v525
        %v555 = vpop.xlane.xlu0 %554
        %556 = vadd.xlane.f32.xlu0 %v526
        %v557 = vpop.xlane.xlu0 %556
        %558 = vadd.xlane.f32.xlu0 %v527
        %v559 = vpop.xlane.xlu0 %558
        %v560 = vmax.f32 %v529, 1e-24
        %v561 = vmax.f32 %v531, 1e-24
        %v562 = vmax.f32 %v533, 1e-24
        %v563 = vmax.f32 %v535, 1e-24
        %v564 = vmax.f32 %v537, 1e-24
        %v565 = vmax.f32 %v539, 1e-24
        %v566 = vmax.f32 %v541, 1e-24
        %v567 = vmax.f32 %v543, 1e-24
        %v568 = vmax.f32 %v545, 1e-24
        %v569 = vmax.f32 %v547, 1e-24
        %v570 = vmax.f32 %v549, 1e-24
        %v571 = vmax.f32 %v551, 1e-24
        %v572 = vmax.f32 %v553, 1e-24
        %v573 = vmax.f32 %v555, 1e-24
        %v574 = vmax.f32 %v557, 1e-24
        %v575 = vmax.f32 %v559, 1e-24
        %v576 = vrsqrt.pop %v560
        %v577 = vrsqrt.pop %v561
        %v578 = vrsqrt.pop %v562
        %v579 = vrsqrt.pop %v563
        %v580 = vrsqrt.pop %v564
        %v581 = vrsqrt.pop %v565
        %v582 = vrsqrt.pop %v566
        %v583 = vrsqrt.pop %v567
        %v584 = vrsqrt.pop %v568
        %v585 = vrsqrt.pop %v569
        %v586 = vrsqrt.pop %v570
        %v587 = vrsqrt.pop %v571
        %v588 = vrsqrt.pop %v572
        %v589 = vrsqrt.pop %v573
        %v590 = vrsqrt.pop %v574
        %v591 = vrsqrt.pop %v575
        %v592 = vmul.f32 %v496, %v576
        %v593 = vmul.f32 %v497, %v577
        %v594 = vmul.f32 %v498, %v578
        %v595 = vmul.f32 %v499, %v579
        %v596 = vmul.f32 %v500, %v580
        %v597 = vmul.f32 %v501, %v581
        %v598 = vmul.f32 %v502, %v582
        %v599 = vmul.f32 %v503, %v583
        %v600 = vmul.f32 %v504, %v584
        %v601 = vmul.f32 %v505, %v585
        %v602 = vmul.f32 %v506, %v586
        %v603 = vmul.f32 %v507, %v587
        %v604 = vmul.f32 %v508, %v588
        %v605 = vmul.f32 %v509, %v589
        %v606 = vmul.f32 %v510, %v590
        %v607 = vmul.f32 %v511, %v591
        %v608 = vld [vmem:[#allocation7] sm:$0xf]
        %v609 = vld [vmem:[#allocation7 + $0x4] sm:$0xf]
        %v610 = vld [vmem:[#allocation7 + $0x8] sm:$0xf]
        %v611 = vld [vmem:[#allocation7 + $0xc] sm:$0xf]
        %v612 = vld [vmem:[#allocation7 + $0x10] sm:$0xf]
        %v613 = vld [vmem:[#allocation7 + $0x14] sm:$0xf]
        %v614 = vld [vmem:[#allocation7 + $0x18] sm:$0xf]
        %v615 = vld [vmem:[#allocation7 + $0x1c] sm:$0xf]
        %v616 = vld [vmem:[#allocation7 + $0x20] sm:$0xf]
        %v617 = vld [vmem:[#allocation7 + $0x24] sm:$0xf]
        %v618 = vld [vmem:[#allocation7 + $0x28] sm:$0xf]
        %v619 = vld [vmem:[#allocation7 + $0x2c] sm:$0xf]
        %v620 = vld [vmem:[#allocation7 + $0x30] sm:$0xf]
        %v621 = vld [vmem:[#allocation7 + $0x34] sm:$0xf]
        %v622 = vld [vmem:[#allocation7 + $0x38] sm:$0xf]
        %v623 = vld [vmem:[#allocation7 + $0x3c] sm:$0xf]
        %v624 = vld [vmem:[%s3] sm:$0x1]
        %v625 = vpack.c.bf16 %v593, %v592
        %v626 = vpack.c.bf16 %v595, %v594
        %v627 = vpack.c.bf16 %v597, %v596
        %v628 = vpack.c.bf16 %v599, %v598
        %v629 = vpack.c.bf16 %v601, %v600
        %v630 = vpack.c.bf16 %v603, %v602
        %v631 = vpack.c.bf16 %v605, %v604
        %v632 = vpack.c.bf16 %v607, %v606
        %v634 = vlaneseq
        %v635 = vshrl.u32 %v634, 7
        %v636 = vsub.s32 0, %v635
        %v637 = vrot.slane %v624, %v636
        %v655 = vunpack.c.l.b16 %v608
        %v656 = vunpack.c.l.b16 %v609
        %v657 = vunpack.c.l.b16 %v610
        %v658 = vunpack.c.l.b16 %v611
        %v659 = vunpack.c.l.b16 %v612
        %v660 = vunpack.c.l.b16 %v613
        %v661 = vunpack.c.l.b16 %v614
        %v662 = vunpack.c.l.b16 %v615
        %v663 = vunpack.c.l.b16 %v616
        %v664 = vunpack.c.l.b16 %v617
        %v665 = vunpack.c.l.b16 %v618
        %v666 = vunpack.c.l.b16 %v619
        %v667 = vunpack.c.l.b16 %v620
        %v668 = vunpack.c.l.b16 %v621
        %v669 = vunpack.c.l.b16 %v622
        %v670 = vunpack.c.l.b16 %v623
        %v671 = vpack.c.b16 %v656, %v655
        %v672 = vpack.c.b16 %v658, %v657
        %v673 = vpack.c.b16 %v660, %v659
        %v674 = vpack.c.b16 %v662, %v661
        %v675 = vpack.c.b16 %v664, %v663
        %v676 = vpack.c.b16 %v666, %v665
        %v677 = vpack.c.b16 %v668, %v667
        %v678 = vpack.c.b16 %v670, %v669
        %687 = vmatprep.subr.bf16.mxu0 0
        %688 = vmatpush1.bf16.msra.mxu0 %v671
        %689 = vmatprep.subr.bf16.mxu0 0
        %690 = vmatpush1.bf16.msra.mxu0 %v672
        %691 = vmatprep.subr.bf16.mxu0 0
        %692 = vmatpush1.bf16.msra.mxu0 %v673
        %693 = vmatprep.subr.bf16.mxu0 0
        %694 = vmatpush1.bf16.msra.mxu0 %v674
        %695 = vmatprep.subr.bf16.mxu0 0
        %696 = vmatpush1.bf16.msra.mxu0 %v675
        %697 = vmatprep.subr.bf16.mxu0 0
        %698 = vmatpush1.bf16.msra.mxu0 %v676
        %699 = vmatprep.subr.bf16.mxu0 0
        %700 = vmatpush1.bf16.msra.mxu0 %v677
        %701 = vmatprep.subr.bf16.mxu0 0
        %702 = vmatpush1.bf16.msra.mxu0 %v678
        %703 = vmatprep.subr.bf16.mxu0 0
        %704 = vmatpush1.bf16.msra.mxu0 0
        %705 = vmatprep.subr.bf16.mxu0 0
        %706 = vmatpush1.bf16.msra.mxu0 0
        %707 = vmatprep.subr.bf16.mxu0 0
        %708 = vmatpush1.bf16.msra.mxu0 0
        %709 = vmatprep.subr.bf16.mxu0 0
        %710 = vmatpush1.bf16.msra.mxu0 0
        %711 = vmatprep.subr.bf16.mxu0 0
        %712 = vmatpush1.bf16.msra.mxu0 0
        %713 = vmatprep.subr.bf16.mxu0 0
        %714 = vmatpush1.bf16.msra.mxu0 0
        %715 = vmatprep.subr.bf16.mxu0 0
        %716 = vmatpush1.bf16.msra.mxu0 0
        %717 = vmatprep.subr.bf16.mxu0 0
        %718 = vmatpush1.bf16.msra.mxu0 0
        %719 = vmatprep.mubr.bf16.mxu0 0
        %720 = vmatmul.mubr.bf16.gmra.mrb[0].mxu0 %v625
        %v721 = vpop.f32.mrb[0].mxu0
        %v722 = vadd.f32 %v637, %v721
        %v723 = vpop.f32.mrb[0].mxu0
        %v724 = vpop.f32.mrb[0].mxu0
        %v725 = vadd.f32 %v637, %v724
        %v726 = vpop.f32.mrb[0].mxu0
        %727 = vmatprep.mubr.bf16.mxu0 0
        %728 = vmatmul.mubr.bf16.gmra.mrb[0].mxu0 %v626
        %v729 = vpop.f32.mrb[0].mxu0
        %v730 = vadd.f32 %v637, %v729
        %v731 = vpop.f32.mrb[0].mxu0
        %v732 = vpop.f32.mrb[0].mxu0
        %v733 = vadd.f32 %v637, %v732
        %v734 = vpop.f32.mrb[0].mxu0
        %735 = vmatprep.mubr.bf16.mxu0 0
        %736 = vmatmul.mubr.bf16.gmra.mrb[0].mxu0 %v627
        %v737 = vpop.f32.mrb[0].mxu0
        %v738 = vadd.f32 %v637, %v737
        %v739 = vpop.f32.mrb[0].mxu0
        %v740 = vpop.f32.mrb[0].mxu0
        %v741 = vadd.f32 %v637, %v740
        %v742 = vpop.f32.mrb[0].mxu0
        %743 = vmatprep.mubr.bf16.mxu0 0
        %744 = vmatmul.mubr.bf16.gmra.mrb[0].mxu0 %v628
        %v745 = vpop.f32.mrb[0].mxu0
        %v746 = vadd.f32 %v637, %v745
        %v747 = vpop.f32.mrb[0].mxu0
        %v748 = vpop.f32.mrb[0].mxu0
        %v749 = vadd.f32 %v637, %v748
        %v750 = vpop.f32.mrb[0].mxu0
        %751 = vmatprep.mubr.bf16.mxu0 0
        %752 = vmatmul.mubr.bf16.gmra.mrb[0].mxu0 %v629
        %v753 = vpop.f32.mrb[0].mxu0
        %v754 = vadd.f32 %v637, %v753
        %v755 = vpop.f32.mrb[0].mxu0
        %v756 = vpop.f32.mrb[0].mxu0
        %v757 = vadd.f32 %v637, %v756
        %v758 = vpop.f32.mrb[0].mxu0
        %759 = vmatprep.mubr.bf16.mxu0 0
        %760 = vmatmul.mubr.bf16.gmra.mrb[0].mxu0 %v630
        %v761 = vpop.f32.mrb[0].mxu0
        %v762 = vadd.f32 %v637, %v761
        %v763 = vpop.f32.mrb[0].mxu0
        %v764 = vpop.f32.mrb[0].mxu0
        %v765 = vadd.f32 %v637, %v764
        %v766 = vpop.f32.mrb[0].mxu0
        %767 = vmatprep.mubr.bf16.mxu0 0
        %768 = vmatmul.mubr.bf16.gmra.mrb[0].mxu0 %v631
        %v769 = vpop.f32.mrb[0].mxu0
        %v770 = vadd.f32 %v637, %v769
        %v771 = vpop.f32.mrb[0].mxu0
        %v772 = vpop.f32.mrb[0].mxu0
        %v773 = vadd.f32 %v637, %v772
        %v774 = vpop.f32.mrb[0].mxu0
        %775 = vmatprep.mubr.bf16.mxu0 0
        %776 = vmatmul.mubr.bf16.gmra.mrb[0].mxu0 %v632
        %v777 = vpop.f32.mrb[0].mxu0
        %v778 = vadd.f32 %v637, %v777
        %v779 = vpop.f32.mrb[0].mxu0
        %v780 = vpop.f32.mrb[0].mxu0
        %v781 = vadd.f32 %v637, %v780
        %v782 = vpop.f32.mrb[0].mxu0
        %783 = vdwg.mxu0
        %v784 = vld [vmem:[%s418] sm:$0xff]
        %v785 = vld [vmem:[%s418 + $0x8] sm:$0xff]
        %v786 = vld [vmem:[%s418 + $0x10] sm:$0xff]
        %v787 = vld [vmem:[%s418 + $0x18] sm:$0xff]
        %v788 = vld [vmem:[%s418 + $0x20] sm:$0xff]
        %v789 = vld [vmem:[%s418 + $0x28] sm:$0xff]
        %v790 = vld [vmem:[%s418 + $0x30] sm:$0xff]
        %v791 = vld [vmem:[%s418 + $0x38] sm:$0xff]
        %v792 = vld [vmem:[%s418 + $0x40] sm:$0xff]
        %v793 = vld [vmem:[%s418 + $0x48] sm:$0xff]
        %v794 = vld [vmem:[%s418 + $0x50] sm:$0xff]
        %v795 = vld [vmem:[%s418 + $0x58] sm:$0xff]
        %v796 = vld [vmem:[%s418 + $0x60] sm:$0xff]
        %v797 = vld [vmem:[%s418 + $0x68] sm:$0xff]
        %v798 = vld [vmem:[%s418 + $0x70] sm:$0xff]
        %v799 = vld [vmem:[%s418 + $0x78] sm:$0xff]
        %v800 = vadd.f32 %v722, %v784
        %v801 = vadd.f32 %v725, %v785
        %v802 = vadd.f32 %v730, %v786
        %v803 = vadd.f32 %v733, %v787
        %v804 = vadd.f32 %v738, %v788
        %v805 = vadd.f32 %v741, %v789
        %v806 = vadd.f32 %v746, %v790
        %v807 = vadd.f32 %v749, %v791
        %v808 = vadd.f32 %v754, %v792
        %v809 = vadd.f32 %v757, %v793
        %v810 = vadd.f32 %v762, %v794
        %v811 = vadd.f32 %v765, %v795
        %v812 = vadd.f32 %v770, %v796
        %v813 = vadd.f32 %v773, %v797
        %v814 = vadd.f32 %v778, %v798
        %v815 = vadd.f32 %v781, %v799
        %v816 = vtanh.pop %v800
        %v817 = vtanh.pop %v801
        %v818 = vtanh.pop %v802
        %v819 = vtanh.pop %v803
        %v820 = vtanh.pop %v804
        %v821 = vtanh.pop %v805
        %v822 = vtanh.pop %v806
        %v823 = vtanh.pop %v807
        %v824 = vtanh.pop %v808
        %v825 = vtanh.pop %v809
        %v826 = vtanh.pop %v810
        %v827 = vtanh.pop %v811
        %v828 = vtanh.pop %v812
        %v829 = vtanh.pop %v813
        %v830 = vtanh.pop %v814
        %v831 = vtanh.pop %v815
        %v832 = vld [vmem:[#allocation8] sm:$0xf]
        %v833 = vld [vmem:[#allocation8 + $0x4] sm:$0xf]
        %v834 = vld [vmem:[#allocation8 + $0x8] sm:$0xf]
        %v835 = vld [vmem:[#allocation8 + $0xc] sm:$0xf]
        %v836 = vld [vmem:[#allocation8 + $0x10] sm:$0xf]
        %v837 = vld [vmem:[#allocation8 + $0x14] sm:$0xf]
        %v838 = vld [vmem:[#allocation8 + $0x18] sm:$0xf]
        %v839 = vld [vmem:[#allocation8 + $0x1c] sm:$0xf]
        %v840 = vld [vmem:[#allocation8 + $0x20] sm:$0xf]
        %v841 = vld [vmem:[#allocation8 + $0x24] sm:$0xf]
        %v842 = vld [vmem:[#allocation8 + $0x28] sm:$0xf]
        %v843 = vld [vmem:[#allocation8 + $0x2c] sm:$0xf]
        %v844 = vld [vmem:[#allocation8 + $0x30] sm:$0xf]
        %v845 = vld [vmem:[#allocation8 + $0x34] sm:$0xf]
        %v846 = vld [vmem:[#allocation8 + $0x38] sm:$0xf]
        %v847 = vld [vmem:[#allocation8 + $0x3c] sm:$0xf]
        %v848 = vld [vmem:[%s5] sm:$0x1]
        %v849 = vpack.c.bf16 %v817, %v816
        %v850 = vpack.c.bf16 %v819, %v818
        %v851 = vpack.c.bf16 %v821, %v820
        %v852 = vpack.c.bf16 %v823, %v822
        %v853 = vpack.c.bf16 %v825, %v824
        %v854 = vpack.c.bf16 %v827, %v826
        %v855 = vpack.c.bf16 %v829, %v828
        %v856 = vpack.c.bf16 %v831, %v830
        %v858 = vlaneseq
        %v859 = vshrl.u32 %v858, 7
        %v860 = vsub.s32 0, %v859
        %v861 = vrot.slane %v848, %v860
        %v879 = vunpack.c.l.b16 %v832
        %v880 = vunpack.c.l.b16 %v833
        %v881 = vunpack.c.l.b16 %v834
        %v882 = vunpack.c.l.b16 %v835
        %v883 = vunpack.c.l.b16 %v836
        %v884 = vunpack.c.l.b16 %v837
        %v885 = vunpack.c.l.b16 %v838
        %v886 = vunpack.c.l.b16 %v839
        %v887 = vunpack.c.l.b16 %v840
        %v888 = vunpack.c.l.b16 %v841
        %v889 = vunpack.c.l.b16 %v842
        %v890 = vunpack.c.l.b16 %v843
        %v891 = vunpack.c.l.b16 %v844
        %v892 = vunpack.c.l.b16 %v845
        %v893 = vunpack.c.l.b16 %v846
        %v894 = vunpack.c.l.b16 %v847
        %v895 = vpack.c.b16 %v880, %v879
        %v896 = vpack.c.b16 %v882, %v881
        %v897 = vpack.c.b16 %v884, %v883
        %v898 = vpack.c.b16 %v886, %v885
        %v899 = vpack.c.b16 %v888, %v887
        %v900 = vpack.c.b16 %v890, %v889
        %v901 = vpack.c.b16 %v892, %v891
        %v902 = vpack.c.b16 %v894, %v893
        %911 = vmatprep.subr.bf16.mxu0 0
        %912 = vmatpush1.bf16.msra.mxu0 %v895
        %913 = vmatprep.subr.bf16.mxu0 0
        %914 = vmatpush1.bf16.msra.mxu0 %v896
        %915 = vmatprep.subr.bf16.mxu0 0
        %916 = vmatpush1.bf16.msra.mxu0 %v897
        %917 = vmatprep.subr.bf16.mxu0 0
        %918 = vmatpush1.bf16.msra.mxu0 %v898
        %919 = vmatprep.subr.bf16.mxu0 0
        %920 = vmatpush1.bf16.msra.mxu0 %v899
        %921 = vmatprep.subr.bf16.mxu0 0
        %922 = vmatpush1.bf16.msra.mxu0 %v900
        %923 = vmatprep.subr.bf16.mxu0 0
        %924 = vmatpush1.bf16.msra.mxu0 %v901
        %925 = vmatprep.subr.bf16.mxu0 0
        %926 = vmatpush1.bf16.msra.mxu0 %v902
        %927 = vmatprep.subr.bf16.mxu0 0
        %928 = vmatpush1.bf16.msra.mxu0 0
        %929 = vmatprep.subr.bf16.mxu0 0
        %930 = vmatpush1.bf16.msra.mxu0 0
        %931 = vmatprep.subr.bf16.mxu0 0
        %932 = vmatpush1.bf16.msra.mxu0 0
        %933 = vmatprep.subr.bf16.mxu0 0
        %934 = vmatpush1.bf16.msra.mxu0 0
        %935 = vmatprep.subr.bf16.mxu0 0
        %936 = vmatpush1.bf16.msra.mxu0 0
        %937 = vmatprep.subr.bf16.mxu0 0
        %938 = vmatpush1.bf16.msra.mxu0 0
        %939 = vmatprep.subr.bf16.mxu0 0
        %940 = vmatpush1.bf16.msra.mxu0 0
        %941 = vmatprep.subr.bf16.mxu0 0
        %942 = vmatpush1.bf16.msra.mxu0 0
        %943 = vmatprep.mubr.bf16.mxu0 0
        %944 = vmatmul.mubr.bf16.gmra.mrb[0].mxu0 %v849
        %v945 = vpop.f32.mrb[0].mxu0
        %v946 = vadd.f32 %v861, %v945
        %v947 = vpop.f32.mrb[0].mxu0
        %v948 = vpop.f32.mrb[0].mxu0
        %v949 = vadd.f32 %v861, %v948
        %v950 = vpop.f32.mrb[0].mxu0
        %951 = vmatprep.mubr.bf16.mxu0 0
        %952 = vmatmul.mubr.bf16.gmra.mrb[0].mxu0 %v850
        %v953 = vpop.f32.mrb[0].mxu0
        %v954 = vadd.f32 %v861, %v953
        %v955 = vpop.f32.mrb[0].mxu0
        %v956 = vpop.f32.mrb[0].mxu0
        %v957 = vadd.f32 %v861, %v956
        %v958 = vpop.f32.mrb[0].mxu0
        %959 = vmatprep.mubr.bf16.mxu0 0
        %960 = vmatmul.mubr.bf16.gmra.mrb[0].mxu0 %v851
        %v961 = vpop.f32.mrb[0].mxu0
        %v962 = vadd.f32 %v861, %v961
        %v963 = vpop.f32.mrb[0].mxu0
        %v964 = vpop.f32.mrb[0].mxu0
        %v965 = vadd.f32 %v861, %v964
        %v966 = vpop.f32.mrb[0].mxu0
        %967 = vmatprep.mubr.bf16.mxu0 0
        %968 = vmatmul.mubr.bf16.gmra.mrb[0].mxu0 %v852
        %v969 = vpop.f32.mrb[0].mxu0
        %v970 = vadd.f32 %v861, %v969
        %v971 = vpop.f32.mrb[0].mxu0
        %v972 = vpop.f32.mrb[0].mxu0
        %v973 = vadd.f32 %v861, %v972
        %v974 = vpop.f32.mrb[0].mxu0
        %975 = vmatprep.mubr.bf16.mxu0 0
        %976 = vmatmul.mubr.bf16.gmra.mrb[0].mxu0 %v853
        %v977 = vpop.f32.mrb[0].mxu0
        %v978 = vadd.f32 %v861, %v977
        %v979 = vpop.f32.mrb[0].mxu0
        %v980 = vpop.f32.mrb[0].mxu0
        %v981 = vadd.f32 %v861, %v980
        %v982 = vpop.f32.mrb[0].mxu0
        %983 = vmatprep.mubr.bf16.mxu0 0
        %984 = vmatmul.mubr.bf16.gmra.mrb[0].mxu0 %v854
        %v985 = vpop.f32.mrb[0].mxu0
        %v986 = vadd.f32 %v861, %v985
        %v987 = vpop.f32.mrb[0].mxu0
        %v988 = vpop.f32.mrb[0].mxu0
        %v989 = vadd.f32 %v861, %v988
        %v990 = vpop.f32.mrb[0].mxu0
        %991 = vmatprep.mubr.bf16.mxu0 0
        %992 = vmatmul.mubr.bf16.gmra.mrb[0].mxu0 %v855
        %v993 = vpop.f32.mrb[0].mxu0
        %v994 = vadd.f32 %v861, %v993
        %v995 = vpop.f32.mrb[0].mxu0
        %v996 = vpop.f32.mrb[0].mxu0
        %v997 = vadd.f32 %v861, %v996
        %v998 = vpop.f32.mrb[0].mxu0
        %999 = vmatprep.mubr.bf16.mxu0 0
        %1000 = vmatmul.mubr.bf16.gmra.mrb[0].mxu0 %v856
        %v1001 = vpop.f32.mrb[0].mxu0
        %v1002 = vadd.f32 %v861, %v1001
        %v1003 = vpop.f32.mrb[0].mxu0
        %v1004 = vpop.f32.mrb[0].mxu0
        %v1005 = vadd.f32 %v861, %v1004
        %v1006 = vpop.f32.mrb[0].mxu0
        %1007 = vdwg.mxu0
        %v1008 = vtanh.pop %v946
        %v1009 = vtanh.pop %v949
        %v1010 = vtanh.pop %v954
        %v1011 = vtanh.pop %v957
        %v1012 = vtanh.pop %v962
        %v1013 = vtanh.pop %v965
        %v1014 = vtanh.pop %v970
        %v1015 = vtanh.pop %v973
        %v1016 = vtanh.pop %v978
        %v1017 = vtanh.pop %v981
        %v1018 = vtanh.pop %v986
        %v1019 = vtanh.pop %v989
        %v1020 = vtanh.pop %v994
        %v1021 = vtanh.pop %v997
        %v1022 = vtanh.pop %v1002
        %v1023 = vtanh.pop %v1005
        %v1024 = vld [vmem:[#allocation10] sm:$0xf]
        %v1025 = vld [vmem:[#allocation10 + $0x4] sm:$0xf]
        %v1026 = vld [vmem:[#allocation10 + $0x8] sm:$0xf]
        %v1027 = vld [vmem:[#allocation10 + $0xc] sm:$0xf]
        %v1028 = vld [vmem:[#allocation10 + $0x10] sm:$0xf]
        %v1029 = vld [vmem:[#allocation10 + $0x14] sm:$0xf]
        %v1030 = vld [vmem:[#allocation10 + $0x18] sm:$0xf]
        %v1031 = vld [vmem:[#allocation10 + $0x1c] sm:$0xf]
        %v1032 = vld [vmem:[#allocation10 + $0x20] sm:$0xf]
        %v1033 = vld [vmem:[#allocation10 + $0x24] sm:$0xf]
        %v1034 = vld [vmem:[#allocation10 + $0x28] sm:$0xf]
        %v1035 = vld [vmem:[#allocation10 + $0x2c] sm:$0xf]
        %v1036 = vld [vmem:[#allocation10 + $0x30] sm:$0xf]
        %v1037 = vld [vmem:[#allocation10 + $0x34] sm:$0xf]
        %v1038 = vld [vmem:[#allocation10 + $0x38] sm:$0xf]
        %v1039 = vld [vmem:[#allocation10 + $0x3c] sm:$0xf]
        %v1040 = vld [vmem:[%s7] sm:$0x1]
        %v1041 = vpack.c.bf16 %v1009, %v1008
        %v1042 = vpack.c.bf16 %v1011, %v1010
        %v1043 = vpack.c.bf16 %v1013, %v1012
        %v1044 = vpack.c.bf16 %v1015, %v1014
        %v1045 = vpack.c.bf16 %v1017, %v1016
        %v1046 = vpack.c.bf16 %v1019, %v1018
        %v1047 = vpack.c.bf16 %v1021, %v1020
        %v1048 = vpack.c.bf16 %v1023, %v1022
        %v1050 = vlaneseq
        %v1051 = vshrl.u32 %v1050, 7
        %v1052 = vsub.s32 0, %v1051
        %v1053 = vrot.slane %v1040, %v1052
        %v1071 = vunpack.c.l.b16 %v1024
        %v1072 = vunpack.c.l.b16 %v1025
        %v1073 = vunpack.c.l.b16 %v1026
        %v1074 = vunpack.c.l.b16 %v1027
        %v1075 = vunpack.c.l.b16 %v1028
        %v1076 = vunpack.c.l.b16 %v1029
        %v1077 = vunpack.c.l.b16 %v1030
        %v1078 = vunpack.c.l.b16 %v1031
        %v1079 = vunpack.c.l.b16 %v1032
        %v1080 = vunpack.c.l.b16 %v1033
        %v1081 = vunpack.c.l.b16 %v1034
        %v1082 = vunpack.c.l.b16 %v1035
        %v1083 = vunpack.c.l.b16 %v1036
        %v1084 = vunpack.c.l.b16 %v1037
        %v1085 = vunpack.c.l.b16 %v1038
        %v1086 = vunpack.c.l.b16 %v1039
        %v1087 = vpack.c.b16 %v1072, %v1071
        %v1088 = vpack.c.b16 %v1074, %v1073
        %v1089 = vpack.c.b16 %v1076, %v1075
        %v1090 = vpack.c.b16 %v1078, %v1077
        %v1091 = vpack.c.b16 %v1080, %v1079
        %v1092 = vpack.c.b16 %v1082, %v1081
        %v1093 = vpack.c.b16 %v1084, %v1083
        %v1094 = vpack.c.b16 %v1086, %v1085
        %1103 = vmatprep.subr.bf16.mxu0 0
        %1104 = vmatpush1.bf16.msra.mxu0 %v1087
        %1105 = vmatprep.subr.bf16.mxu0 0
        %1106 = vmatpush1.bf16.msra.mxu0 %v1088
        %1107 = vmatprep.subr.bf16.mxu0 0
        %1108 = vmatpush1.bf16.msra.mxu0 %v1089
        %1109 = vmatprep.subr.bf16.mxu0 0
        %1110 = vmatpush1.bf16.msra.mxu0 %v1090
        %1111 = vmatprep.subr.bf16.mxu0 0
        %1112 = vmatpush1.bf16.msra.mxu0 %v1091
        %1113 = vmatprep.subr.bf16.mxu0 0
        %1114 = vmatpush1.bf16.msra.mxu0 %v1092
        %1115 = vmatprep.subr.bf16.mxu0 0
        %1116 = vmatpush1.bf16.msra.mxu0 %v1093
        %1117 = vmatprep.subr.bf16.mxu0 0
        %1118 = vmatpush1.bf16.msra.mxu0 %v1094
        %1119 = vmatprep.subr.bf16.mxu0 0
        %1120 = vmatpush1.bf16.msra.mxu0 0
        %1121 = vmatprep.subr.bf16.mxu0 0
        %1122 = vmatpush1.bf16.msra.mxu0 0
        %1123 = vmatprep.subr.bf16.mxu0 0
        %1124 = vmatpush1.bf16.msra.mxu0 0
        %1125 = vmatprep.subr.bf16.mxu0 0
        %1126 = vmatpush1.bf16.msra.mxu0 0
        %1127 = vmatprep.subr.bf16.mxu0 0
        %1128 = vmatpush1.bf16.msra.mxu0 0
        %1129 = vmatprep.subr.bf16.mxu0 0
        %1130 = vmatpush1.bf16.msra.mxu0 0
        %1131 = vmatprep.subr.bf16.mxu0 0
        %1132 = vmatpush1.bf16.msra.mxu0 0
        %1133 = vmatprep.subr.bf16.mxu0 0
        %1134 = vmatpush1.bf16.msra.mxu0 0
        %1135 = vmatprep.mubr.bf16.mxu0 0
        %1136 = vmatmul.mubr.bf16.gmra.mrb[0].mxu0 %v1041
        %v1137 = vpop.f32.mrb[0].mxu0
        %v1138 = vadd.f32 %v1053, %v1137
        %v1139 = vpop.f32.mrb[0].mxu0
        %v1140 = vpop.f32.mrb[0].mxu0
        %v1141 = vadd.f32 %v1053, %v1140
        %v1142 = vpop.f32.mrb[0].mxu0
        %1143 = vmatprep.mubr.bf16.mxu0 0
        %1144 = vmatmul.mubr.bf16.gmra.mrb[0].mxu0 %v1042
        %v1145 = vpop.f32.mrb[0].mxu0
        %v1146 = vadd.f32 %v1053, %v1145
        %v1147 = vpop.f32.mrb[0].mxu0
        %v1148 = vpop.f32.mrb[0].mxu0
        %v1149 = vadd.f32 %v1053, %v1148
        %v1150 = vpop.f32.mrb[0].mxu0
        %1151 = vmatprep.mubr.bf16.mxu0 0
        %1152 = vmatmul.mubr.bf16.gmra.mrb[0].mxu0 %v1043
        %v1153 = vpop.f32.mrb[0].mxu0
        %v1154 = vadd.f32 %v1053, %v1153
        %v1155 = vpop.f32.mrb[0].mxu0
        %v1156 = vpop.f32.mrb[0].mxu0
        %v1157 = vadd.f32 %v1053, %v1156
        %v1158 = vpop.f32.mrb[0].mxu0
        %1159 = vmatprep.mubr.bf16.mxu0 0
        %1160 = vmatmul.mubr.bf16.gmra.mrb[0].mxu0 %v1044
        %v1161 = vpop.f32.mrb[0].mxu0
        %v1162 = vadd.f32 %v1053, %v1161
        %v1163 = vpop.f32.mrb[0].mxu0
        %v1164 = vpop.f32.mrb[0].mxu0
        %v1165 = vadd.f32 %v1053, %v1164
        %v1166 = vpop.f32.mrb[0].mxu0
        %1167 = vmatprep.mubr.bf16.mxu0 0
        %1168 = vmatmul.mubr.bf16.gmra.mrb[0].mxu0 %v1045
        %v1169 = vpop.f32.mrb[0].mxu0
        %v1170 = vadd.f32 %v1053, %v1169
        %v1171 = vpop.f32.mrb[0].mxu0
        %v1172 = vpop.f32.mrb[0].mxu0
        %v1173 = vadd.f32 %v1053, %v1172
        %v1174 = vpop.f32.mrb[0].mxu0
        %1175 = vmatprep.mubr.bf16.mxu0 0
        %1176 = vmatmul.mubr.bf16.gmra.mrb[0].mxu0 %v1046
        %v1177 = vpop.f32.mrb[0].mxu0
        %v1178 = vadd.f32 %v1053, %v1177
        %v1179 = vpop.f32.mrb[0].mxu0
        %v1180 = vpop.f32.mrb[0].mxu0
        %v1181 = vadd.f32 %v1053, %v1180
        %v1182 = vpop.f32.mrb[0].mxu0
        %1183 = vmatprep.mubr.bf16.mxu0 0
        %1184 = vmatmul.mubr.bf16.gmra.mrb[0].mxu0 %v1047
        %v1185 = vpop.f32.mrb[0].mxu0
        %v1186 = vadd.f32 %v1053, %v1185
        %v1187 = vpop.f32.mrb[0].mxu0
        %v1188 = vpop.f32.mrb[0].mxu0
        %v1189 = vadd.f32 %v1053, %v1188
        %v1190 = vpop.f32.mrb[0].mxu0
        %1191 = vmatprep.mubr.bf16.mxu0 0
        %1192 = vmatmul.mubr.bf16.gmra.mrb[0].mxu0 %v1048
        %v1193 = vpop.f32.mrb[0].mxu0
        %v1194 = vadd.f32 %v1053, %v1193
        %v1195 = vpop.f32.mrb[0].mxu0
        %v1196 = vpop.f32.mrb[0].mxu0
        %v1197 = vadd.f32 %v1053, %v1196
        %v1198 = vpop.f32.mrb[0].mxu0
        %1199 = vdwg.mxu0
        %v1200 = vtanh.pop %v1138
        %v1201 = vtanh.pop %v1141
        %v1202 = vtanh.pop %v1146
        %v1203 = vtanh.pop %v1149
        %v1204 = vtanh.pop %v1154
        %v1205 = vtanh.pop %v1157
        %v1206 = vtanh.pop %v1162
        %v1207 = vtanh.pop %v1165
        %v1208 = vtanh.pop %v1170
        %v1209 = vtanh.pop %v1173
        %v1210 = vtanh.pop %v1178
        %v1211 = vtanh.pop %v1181
        %v1212 = vtanh.pop %v1186
        %v1213 = vtanh.pop %v1189
        %v1214 = vtanh.pop %v1194
        %v1215 = vtanh.pop %v1197
        %v1216 = vld [vmem:[#allocation11] sm:$0xf]
        %v1217 = vld [vmem:[#allocation11 + $0x4] sm:$0xf]
        %v1218 = vld [vmem:[#allocation11 + $0x8] sm:$0xf]
        %v1219 = vld [vmem:[#allocation11 + $0xc] sm:$0xf]
        %v1220 = vld [vmem:[#allocation11 + $0x10] sm:$0xf]
        %v1221 = vld [vmem:[#allocation11 + $0x14] sm:$0xf]
        %v1222 = vld [vmem:[#allocation11 + $0x18] sm:$0xf]
        %v1223 = vld [vmem:[#allocation11 + $0x1c] sm:$0xf]
        %v1224 = vld [vmem:[#allocation11 + $0x20] sm:$0xf]
        %v1225 = vld [vmem:[#allocation11 + $0x24] sm:$0xf]
        %v1226 = vld [vmem:[#allocation11 + $0x28] sm:$0xf]
        %v1227 = vld [vmem:[#allocation11 + $0x2c] sm:$0xf]
        %v1228 = vld [vmem:[#allocation11 + $0x30] sm:$0xf]
        %v1229 = vld [vmem:[#allocation11 + $0x34] sm:$0xf]
        %v1230 = vld [vmem:[#allocation11 + $0x38] sm:$0xf]
        %v1231 = vld [vmem:[#allocation11 + $0x3c] sm:$0xf]
        %v1232 = vld [vmem:[%s9] sm:$0x1]
        %v1233 = vpack.c.bf16 %v1201, %v1200
        %v1234 = vpack.c.bf16 %v1203, %v1202
        %v1235 = vpack.c.bf16 %v1205, %v1204
        %v1236 = vpack.c.bf16 %v1207, %v1206
        %v1237 = vpack.c.bf16 %v1209, %v1208
        %v1238 = vpack.c.bf16 %v1211, %v1210
        %v1239 = vpack.c.bf16 %v1213, %v1212
        %v1240 = vpack.c.bf16 %v1215, %v1214
        %v1242 = vlaneseq
        %v1243 = vshrl.u32 %v1242, 7
        %v1244 = vsub.s32 0, %v1243
        %v1245 = vrot.slane %v1232, %v1244
        %v1263 = vunpack.c.l.b16 %v1216
        %v1264 = vunpack.c.l.b16 %v1217
        %v1265 = vunpack.c.l.b16 %v1218
        %v1266 = vunpack.c.l.b16 %v1219
        %v1267 = vunpack.c.l.b16 %v1220
        %v1268 = vunpack.c.l.b16 %v1221
        %v1269 = vunpack.c.l.b16 %v1222
        %v1270 = vunpack.c.l.b16 %v1223
        %v1271 = vunpack.c.l.b16 %v1224
        %v1272 = vunpack.c.l.b16 %v1225
        %v1273 = vunpack.c.l.b16 %v1226
        %v1274 = vunpack.c.l.b16 %v1227
        %v1275 = vunpack.c.l.b16 %v1228
        %v1276 = vunpack.c.l.b16 %v1229
        %v1277 = vunpack.c.l.b16 %v1230
        %v1278 = vunpack.c.l.b16 %v1231
        %v1279 = vpack.c.b16 %v1264, %v1263
        %v1280 = vpack.c.b16 %v1266, %v1265
        %v1281 = vpack.c.b16 %v1268, %v1267
        %v1282 = vpack.c.b16 %v1270, %v1269
        %v1283 = vpack.c.b16 %v1272, %v1271
        %v1284 = vpack.c.b16 %v1274, %v1273
        %v1285 = vpack.c.b16 %v1276, %v1275
        %v1286 = vpack.c.b16 %v1278, %v1277
        %1295 = vmatprep.subr.bf16.mxu0 0
        %1296 = vmatpush1.bf16.msra.mxu0 %v1279
        %1297 = vmatprep.subr.bf16.mxu0 0
        %1298 = vmatpush1.bf16.msra.mxu0 %v1280
        %1299 = vmatprep.subr.bf16.mxu0 0
        %1300 = vmatpush1.bf16.msra.mxu0 %v1281
        %1301 = vmatprep.subr.bf16.mxu0 0
        %1302 = vmatpush1.bf16.msra.mxu0 %v1282
        %1303 = vmatprep.subr.bf16.mxu0 0
        %1304 = vmatpush1.bf16.msra.mxu0 %v1283
        %1305 = vmatprep.subr.bf16.mxu0 0
        %1306 = vmatpush1.bf16.msra.mxu0 %v1284
        %1307 = vmatprep.subr.bf16.mxu0 0
        %1308 = vmatpush1.bf16.msra.mxu0 %v1285
        %1309 = vmatprep.subr.bf16.mxu0 0
        %1310 = vmatpush1.bf16.msra.mxu0 %v1286
        %1311 = vmatprep.subr.bf16.mxu0 0
        %1312 = vmatpush1.bf16.msra.mxu0 0
        %1313 = vmatprep.subr.bf16.mxu0 0
        %1314 = vmatpush1.bf16.msra.mxu0 0
        %1315 = vmatprep.subr.bf16.mxu0 0
        %1316 = vmatpush1.bf16.msra.mxu0 0
        %1317 = vmatprep.subr.bf16.mxu0 0
        %1318 = vmatpush1.bf16.msra.mxu0 0
        %1319 = vmatprep.subr.bf16.mxu0 0
        %1320 = vmatpush1.bf16.msra.mxu0 0
        %1321 = vmatprep.subr.bf16.mxu0 0
        %1322 = vmatpush1.bf16.msra.mxu0 0
        %1323 = vmatprep.subr.bf16.mxu0 0
        %1324 = vmatpush1.bf16.msra.mxu0 0
        %1325 = vmatprep.subr.bf16.mxu0 0
        %1326 = vmatpush1.bf16.msra.mxu0 0
        %1327 = vmatprep.mubr.bf16.mxu0 0
        %1328 = vmatmul.mubr.bf16.gmra.mrb[0].mxu0 %v1233
        %v1329 = vpop.f32.mrb[0].mxu0
        %v1330 = vadd.f32 %v1245, %v1329
        %v1331 = vpop.f32.mrb[0].mxu0
        %v1332 = vpop.f32.mrb[0].mxu0
        %v1333 = vadd.f32 %v1245, %v1332
        %v1334 = vpop.f32.mrb[0].mxu0
        %1335 = vmatprep.mubr.bf16.mxu0 0
        %1336 = vmatmul.mubr.bf16.gmra.mrb[0].mxu0 %v1234
        %v1337 = vpop.f32.mrb[0].mxu0
        %v1338 = vadd.f32 %v1245, %v1337
        %v1339 = vpop.f32.mrb[0].mxu0
        %v1340 = vpop.f32.mrb[0].mxu0
        %v1341 = vadd.f32 %v1245, %v1340
        %v1342 = vpop.f32.mrb[0].mxu0
        %1343 = vmatprep.mubr.bf16.mxu0 0
        %1344 = vmatmul.mubr.bf16.gmra.mrb[0].mxu0 %v1235
        %v1345 = vpop.f32.mrb[0].mxu0
        %v1346 = vadd.f32 %v1245, %v1345
        %v1347 = vpop.f32.mrb[0].mxu0
        %v1348 = vpop.f32.mrb[0].mxu0
        %v1349 = vadd.f32 %v1245, %v1348
        %v1350 = vpop.f32.mrb[0].mxu0
        %1351 = vmatprep.mubr.bf16.mxu0 0
        %1352 = vmatmul.mubr.bf16.gmra.mrb[0].mxu0 %v1236
        %v1353 = vpop.f32.mrb[0].mxu0
        %v1354 = vadd.f32 %v1245, %v1353
        %v1355 = vpop.f32.mrb[0].mxu0
        %v1356 = vpop.f32.mrb[0].mxu0
        %v1357 = vadd.f32 %v1245, %v1356
        %v1358 = vpop.f32.mrb[0].mxu0
        %1359 = vmatprep.mubr.bf16.mxu0 0
        %1360 = vmatmul.mubr.bf16.gmra.mrb[0].mxu0 %v1237
        %v1361 = vpop.f32.mrb[0].mxu0
        %v1362 = vadd.f32 %v1245, %v1361
        %v1363 = vpop.f32.mrb[0].mxu0
        %v1364 = vpop.f32.mrb[0].mxu0
        %v1365 = vadd.f32 %v1245, %v1364
        %v1366 = vpop.f32.mrb[0].mxu0
        %1367 = vmatprep.mubr.bf16.mxu0 0
        %1368 = vmatmul.mubr.bf16.gmra.mrb[0].mxu0 %v1238
        %v1369 = vpop.f32.mrb[0].mxu0
        %v1370 = vadd.f32 %v1245, %v1369
        %v1371 = vpop.f32.mrb[0].mxu0
        %v1372 = vpop.f32.mrb[0].mxu0
        %v1373 = vadd.f32 %v1245, %v1372
        %v1374 = vpop.f32.mrb[0].mxu0
        %1375 = vmatprep.mubr.bf16.mxu0 0
        %1376 = vmatmul.mubr.bf16.gmra.mrb[0].mxu0 %v1239
        %v1377 = vpop.f32.mrb[0].mxu0
        %v1378 = vadd.f32 %v1245, %v1377
        %v1379 = vpop.f32.mrb[0].mxu0
        %v1380 = vpop.f32.mrb[0].mxu0
        %v1381 = vadd.f32 %v1245, %v1380
        %v1382 = vpop.f32.mrb[0].mxu0
        %1383 = vmatprep.mubr.bf16.mxu0 0
        %1384 = vmatmul.mubr.bf16.gmra.mrb[0].mxu0 %v1240
        %v1385 = vpop.f32.mrb[0].mxu0
        %v1386 = vadd.f32 %v1245, %v1385
        %v1387 = vpop.f32.mrb[0].mxu0
        %v1388 = vpop.f32.mrb[0].mxu0
        %v1389 = vadd.f32 %v1245, %v1388
        %v1390 = vpop.f32.mrb[0].mxu0
        %1391 = vdwg.mxu0
        %1392 = vst [vmem:[%s475] sm:$0xff] %v1330
        %1393 = vst [vmem:[%s475 + $0x8] sm:$0xff] %v1333
        %1394 = vst [vmem:[%s475 + $0x10] sm:$0xff] %v1338
        %1395 = vst [vmem:[%s475 + $0x18] sm:$0xff] %v1341
        %1396 = vst [vmem:[%s475 + $0x20] sm:$0xff] %v1346
        %1397 = vst [vmem:[%s475 + $0x28] sm:$0xff] %v1349
        %1398 = vst [vmem:[%s475 + $0x30] sm:$0xff] %v1354
        %1399 = vst [vmem:[%s475 + $0x38] sm:$0xff] %v1357
        %1400 = vst [vmem:[%s475 + $0x40] sm:$0xff] %v1362
        %1401 = vst [vmem:[%s475 + $0x48] sm:$0xff] %v1365
        %1402 = vst [vmem:[%s475 + $0x50] sm:$0xff] %v1370
        %1403 = vst [vmem:[%s475 + $0x58] sm:$0xff] %v1373
        %1404 = vst [vmem:[%s475 + $0x60] sm:$0xff] %v1378
        %1405 = vst [vmem:[%s475 + $0x68] sm:$0xff] %v1381
        %1406 = vst [vmem:[%s475 + $0x70] sm:$0xff] %v1386
        %1407 = vst [vmem:[%s475 + $0x78] sm:$0xff] %v1389
        %s1408 = sand.u32 %s260, 1
        %s1409 = scalar_lea.sflag [#allocation4], %s1408
        %s1410 = sand.u32 %s260, 1
        %s1411 = smul.addr %s1410, 128
        %s1412 = scalar_lea.vmem [#allocation13], %s1411
        // Predicated region
        $region85: #{tpu_custom_call.1} parent=59 // pred_check
          %p1413 = pneg %p270
        $region86: #{tpu_custom_call.1} parent=59 // pred_check_branch
          %1415 = sbr.rel (%p1413) target = $region88
        $region87: #{tpu_custom_call.1} parent=59 // pred_region
          %s1416 = smul.u32 16, %s32
          %s1418 = ssub.s32 2048, 2048
          %1419 = vsyncadd %s1409, %s1418
          %s1420 = smul.addr %s1416, 128
          %s1421 = scalar_lea.hbm %s10, %s1420
          %s1422 = sshll.u32 %s1412, 4
          %s1423 = int_to_ptr.vmem [resolvable:$true] %s1422
          %1428 = dma.vmem_to_hbm [thread:$0]  %s1423, 2048, %s1421, %s1409, 128, 128, 8
        $region88: #{tpu_custom_call.1} parent=59 // pred_fallthru
          _
      $region60: #{tpu_custom_call.1} parent=5 // pred_fallthru
        _
      %p1429 = scmp.le.s32.totalorder 2, %s27
      // Predicated region
      $region89: #{tpu_custom_call.1} parent=5 // pred_check
        %p1430 = pneg %p1429
      $region90: #{tpu_custom_call.1} parent=5 // pred_check_branch
        %1432 = sbr.rel (%p1430) target = $region92
      $region91: #{tpu_custom_call.1} parent=5 // pred_region
        %s1433 = ssub.s32 %s27, 2
        // Predicated region
        $region93: #{tpu_custom_call.1} parent=91 // pred_check
          %p1434 = pneg %p276
        $region94: #{tpu_custom_call.1} parent=91 // pred_check_branch
          %1436 = sbr.rel (%p1434) target = $region96
        $region95: #{tpu_custom_call.1} parent=91 // pred_region
          %s1437 = sand.u32 %s261, 1
          %s1438 = scalar_lea.sflag [#allocation4], %s1437
          %s1439 = sand.u32 %s261, 1
          %s1440 = smul.addr %s1439, 128
          %s1441 = scalar_lea.vmem [#allocation13], %s1440
          %1442 = dma.done %s1438, 2048
        $region96: #{tpu_custom_call.1} parent=91 // pred_fallthru
          _
      $region92: #{tpu_custom_call.1} parent=5 // pred_fallthru
        _
    $region6: #{tpu_custom_call.1} parent=1 // loop_footer
      %s31 = sadd.s32 1, %s27
    $region7: #{tpu_custom_call.1} parent=1 // loop_footer_branch
      %26 = sbr.rel target = $region3
    $region8: #{tpu_custom_call.1} parent=1 // loop_exit
      _
    %1443 = vsyncpa [#allocation3], 1
    %s1444 = scalar_lea.sflag [#allocation3], 1
    %1445 = vsyncpa %s1444, 1
    %1446 = vsyncpa [#allocation6], 1
    %s1447 = scalar_lea.sflag [#allocation6], 1
    %1448 = vsyncpa %s1447, 1
    %1449 = vsyncpa [#allocation9], 1
    %1450 = vsyncpa [#allocation12], 1
    %1451 = vsyncpa [#allocation4], 1
    %s1452 = scalar_lea.sflag [#allocation4], 1
    %1453 = vsyncpa %s1452, 1

// kernel: tpu_custom_call.1
$region0: #{tpu_custom_call.1}
  #allocation0 [shape = 'u32[]', space=smem, size = 0x4, offset = 0x4, fixed_abs, tag = 'smem constant byte address 0x4 - core index']
  #allocation1 [shape = 'u32[144,128]{1,0:T(1,128)}', space=vmem, size = 0x12000, scoped, tag = 'internal scratch']
  %s0 = inlined_call_operand.hbm [shape: bf16[256,128], index: 0, kind: input, shape index: {}]
  %s1 = inlined_call_operand.hbm [shape: f32[256,128], index: 1, kind: input, shape index: {}]
  %s2 = inlined_call_operand.hbm [shape: bf16[128,128], index: 2, kind: input, shape index: {}]
  %s3 = inlined_call_operand.vmem [shape: f32[1,128], index: 3, kind: input, shape index: {}]
  %s4 = inlined_call_operand.hbm [shape: bf16[128,128], index: 4, kind: input, shape index: {}]
  %s5 = inlined_call_operand.vmem [shape: f32[1,128], index: 5, kind: input, shape index: {}]
  %s6 = inlined_call_operand.hbm [shape: bf16[128,128], index: 6, kind: input, shape index: {}]
  %s7 = inlined_call_operand.vmem [shape: f32[1,128], index: 7, kind: input, shape index: {}]
  %s8 = inlined_call_operand.hbm [shape: bf16[128,128], index: 8, kind: input, shape index: {}]
  %s9 = inlined_call_operand.vmem [shape: f32[1,128], index: 9, kind: input, shape index: {}]
  %s10 = inlined_call_operand.hbm [shape: f32[256,128], index: 10, kind: output, shape index: {}]
  %s11 = sld [smem:[#allocation0]]
  $region97: #{tpu_custom_call.1} parent=0
    _
  %s13 = ssub.s32 1, %s11
  %s14 = scalar_select 0, %s13, %s11
  $region1: #{tpu_custom_call.1} parent=0
    #allocation2 [shape = 'u8[65536]{0}', space=vmem, size = 0x10000, scoped, tag = 'input window, operand 0']
    #allocation3 [shape = 's32[2]{0}', space=sflag, size = 0x8, scoped, tag = 'scoped memory for tpu_custom_call.1']
    #allocation4 [shape = 's32[2]{0}', space=sflag, size = 0x8, scoped, tag = 'scoped memory for tpu_custom_call.1']
    #allocation5 [shape = 'u8[131072]{0}', space=vmem, size = 0x20000, scoped, tag = 'input window, operand 1']
    #allocation6 [shape = 's32[2]{0}', space=sflag, size = 0x8, scoped, tag = 'scoped memory for tpu_custom_call.1']
    #allocation7 [shape = 'u8[32768]{0}', space=vmem, size = 0x8000, scoped, tag = 'input window, operand 2, single buffered']
    #allocation8 [shape = 'u8[32768]{0}', space=vmem, size = 0x8000, scoped, tag = 'input window, operand 4, single buffered']
    #allocation9 [shape = 's32[1]{0}', space=sflag, size = 0x4, scoped, tag = 'scoped memory for tpu_custom_call.1']
    #allocation10 [shape = 'u8[32768]{0}', space=vmem, size = 0x8000, scoped, tag = 'input window, operand 6, single buffered']
    #allocation11 [shape = 'u8[32768]{0}', space=vmem, size = 0x8000, scoped, tag = 'input window, operand 8, single buffered']
    #allocation12 [shape = 's32[1]{0}', space=sflag, size = 0x4, scoped, tag = 'scoped memory for tpu_custom_call.1']
    #allocation13 [shape = 'u8[131072]{0}', space=vmem, size = 0x20000, scoped, tag = 'output window, operand 0']
    %15 = vsyncpa [#allocation3], 0
    %s16 = scalar_lea.sflag [#allocation3], 1
    %17 = vsyncpa %s16, 0
    %18 = vsyncpa [#allocation6], 0
    %s19 = scalar_lea.sflag [#allocation6], 1
    %20 = vsyncpa %s19, 0
    %21 = vsyncpa [#allocation9], 0
    %22 = vsyncpa [#allocation12], 0
    %23 = vsyncpa [#allocation4], 0
    %s24 = scalar_lea.sflag [#allocation4], 1
    %25 = vsyncpa %s24, 0
    loop: start=0, step=1, limit=4
    $region2: #{tpu_custom_call.1} parent=1 // loop_pre_header
      _
    $region3: #{tpu_custom_call.1} parent=1 // loop_header
      %s27 = sphi 0, %s31
      %p28 = scmp.ge.s32.totalorder %s27, 4
      %s37 = sphi 0, %s39
      %s40 = sphi 0, %s37
      %s41 = sphi 0, %s40
      %s57 = sphi 0, %s41
      %s63 = sphi 0, %s65
      %s66 = sphi 0, %s63
      %s67 = sphi 0, %s66
      %s83 = sphi 0, %s67
      %s87 = sphi 0, %s87
      %s89 = sphi 0, %s87
      %s90 = sphi 0, %s89
      %s104 = sphi 0, %s90
      %s108 = sphi 0, %s108
      %s110 = sphi 0, %s108
      %s111 = sphi 0, %s110
      %s125 = sphi 0, %s111
      %s129 = sphi 0, %s129
      %s131 = sphi 0, %s129
      %s132 = sphi 0, %s131
      %s146 = sphi 0, %s132
      %s150 = sphi 0, %s150
      %s152 = sphi 0, %s150
      %s153 = sphi 0, %s152
      %s167 = sphi 0, %s153
      %s171 = sphi 0, %s171
      %s173 = sphi 0, %s171
      %s174 = sphi 0, %s173
      %s188 = sphi 0, %s174
      %s192 = sphi 0, %s192
      %s194 = sphi 0, %s192
      %s195 = sphi 0, %s194
      %s209 = sphi 0, %s195
      %s213 = sphi 0, %s213
      %s215 = sphi 0, %s213
      %s216 = sphi 0, %s215
      %s230 = sphi 0, %s216
      %s234 = sphi 0, %s234
      %s236 = sphi 0, %s234
      %s237 = sphi 0, %s236
      %s251 = sphi 0, %s237
      %s257 = sphi 0, %s259
      %s260 = sphi 0, %s257
      %s261 = sphi 0, %s260
      %s277 = sphi 0, %s261
    $region4: #{tpu_custom_call.1} parent=1 // loop_header_branch
      %30 = sbr.rel (%p28) target = $region8
    $region5: #{tpu_custom_call.1} parent=1 // loop_body
      %s32 = ssub.s32 %s27, 1
      %s33 = ssub.s32 %s27, 2
      %s34 = sadd.s32 %s27, 1
      %s35 = ssub.s32 %s27, %s34
      %p36 = scmp.eq.s32.totalorder %s35, 0
      %s38 = sadd.s32 %s37, 1
      %s39 = scalar_select %p36, %s37, %s38
      %p42 = pneg %p36
      %p43 = scmp.eq.s32.totalorder %s27, 1
      %p44 = por %p42, %p43
      %p45 = scmp.ne.s32.totalorder %s37, %s40
      %p46 = scmp.eq.s32.totalorder %s27, 0
      %p47 = por %p45, %p46
      %p48 = scmp.ne.s32.totalorder %s37, %s40
      %p49 = scmp.eq.s32.totalorder %s32, 1
      %p50 = por %p48, %p49
      %p51 = scmp.ne.s32.totalorder %s40, %s41
      %p52 = scmp.eq.s32.totalorder %s32, 0
      %p53 = por %p51, %p52
      %p54 = scmp.ne.s32.totalorder %s40, %s41
      %p55 = scmp.eq.s32.totalorder %s33, 1
      %p56 = por %p54, %p55
      %p58 = scmp.ne.s32.totalorder %s41, %s57
      %p59 = scmp.eq.s32.totalorder %s33, 0
      %p60 = por %p58, %p59
      %s61 = ssub.s32 %s27, %s34
      %p62 = scmp.eq.s32.totalorder %s61, 0
      %s64 = sadd.s32 %s63, 1
      %s65 = scalar_select %p62, %s63, %s64
      %p68 = pneg %p62
      %p69 = scmp.eq.s32.totalorder %s27, 1
      %p70 = por %p68, %p69
      %p71 = scmp.ne.s32.totalorder %s63, %s66
      %p72 = scmp.eq.s32.totalorder %s27, 0
      %p73 = por %p71, %p72
      %p74 = scmp.ne.s32.totalorder %s63, %s66
      %p75 = scmp.eq.s32.totalorder %s32, 1
      %p76 = por %p74, %p75
      %p77 = scmp.ne.s32.totalorder %s66, %s67
      %p78 = scmp.eq.s32.totalorder %s32, 0
      %p79 = por %p77, %p78
      %p80 = scmp.ne.s32.totalorder %s66, %s67
      %p81 = scmp.eq.s32.totalorder %s33, 1
      %p82 = por %p80, %p81
      %p84 = scmp.ne.s32.totalorder %s67, %s83
      %p85 = scmp.eq.s32.totalorder %s33, 0
      %p86 = por %p84, %p85
      %s88 = sadd.s32 %s87, 1
      %p91 = scmp.eq.s32.totalorder %s27, 1
      %p92 = scmp.ne.s32.totalorder %s87, %s89
      %p93 = scmp.eq.s32.totalorder %s27, 0
      %p94 = por %p92, %p93
      %p95 = scmp.ne.s32.totalorder %s87, %s89
      %p96 = scmp.eq.s32.totalorder %s32, 1
      %p97 = por %p95, %p96
      %p98 = scmp.ne.s32.totalorder %s89, %s90
      %p99 = scmp.eq.s32.totalorder %s32, 0
      %p100 = por %p98, %p99
      %p101 = scmp.ne.s32.totalorder %s89, %s90
      %p102 = scmp.eq.s32.totalorder %s33, 1
      %p103 = por %p101, %p102
      %p105 = scmp.ne.s32.totalorder %s90, %s104
      %p106 = scmp.eq.s32.totalorder %s33, 0
      %p107 = por %p105, %p106
      %s109 = sadd.s32 %s108, 1
      %p112 = scmp.eq.s32.totalorder %s27, 1
      %p113 = scmp.ne.s32.totalorder %s108, %s110
      %p114 = scmp.eq.s32.totalorder %s27, 0
      %p115 = por %p113, %p114
      %p116 = scmp.ne.s32.totalorder %s108, %s110
      %p117 = scmp.eq.s32.totalorder %s32, 1
      %p118 = por %p116, %p117
      %p119 = scmp.ne.s32.totalorder %s110, %s111
      %p120 = scmp.eq.s32.totalorder %s32, 0
      %p121 = por %p119, %p120
      %p122 = scmp.ne.s32.totalorder %s110, %s111
      %p123 = scmp.eq.s32.totalorder %s33, 1
      %p124 = por %p122, %p123
      %p126 = scmp.ne.s32.totalorder %s111, %s125
      %p127 = scmp.eq.s32.totalorder %s33, 0
      %p128 = por %p126, %p127
      %s130 = sadd.s32 %s129, 1
      %p133 = scmp.eq.s32.totalorder %s27, 1
      %p134 = scmp.ne.s32.totalorder %s129, %s131
      %p135 = scmp.eq.s32.totalorder %s27, 0
      %p136 = por %p134, %p135
      %p137 = scmp.ne.s32.totalorder %s129, %s131
      %p138 = scmp.eq.s32.totalorder %s32, 1
      %p139 = por %p137, %p138
      %p140 = scmp.ne.s32.totalorder %s131, %s132
      %p141 = scmp.eq.s32.totalorder %s32, 0
      %p142 = por %p140, %p141
      %p143 = scmp.ne.s32.totalorder %s131, %s132
      %p144 = scmp.eq.s32.totalorder %s33, 1
      %p145 = por %p143, %p144
      %p147 = scmp.ne.s32.totalorder %s132, %s146
      %p148 = scmp.eq.s32.totalorder %s33, 0
      %p149 = por %p147, %p148
      %s151 = sadd.s32 %s150, 1
      %p154 = scmp.eq.s32.totalorder %s27, 1
      %p155 = scmp.ne.s32.totalorder %s150, %s152
      %p156 = scmp.eq.s32.totalorder %s27, 0
      %p157 = por %p155, %p156
      %p158 = scmp.ne.s32.totalorder %s150, %s152
      %p159 = scmp.eq.s32.totalorder %s32, 1
      %p160 = por %p158, %p159
      %p161 = scmp.ne.s32.totalorder %s152, %s153
      %p162 = scmp.eq.s32.totalorder %s32, 0
      %p163 = por %p161, %p162
      %p164 = scmp.ne.s32.totalorder %s152, %s153
      %p165 = scmp.eq.s32.totalorder %s33, 1
      %p166 = por %p164, %p165
      %p168 = scmp.ne.s32.totalorder %s153, %s167
      %p169 = scmp.eq.s32.totalorder %s33, 0
      %p170 = por %p168, %p169
      %s172 = sadd.s32 %s171, 1
      %p175 = scmp.eq.s32.totalorder %s27, 1
      %p176 = scmp.ne.s32.totalorder %s171, %s173
      %p177 = scmp.eq.s32.totalorder %s27, 0
      %p178 = por %p176, %p177
      %p179 = scmp.ne.s32.totalorder %s171, %s173
      %p180 = scmp.eq.s32.totalorder %s32, 1
      %p181 = por %p179, %p180
      %p182 = scmp.ne.s32.totalorder %s173, %s174
      %p183 = scmp.eq.s32.totalorder %s32, 0
      %p184 = por %p182, %p183
      %p185 = scmp.ne.s32.totalorder %s173, %s174
      %p186 = scmp.eq.s32.totalorder %s33, 1
      %p187 = por %p185, %p186
      %p189 = scmp.ne.s32.totalorder %s174, %s188
      %p190 = scmp.eq.s32.totalorder %s33, 0
      %p191 = por %p189, %p190
      %s193 = sadd.s32 %s192, 1
      %p196 = scmp.eq.s32.totalorder %s27, 1
      %p197 = scmp.ne.s32.totalorder %s192, %s194
      %p198 = scmp.eq.s32.totalorder %s27, 0
      %p199 = por %p197, %p198
      %p200 = scmp.ne.s32.totalorder %s192, %s194
      %p201 = scmp.eq.s32.totalorder %s32, 1
      %p202 = por %p200, %p201
      %p203 = scmp.ne.s32.totalorder %s194, %s195
      %p204 = scmp.eq.s32.totalorder %s32, 0
      %p205 = por %p203, %p204
      %p206 = scmp.ne.s32.totalorder %s194, %s195
      %p207 = scmp.eq.s32.totalorder %s33, 1
      %p208 = por %p206, %p207
      %p210 = scmp.ne.s32.totalorder %s195, %s209
      %p211 = scmp.eq.s32.totalorder %s33, 0
      %p212 = por %p210, %p211
      %s214 = sadd.s32 %s213, 1
      %p217 = scmp.eq.s32.totalorder %s27, 1
      %p218 = scmp.ne.s32.totalorder %s213, %s215
      %p219 = scmp.eq.s32.totalorder %s27, 0
      %p220 = por %p218, %p219
      %p221 = scmp.ne.s32.totalorder %s213, %s215
      %p222 = scmp.eq.s32.totalorder %s32, 1
      %p223 = por %p221, %p222
      %p224 = scmp.ne.s32.totalorder %s215, %s216
      %p225 = scmp.eq.s32.totalorder %s32, 0
      %p226 = por %p224, %p225
      %p227 = scmp.ne.s32.totalorder %s215, %s216
      %p228 = scmp.eq.s32.totalorder %s33, 1
      %p229 = por %p227, %p228
      %p231 = scmp.ne.s32.totalorder %s216, %s230
      %p232 = scmp.eq.s32.totalorder %s33, 0
      %p233 = por %p231, %p232
      %s235 = sadd.s32 %s234, 1
      %p238 = scmp.eq.s32.totalorder %s27, 1
      %p239 = scmp.ne.s32.totalorder %s234, %s236
      %p240 = scmp.eq.s32.totalorder %s27, 0
      %p241 = por %p239, %p240
      %p242 = scmp.ne.s32.totalorder %s234, %s236
      %p243 = scmp.eq.s32.totalorder %s32, 1
      %p244 = por %p242, %p243
      %p245 = scmp.ne.s32.totalorder %s236, %s237
      %p246 = scmp.eq.s32.totalorder %s32, 0
      %p247 = por %p245, %p246
      %p248 = scmp.ne.s32.totalorder %s236, %s237
      %p249 = scmp.eq.s32.totalorder %s33, 1
      %p250 = por %p248, %p249
      %p252 = scmp.ne.s32.totalorder %s237, %s251
      %p253 = scmp.eq.s32.totalorder %s33, 0
      %p254 = por %p252, %p253
      %s255 = ssub.s32 %s27, %s34
      %p256 = scmp.eq.s32.totalorder %s255, 0
      %s258 = sadd.s32 %s257, 1
      %s259 = scalar_select %p256, %s257, %s258
      %p262 = pneg %p256
      %p263 = scmp.eq.s32.totalorder %s27, 1
      %p264 = por %p262, %p263
      %p265 = scmp.ne.s32.totalorder %s257, %s260
      %p266 = scmp.eq.s32.totalorder %s27, 0
      %p267 = por %p265, %p266
      %p268 = scmp.ne.s32.totalorder %s257, %s260
      %p269 = scmp.eq.s32.totalorder %s32, 1
      %p270 = por %p268, %p269
      %p271 = scmp.ne.s32.totalorder %s260, %s261
      %p272 = scmp.eq.s32.totalorder %s32, 0
      %p273 = por %p271, %p272
      %p274 = scmp.ne.s32.totalorder %s260, %s261
      %p275 = scmp.eq.s32.totalorder %s33, 1
      %p276 = por %p274, %p275
      %p278 = scmp.ne.s32.totalorder %s261, %s277
      %p279 = scmp.eq.s32.totalorder %s33, 0
      %p280 = por %p278, %p279
      %p281 = scmp.le.s32.totalorder 1, %s27
      %p282 = scmp.lt.s32.totalorder %s27, 3
      %p283 = pnand %p281, %p282
      %p284 = pneg %p283
      // Predicated region
      $region9: #{tpu_custom_call.1} parent=5 // pred_check
        _
      $region10: #{tpu_custom_call.1} parent=5 // pred_check_branch
        %286 = sbr.rel (%p283) target = $region12
      $region11: #{tpu_custom_call.1} parent=5 // pred_region
        %s287 = ssub.s32 %s27, 1
        // Predicated region
        $region13: #{tpu_custom_call.1} parent=11 // pred_check
          %p288 = pneg %p100
        $region14: #{tpu_custom_call.1} parent=11 // pred_check_branch
          %290 = sbr.rel (%p288) target = $region16
        $region15: #{tpu_custom_call.1} parent=11 // pred_region
          %s292 = ssub.s32 1024, 1024
          %293 = vsyncadd [#allocation6], %s292
          %s294 = sshll.u32 [#allocation7], 4
          %s295 = int_to_ptr.vmem [resolvable:$true] %s294
          %300 = dma.hbm_to_vmem [thread:$0]  %s2, 1024, %s295, [#allocation6], 64, 64, 4
        $region16: #{tpu_custom_call.1} parent=11 // pred_fallthru
          _
        // Predicated region
        $region17: #{tpu_custom_call.1} parent=11 // pred_check
          %p301 = pneg %p121
        $region18: #{tpu_custom_call.1} parent=11 // pred_check_branch
          %303 = sbr.rel (%p301) target = $region20
        $region19: #{tpu_custom_call.1} parent=11 // pred_region
          _
        $region20: #{tpu_custom_call.1} parent=11 // pred_fallthru
          _
        // Predicated region
        $region21: #{tpu_custom_call.1} parent=11 // pred_check
          %p304 = pneg %p142
        $region22: #{tpu_custom_call.1} parent=11 // pred_check_branch
          %306 = sbr.rel (%p304) target = $region24
        $region23: #{tpu_custom_call.1} parent=11 // pred_region
          %s308 = ssub.s32 1024, 1024
          %309 = vsyncadd [#allocation9], %s308
          %s310 = sshll.u32 [#allocation8], 4
          %s311 = int_to_ptr.vmem [resolvable:$true] %s310
          %316 = dma.hbm_to_vmem [thread:$0]  %s4, 1024, %s311, [#allocation9], 64, 64, 4
        $region24: #{tpu_custom_call.1} parent=11 // pred_fallthru
          _
        // Predicated region
        $region25: #{tpu_custom_call.1} parent=11 // pred_check
          %p317 = pneg %p163
        $region26: #{tpu_custom_call.1} parent=11 // pred_check_branch
          %319 = sbr.rel (%p317) target = $region28
        $region27: #{tpu_custom_call.1} parent=11 // pred_region
          _
        $region28: #{tpu_custom_call.1} parent=11 // pred_fallthru
          _
        // Predicated region
        $region29: #{tpu_custom_call.1} parent=11 // pred_check
          %p320 = pneg %p184
        $region30: #{tpu_custom_call.1} parent=11 // pred_check_branch
          %322 = sbr.rel (%p320) target = $region32
        $region31: #{tpu_custom_call.1} parent=11 // pred_region
          %s324 = ssub.s32 1024, 1024
          %325 = vsyncadd [#allocation9], %s324
          %s326 = sshll.u32 [#allocation10], 4
          %s327 = int_to_ptr.vmem [resolvable:$true] %s326
          %332 = dma.hbm_to_vmem [thread:$0]  %s6, 1024, %s327, [#allocation9], 64, 64, 4
        $region32: #{tpu_custom_call.1} parent=11 // pred_fallthru
          _
        // Predicated region
        $region33: #{tpu_custom_call.1} parent=11 // pred_check
          %p333 = pneg %p205
        $region34: #{tpu_custom_call.1} parent=11 // pred_check_branch
          %335 = sbr.rel (%p333) target = $region36
        $region35: #{tpu_custom_call.1} parent=11 // pred_region
          _
        $region36: #{tpu_custom_call.1} parent=11 // pred_fallthru
          _
        // Predicated region
        $region37: #{tpu_custom_call.1} parent=11 // pred_check
          %p336 = pneg %p226
        $region38: #{tpu_custom_call.1} parent=11 // pred_check_branch
          %338 = sbr.rel (%p336) target = $region40
        $region39: #{tpu_custom_call.1} parent=11 // pred_region
          %s340 = ssub.s32 1024, 1024
          %341 = vsyncadd [#allocation12], %s340
          %s342 = sshll.u32 [#allocation11], 4
          %s343 = int_to_ptr.vmem [resolvable:$true] %s342
          %348 = dma.hbm_to_vmem [thread:$0]  %s8, 1024, %s343, [#allocation12], 64, 64, 4
        $region40: #{tpu_custom_call.1} parent=11 // pred_fallthru
          _
        // Predicated region
        $region41: #{tpu_custom_call.1} parent=11 // pred_check
          %p349 = pneg %p247
        $region42: #{tpu_custom_call.1} parent=11 // pred_check_branch
          %351 = sbr.rel (%p349) target = $region44
        $region43: #{tpu_custom_call.1} parent=11 // pred_region
          _
        $region44: #{tpu_custom_call.1} parent=11 // pred_fallthru
          _
      $region12: #{tpu_custom_call.1} parent=5 // pred_fallthru
        _
      %p352 = scmp.lt.s32.totalorder %s27, 2
      // Predicated region
      $region45: #{tpu_custom_call.1} parent=5 // pred_check
        %p353 = pneg %p352
      $region46: #{tpu_custom_call.1} parent=5 // pred_check_branch
        %355 = sbr.rel (%p353) target = $region48
      $region47: #{tpu_custom_call.1} parent=5 // pred_region
        // Predicated region
        $region49: #{tpu_custom_call.1} parent=47 // pred_check
          %p356 = pneg %p47
        $region50: #{tpu_custom_call.1} parent=47 // pred_check_branch
          %358 = sbr.rel (%p356) target = $region52
        $region51: #{tpu_custom_call.1} parent=47 // pred_region
          %s359 = sand.u32 %s37, 1
          %s360 = scalar_lea.sflag [#allocation3], %s359
          %s361 = sand.u32 %s37, 1
          %s362 = smul.addr %s361, 64
          %s363 = scalar_lea.vmem [#allocation2], %s362
          %s364 = smul.u32 16, %s27
          %s366 = ssub.s32 1024, 1024
          %367 = vsyncadd %s360, %s366
          %s368 = smul.addr %s364, 64
          %s369 = scalar_lea.hbm %s0, %s368
          %s370 = sshll.u32 %s363, 4
          %s371 = int_to_ptr.vmem [resolvable:$true] %s370
          %376 = dma.hbm_to_vmem [thread:$0]  %s369, 1024, %s371, %s360, 64, 64, 4
        $region52: #{tpu_custom_call.1} parent=47 // pred_fallthru
          _
        // Predicated region
        $region53: #{tpu_custom_call.1} parent=47 // pred_check
          %p377 = pneg %p73
        $region54: #{tpu_custom_call.1} parent=47 // pred_check_branch
          %379 = sbr.rel (%p377) target = $region56
        $region55: #{tpu_custom_call.1} parent=47 // pred_region
          %s380 = sand.u32 %s27, 1
          %s381 = scalar_lea.sflag [#allocation6], %s380
          %s382 = sand.u32 %s63, 1
          %s383 = smul.addr %s382, 128
          %s384 = scalar_lea.vmem [#allocation5], %s383
          %s385 = smul.u32 16, %s27
          %s387 = ssub.s32 2048, 2048
          %388 = vsyncadd %s381, %s387
          %s389 = smul.addr %s385, 128
          %s390 = scalar_lea.hbm %s1, %s389
          %s391 = sshll.u32 %s384, 4
          %s392 = int_to_ptr.vmem [resolvable:$true] %s391
          %397 = dma.hbm_to_vmem [thread:$0]  %s390, 2048, %s392, %s381, 128, 128, 8
        $region56: #{tpu_custom_call.1} parent=47 // pred_fallthru
          _
      $region48: #{tpu_custom_call.1} parent=5 // pred_fallthru
        _
      %p398 = scmp.le.s32.totalorder 1, %s27
      %p399 = scmp.lt.s32.totalorder %s27, 3
      %p400 = pnand %p398, %p399
      %p401 = pneg %p400
      // Predicated region
      $region57: #{tpu_custom_call.1} parent=5 // pred_check
        _
      $region58: #{tpu_custom_call.1} parent=5 // pred_check_branch
        %403 = sbr.rel (%p400) target = $region60
      $region59: #{tpu_custom_call.1} parent=5 // pred_region
        %s404 = ssub.s32 %s27, 1
        %s405 = sand.u32 %s40, 1
        %s406 = scalar_lea.sflag [#allocation3], %s405
        %s407 = sand.u32 %s40, 1
        %s408 = smul.addr %s407, 64
        %s409 = scalar_lea.vmem [#allocation2], %s408
        // Predicated region
        $region61: #{tpu_custom_call.1} parent=59 // pred_check
          %p410 = pneg %p53
        $region62: #{tpu_custom_call.1} parent=59 // pred_check_branch
          %412 = sbr.rel (%p410) target = $region64
        $region63: #{tpu_custom_call.1} parent=59 // pred_region
          %413 = dma.done %s406, 1024
        $region64: #{tpu_custom_call.1} parent=59 // pred_fallthru
          _
        %s414 = sand.u32 %s32, 1
        %s415 = scalar_lea.sflag [#allocation6], %s414
        %s416 = sand.u32 %s66, 1
        %s417 = smul.addr %s416, 128
        %s418 = scalar_lea.vmem [#allocation5], %s417
        // Predicated region
        $region65: #{tpu_custom_call.1} parent=59 // pred_check
          %p419 = pneg %p79
        $region66: #{tpu_custom_call.1} parent=59 // pred_check_branch
          %421 = sbr.rel (%p419) target = $region68
        $region67: #{tpu_custom_call.1} parent=59 // pred_region
          %422 = dma.done %s415, 2048
        $region68: #{tpu_custom_call.1} parent=59 // pred_fallthru
          _
        // Predicated region
        $region69: #{tpu_custom_call.1} parent=59 // pred_check
          %p423 = pneg %p100
        $region70: #{tpu_custom_call.1} parent=59 // pred_check_branch
          %425 = sbr.rel (%p423) target = $region72
        $region71: #{tpu_custom_call.1} parent=59 // pred_region
          %426 = dma.done [#allocation6], 1024
        $region72: #{tpu_custom_call.1} parent=59 // pred_fallthru
          _
        // Predicated region
        $region73: #{tpu_custom_call.1} parent=59 // pred_check
          %p427 = pneg %p142
        $region74: #{tpu_custom_call.1} parent=59 // pred_check_branch
          %429 = sbr.rel (%p427) target = $region76
        $region75: #{tpu_custom_call.1} parent=59 // pred_region
          %430 = dma.done [#allocation9], 1024
        $region76: #{tpu_custom_call.1} parent=59 // pred_fallthru
          _
        // Predicated region
        $region77: #{tpu_custom_call.1} parent=59 // pred_check
          %p431 = pneg %p184
        $region78: #{tpu_custom_call.1} parent=59 // pred_check_branch
          %433 = sbr.rel (%p431) target = $region80
        $region79: #{tpu_custom_call.1} parent=59 // pred_region
          %434 = dma.done [#allocation9], 1024
        $region80: #{tpu_custom_call.1} parent=59 // pred_fallthru
          _
        // Predicated region
        $region81: #{tpu_custom_call.1} parent=59 // pred_check
          %p435 = pneg %p226
        $region82: #{tpu_custom_call.1} parent=59 // pred_check_branch
          %437 = sbr.rel (%p435) target = $region84
        $region83: #{tpu_custom_call.1} parent=59 // pred_region
          %438 = dma.done [#allocation12], 1024
        $region84: #{tpu_custom_call.1} parent=59 // pred_fallthru
          _
        %s439 = sand.u32 %s40, 1
        %s440 = scalar_lea.sflag [#allocation3], %s439
        %s441 = sand.u32 %s40, 1
        %s442 = smul.addr %s441, 64
        %s443 = scalar_lea.vmem [#allocation2], %s442
        %p444 = pneg %p53
        %p445 = pneg %p50
        %s446 = sand.u32 %s32, 1
        %s447 = scalar_lea.sflag [#allocation6], %s446
        %s448 = sand.u32 %s66, 1
        %s449 = smul.addr %s448, 128
        %s450 = scalar_lea.vmem [#allocation5], %s449
        %p451 = pneg %p79
        %p452 = pneg %p76
        %p453 = pneg %p100
        %p454 = pneg %p97
        %p455 = pneg %p121
        %p456 = pneg %p118
        %p457 = pneg %p142
        %p458 = pneg %p139
        %p459 = pneg %p163
        %p460 = pneg %p160
        %p461 = pneg %p184
        %p462 = pneg %p181
        %p463 = pneg %p205
        %p464 = pneg %p202
        %p465 = pneg %p226
        %p466 = pneg %p223
        %p467 = pneg %p247
        %p468 = pneg %p244
        %p469 = pneg %p273
        %p470 = pneg %p270
        %s471 = sand.u32 %s260, 1
        %s472 = scalar_lea.sflag [#allocation4], %s471
        %s473 = sand.u32 %s260, 1
        %s474 = smul.addr %s473, 128
        %s475 = scalar_lea.vmem [#allocation13], %s474
        %s476 = smul.u32 16, %s32
        %s477 = smul.u32 16, %s32
        %s478 = smul.u32 16, %s32
        %v480 = vld [vmem:[%s409] sm:$0xf]
        %v481 = vld [vmem:[%s409 + $0x4] sm:$0xf]
        %v482 = vld [vmem:[%s409 + $0x8] sm:$0xf]
        %v483 = vld [vmem:[%s409 + $0xc] sm:$0xf]
        %v484 = vld [vmem:[%s409 + $0x10] sm:$0xf]
        %v485 = vld [vmem:[%s409 + $0x14] sm:$0xf]
        %v486 = vld [vmem:[%s409 + $0x18] sm:$0xf]
        %v487 = vld [vmem:[%s409 + $0x1c] sm:$0xf]
        %v488 = vld [vmem:[%s409 + $0x20] sm:$0xf]
        %v489 = vld [vmem:[%s409 + $0x24] sm:$0xf]
        %v490 = vld [vmem:[%s409 + $0x28] sm:$0xf]
        %v491 = vld [vmem:[%s409 + $0x2c] sm:$0xf]
        %v492 = vld [vmem:[%s409 + $0x30] sm:$0xf]
        %v493 = vld [vmem:[%s409 + $0x34] sm:$0xf]
        %v494 = vld [vmem:[%s409 + $0x38] sm:$0xf]
        %v495 = vld [vmem:[%s409 + $0x3c] sm:$0xf]
        %v496 = vunpack.c.l.bf16 %v480
        %v497 = vunpack.c.l.bf16 %v481
        %v498 = vunpack.c.l.bf16 %v482
        %v499 = vunpack.c.l.bf16 %v483
        %v500 = vunpack.c.l.bf16 %v484
        %v501 = vunpack.c.l.bf16 %v485
        %v502 = vunpack.c.l.bf16 %v486
        %v503 = vunpack.c.l.bf16 %v487
        %v504 = vunpack.c.l.bf16 %v488
        %v505 = vunpack.c.l.bf16 %v489
        %v506 = vunpack.c.l.bf16 %v490
        %v507 = vunpack.c.l.bf16 %v491
        %v508 = vunpack.c.l.bf16 %v492
        %v509 = vunpack.c.l.bf16 %v493
        %v510 = vunpack.c.l.bf16 %v494
        %v511 = vunpack.c.l.bf16 %v495
        %v512 = vmul.f32 %v496, %v496
        %v513 = vmul.f32 %v497, %v497
        %v514 = vmul.f32 %v498, %v498
        %v515 = vmul.f32 %v499, %v499
        %v516 = vmul.f32 %v500, %v500
        %v517 = vmul.f32 %v501, %v501
        %v518 = vmul.f32 %v502, %v502
        %v519 = vmul.f32 %v503, %v503
        %v520 = vmul.f32 %v504, %v504
        %v521 = vmul.f32 %v505, %v505
        %v522 = vmul.f32 %v506, %v506
        %v523 = vmul.f32 %v507, %v507
        %v524 = vmul.f32 %v508, %v508
        %v525 = vmul.f32 %v509, %v509
        %v526 = vmul.f32 %v510, %v510
        %v527 = vmul.f32 %v511, %v511
        %528 = vadd.xlane.f32.xlu0 %v512
        %v529 = vpop.xlane.xlu0 %528
        %530 = vadd.xlane.f32.xlu0 %v513
        %v531 = vpop.xlane.xlu0 %530
        %532 = vadd.xlane.f32.xlu0 %v514
        %v533 = vpop.xlane.xlu0 %532
        %534 = vadd.xlane.f32.xlu0 %v515
        %v535 = vpop.xlane.xlu0 %534
        %536 = vadd.xlane.f32.xlu0 %v516
        %v537 = vpop.xlane.xlu0 %536
        %538 = vadd.xlane.f32.xlu0 %v517
        %v539 = vpop.xlane.xlu0 %538
        %540 = vadd.xlane.f32.xlu0 %v518
        %v541 = vpop.xlane.xlu0 %540
        %542 = vadd.xlane.f32.xlu0 %v519
        %v543 = vpop.xlane.xlu0 %542
        %544 = vadd.xlane.f32.xlu0 %v520
        %v545 = vpop.xlane.xlu0 %544
        %546 = vadd.xlane.f32.xlu0 %v521
        %v547 = vpop.xlane.xlu0 %546
        %548 = vadd.xlane.f32.xlu0 %v522
        %v549 = vpop.xlane.xlu0 %548
        %550 = vadd.xlane.f32.xlu0 %v523
        %v551 = vpop.xlane.xlu0 %550
        %552 = vadd.xlane.f32.xlu0 %v524
        %v553 = vpop.xlane.xlu0 %552
        %554 = vadd.xlane.f32.xlu0 %v525
        %v555 = vpop.xlane.xlu0 %554
        %556 = vadd.xlane.f32.xlu0 %v526
        %v557 = vpop.xlane.xlu0 %556
        %558 = vadd.xlane.f32.xlu0 %v527
        %v559 = vpop.xlane.xlu0 %558
        %v560 = vmax.f32 %v529, 1e-24
        %v561 = vmax.f32 %v531, 1e-24
        %v562 = vmax.f32 %v533, 1e-24
        %v563 = vmax.f32 %v535, 1e-24
        %v564 = vmax.f32 %v537, 1e-24
        %v565 = vmax.f32 %v539, 1e-24
        %v566 = vmax.f32 %v541, 1e-24
        %v567 = vmax.f32 %v543, 1e-24
        %v568 = vmax.f32 %v545, 1e-24
        %v569 = vmax.f32 %v547, 1e-24
        %v570 = vmax.f32 %v549, 1e-24
        %v571 = vmax.f32 %v551, 1e-24
        %v572 = vmax.f32 %v553, 1e-24
        %v573 = vmax.f32 %v555, 1e-24
        %v574 = vmax.f32 %v557, 1e-24
        %v575 = vmax.f32 %v559, 1e-24
        %v576 = vrsqrt.pop %v560
        %v577 = vrsqrt.pop %v561
        %v578 = vrsqrt.pop %v562
        %v579 = vrsqrt.pop %v563
        %v580 = vrsqrt.pop %v564
        %v581 = vrsqrt.pop %v565
        %v582 = vrsqrt.pop %v566
        %v583 = vrsqrt.pop %v567
        %v584 = vrsqrt.pop %v568
        %v585 = vrsqrt.pop %v569
        %v586 = vrsqrt.pop %v570
        %v587 = vrsqrt.pop %v571
        %v588 = vrsqrt.pop %v572
        %v589 = vrsqrt.pop %v573
        %v590 = vrsqrt.pop %v574
        %v591 = vrsqrt.pop %v575
        %v592 = vmul.f32 %v496, %v576
        %v593 = vmul.f32 %v497, %v577
        %v594 = vmul.f32 %v498, %v578
        %v595 = vmul.f32 %v499, %v579
        %v596 = vmul.f32 %v500, %v580
        %v597 = vmul.f32 %v501, %v581
        %v598 = vmul.f32 %v502, %v582
        %v599 = vmul.f32 %v503, %v583
        %v600 = vmul.f32 %v504, %v584
        %v601 = vmul.f32 %v505, %v585
        %v602 = vmul.f32 %v506, %v586
        %v603 = vmul.f32 %v507, %v587
        %v604 = vmul.f32 %v508, %v588
        %v605 = vmul.f32 %v509, %v589
        %v606 = vmul.f32 %v510, %v590
        %v607 = vmul.f32 %v511, %v591
        %v608 = vld [vmem:[#allocation7] sm:$0xf]
        %v609 = vld [vmem:[#allocation7 + $0x4] sm:$0xf]
        %v610 = vld [vmem:[#allocation7 + $0x8] sm:$0xf]
        %v611 = vld [vmem:[#allocation7 + $0xc] sm:$0xf]
        %v612 = vld [vmem:[#allocation7 + $0x10] sm:$0xf]
        %v613 = vld [vmem:[#allocation7 + $0x14] sm:$0xf]
        %v614 = vld [vmem:[#allocation7 + $0x18] sm:$0xf]
        %v615 = vld [vmem:[#allocation7 + $0x1c] sm:$0xf]
        %v616 = vld [vmem:[#allocation7 + $0x20] sm:$0xf]
        %v617 = vld [vmem:[#allocation7 + $0x24] sm:$0xf]
        %v618 = vld [vmem:[#allocation7 + $0x28] sm:$0xf]
        %v619 = vld [vmem:[#allocation7 + $0x2c] sm:$0xf]
        %v620 = vld [vmem:[#allocation7 + $0x30] sm:$0xf]
        %v621 = vld [vmem:[#allocation7 + $0x34] sm:$0xf]
        %v622 = vld [vmem:[#allocation7 + $0x38] sm:$0xf]
        %v623 = vld [vmem:[#allocation7 + $0x3c] sm:$0xf]
        %v624 = vld [vmem:[%s3] sm:$0x1]
        %v625 = vpack.c.bf16 %v593, %v592
        %v626 = vpack.c.bf16 %v595, %v594
        %v627 = vpack.c.bf16 %v597, %v596
        %v628 = vpack.c.bf16 %v599, %v598
        %v629 = vpack.c.bf16 %v601, %v600
        %v630 = vpack.c.bf16 %v603, %v602
        %v631 = vpack.c.bf16 %v605, %v604
        %v632 = vpack.c.bf16 %v607, %v606
        %v634 = vlaneseq
        %v635 = vshrl.u32 %v634, 7
        %v636 = vsub.s32 0, %v635
        %v637 = vrot.slane %v624, %v636
        %v655 = vunpack.c.l.b16 %v608
        %v656 = vunpack.c.l.b16 %v609
        %v657 = vunpack.c.l.b16 %v610
        %v658 = vunpack.c.l.b16 %v611
        %v659 = vunpack.c.l.b16 %v612
        %v660 = vunpack.c.l.b16 %v613
        %v661 = vunpack.c.l.b16 %v614
        %v662 = vunpack.c.l.b16 %v615
        %v663 = vunpack.c.l.b16 %v616
        %v664 = vunpack.c.l.b16 %v617
        %v665 = vunpack.c.l.b16 %v618
        %v666 = vunpack.c.l.b16 %v619
        %v667 = vunpack.c.l.b16 %v620
        %v668 = vunpack.c.l.b16 %v621
        %v669 = vunpack.c.l.b16 %v622
        %v670 = vunpack.c.l.b16 %v623
        %v671 = vpack.c.b16 %v656, %v655
        %v672 = vpack.c.b16 %v658, %v657
        %v673 = vpack.c.b16 %v660, %v659
        %v674 = vpack.c.b16 %v662, %v661
        %v675 = vpack.c.b16 %v664, %v663
        %v676 = vpack.c.b16 %v666, %v665
        %v677 = vpack.c.b16 %v668, %v667
        %v678 = vpack.c.b16 %v670, %v669
        %687 = vmatprep.subr.bf16.mxu0 0
        %688 = vmatpush1.bf16.msra.mxu0 %v671
        %689 = vmatprep.subr.bf16.mxu0 0
        %690 = vmatpush1.bf16.msra.mxu0 %v672
        %691 = vmatprep.subr.bf16.mxu0 0
        %692 = vmatpush1.bf16.msra.mxu0 %v673
        %693 = vmatprep.subr.bf16.mxu0 0
        %694 = vmatpush1.bf16.msra.mxu0 %v674
        %695 = vmatprep.subr.bf16.mxu0 0
        %696 = vmatpush1.bf16.msra.mxu0 %v675
        %697 = vmatprep.subr.bf16.mxu0 0
        %698 = vmatpush1.bf16.msra.mxu0 %v676
        %699 = vmatprep.subr.bf16.mxu0 0
        %700 = vmatpush1.bf16.msra.mxu0 %v677
        %701 = vmatprep.subr.bf16.mxu0 0
        %702 = vmatpush1.bf16.msra.mxu0 %v678
        %703 = vmatprep.subr.bf16.mxu0 0
        %704 = vmatpush1.bf16.msra.mxu0 0
        %705 = vmatprep.subr.bf16.mxu0 0
        %706 = vmatpush1.bf16.msra.mxu0 0
        %707 = vmatprep.subr.bf16.mxu0 0
        %708 = vmatpush1.bf16.msra.mxu0 0
        %709 = vmatprep.subr.bf16.mxu0 0
        %710 = vmatpush1.bf16.msra.mxu0 0
        %711 = vmatprep.subr.bf16.mxu0 0
        %712 = vmatpush1.bf16.msra.mxu0 0
        %713 = vmatprep.subr.bf16.mxu0 0
        %714 = vmatpush1.bf16.msra.mxu0 0
        %715 = vmatprep.subr.bf16.mxu0 0
        %716 = vmatpush1.bf16.msra.mxu0 0
        %717 = vmatprep.subr.bf16.mxu0 0
        %718 = vmatpush1.bf16.msra.mxu0 0
        %719 = vmatprep.mubr.bf16.mxu0 0
        %720 = vmatmul.mubr.bf16.gmra.mrb[0].mxu0 %v625
        %v721 = vpop.f32.mrb[0].mxu0
        %v722 = vadd.f32 %v637, %v721
        %v723 = vpop.f32.mrb[0].mxu0
        %v724 = vpop.f32.mrb[0].mxu0
        %v725 = vadd.f32 %v637, %v724
        %v726 = vpop.f32.mrb[0].mxu0
        %727 = vmatprep.mubr.bf16.mxu0 0
        %728 = vmatmul.mubr.bf16.gmra.mrb[0].mxu0 %v626
        %v729 = vpop.f32.mrb[0].mxu0
        %v730 = vadd.f32 %v637, %v729
        %v731 = vpop.f32.mrb[0].mxu0
        %v732 = vpop.f32.mrb[0].mxu0
        %v733 = vadd.f32 %v637, %v732
        %v734 = vpop.f32.mrb[0].mxu0
        %735 = vmatprep.mubr.bf16.mxu0 0
        %736 = vmatmul.mubr.bf16.gmra.mrb[0].mxu0 %v627
        %v737 = vpop.f32.mrb[0].mxu0
        %v738 = vadd.f32 %v637, %v737
        %v739 = vpop.f32.mrb[0].mxu0
        %v740 = vpop.f32.mrb[0].mxu0
        %v741 = vadd.f32 %v637, %v740
        %v742 = vpop.f32.mrb[0].mxu0
        %743 = vmatprep.mubr.bf16.mxu0 0
        %744 = vmatmul.mubr.bf16.gmra.mrb[0].mxu0 %v628
        %v745 = vpop.f32.mrb[0].mxu0
        %v746 = vadd.f32 %v637, %v745
        %v747 = vpop.f32.mrb[0].mxu0
        %v748 = vpop.f32.mrb[0].mxu0
        %v749 = vadd.f32 %v637, %v748
        %v750 = vpop.f32.mrb[0].mxu0
        %751 = vmatprep.mubr.bf16.mxu0 0
        %752 = vmatmul.mubr.bf16.gmra.mrb[0].mxu0 %v629
        %v753 = vpop.f32.mrb[0].mxu0
        %v754 = vadd.f32 %v637, %v753
        %v755 = vpop.f32.mrb[0].mxu0
        %v756 = vpop.f32.mrb[0].mxu0
        %v757 = vadd.f32 %v637, %v756
        %v758 = vpop.f32.mrb[0].mxu0
        %759 = vmatprep.mubr.bf16.mxu0 0
        %760 = vmatmul.mubr.bf16.gmra.mrb[0].mxu0 %v630
        %v761 = vpop.f32.mrb[0].mxu0
        %v762 = vadd.f32 %v637, %v761
        %v763 = vpop.f32.mrb[0].mxu0
        %v764 = vpop.f32.mrb[0].mxu0
        %v765 = vadd.f32 %v637, %v764
        %v766 = vpop.f32.mrb[0].mxu0
        %767 = vmatprep.mubr.bf16.mxu0 0
        %768 = vmatmul.mubr.bf16.gmra.mrb[0].mxu0 %v631
        %v769 = vpop.f32.mrb[0].mxu0
        %v770 = vadd.f32 %v637, %v769
        %v771 = vpop.f32.mrb[0].mxu0
        %v772 = vpop.f32.mrb[0].mxu0
        %v773 = vadd.f32 %v637, %v772
        %v774 = vpop.f32.mrb[0].mxu0
        %775 = vmatprep.mubr.bf16.mxu0 0
        %776 = vmatmul.mubr.bf16.gmra.mrb[0].mxu0 %v632
        %v777 = vpop.f32.mrb[0].mxu0
        %v778 = vadd.f32 %v637, %v777
        %v779 = vpop.f32.mrb[0].mxu0
        %v780 = vpop.f32.mrb[0].mxu0
        %v781 = vadd.f32 %v637, %v780
        %v782 = vpop.f32.mrb[0].mxu0
        %783 = vdwg.mxu0
        %v784 = vld [vmem:[%s418] sm:$0xff]
        %v785 = vld [vmem:[%s418 + $0x8] sm:$0xff]
        %v786 = vld [vmem:[%s418 + $0x10] sm:$0xff]
        %v787 = vld [vmem:[%s418 + $0x18] sm:$0xff]
        %v788 = vld [vmem:[%s418 + $0x20] sm:$0xff]
        %v789 = vld [vmem:[%s418 + $0x28] sm:$0xff]
        %v790 = vld [vmem:[%s418 + $0x30] sm:$0xff]
        %v791 = vld [vmem:[%s418 + $0x38] sm:$0xff]
        %v792 = vld [vmem:[%s418 + $0x40] sm:$0xff]
        %v793 = vld [vmem:[%s418 + $0x48] sm:$0xff]
        %v794 = vld [vmem:[%s418 + $0x50] sm:$0xff]
        %v795 = vld [vmem:[%s418 + $0x58] sm:$0xff]
        %v796 = vld [vmem:[%s418 + $0x60] sm:$0xff]
        %v797 = vld [vmem:[%s418 + $0x68] sm:$0xff]
        %v798 = vld [vmem:[%s418 + $0x70] sm:$0xff]
        %v799 = vld [vmem:[%s418 + $0x78] sm:$0xff]
        %v800 = vadd.f32 %v722, %v784
        %v801 = vadd.f32 %v725, %v785
        %v802 = vadd.f32 %v730, %v786
        %v803 = vadd.f32 %v733, %v787
        %v804 = vadd.f32 %v738, %v788
        %v805 = vadd.f32 %v741, %v789
        %v806 = vadd.f32 %v746, %v790
        %v807 = vadd.f32 %v749, %v791
        %v808 = vadd.f32 %v754, %v792
        %v809 = vadd.f32 %v757, %v793
        %v810 = vadd.f32 %v762, %v794
        %v811 = vadd.f32 %v765, %v795
        %v812 = vadd.f32 %v770, %v796
        %v813 = vadd.f32 %v773, %v797
        %v814 = vadd.f32 %v778, %v798
        %v815 = vadd.f32 %v781, %v799
        %v816 = vtanh.pop %v800
        %v817 = vtanh.pop %v801
        %v818 = vtanh.pop %v802
        %v819 = vtanh.pop %v803
        %v820 = vtanh.pop %v804
        %v821 = vtanh.pop %v805
        %v822 = vtanh.pop %v806
        %v823 = vtanh.pop %v807
        %v824 = vtanh.pop %v808
        %v825 = vtanh.pop %v809
        %v826 = vtanh.pop %v810
        %v827 = vtanh.pop %v811
        %v828 = vtanh.pop %v812
        %v829 = vtanh.pop %v813
        %v830 = vtanh.pop %v814
        %v831 = vtanh.pop %v815
        %v832 = vld [vmem:[#allocation8] sm:$0xf]
        %v833 = vld [vmem:[#allocation8 + $0x4] sm:$0xf]
        %v834 = vld [vmem:[#allocation8 + $0x8] sm:$0xf]
        %v835 = vld [vmem:[#allocation8 + $0xc] sm:$0xf]
        %v836 = vld [vmem:[#allocation8 + $0x10] sm:$0xf]
        %v837 = vld [vmem:[#allocation8 + $0x14] sm:$0xf]
        %v838 = vld [vmem:[#allocation8 + $0x18] sm:$0xf]
        %v839 = vld [vmem:[#allocation8 + $0x1c] sm:$0xf]
        %v840 = vld [vmem:[#allocation8 + $0x20] sm:$0xf]
        %v841 = vld [vmem:[#allocation8 + $0x24] sm:$0xf]
        %v842 = vld [vmem:[#allocation8 + $0x28] sm:$0xf]
        %v843 = vld [vmem:[#allocation8 + $0x2c] sm:$0xf]
        %v844 = vld [vmem:[#allocation8 + $0x30] sm:$0xf]
        %v845 = vld [vmem:[#allocation8 + $0x34] sm:$0xf]
        %v846 = vld [vmem:[#allocation8 + $0x38] sm:$0xf]
        %v847 = vld [vmem:[#allocation8 + $0x3c] sm:$0xf]
        %v848 = vld [vmem:[%s5] sm:$0x1]
        %v849 = vpack.c.bf16 %v817, %v816
        %v850 = vpack.c.bf16 %v819, %v818
        %v851 = vpack.c.bf16 %v821, %v820
        %v852 = vpack.c.bf16 %v823, %v822
        %v853 = vpack.c.bf16 %v825, %v824
        %v854 = vpack.c.bf16 %v827, %v826
        %v855 = vpack.c.bf16 %v829, %v828
        %v856 = vpack.c.bf16 %v831, %v830
        %v858 = vlaneseq
        %v859 = vshrl.u32 %v858, 7
        %v860 = vsub.s32 0, %v859
        %v861 = vrot.slane %v848, %v860
        %v879 = vunpack.c.l.b16 %v832
        %v880 = vunpack.c.l.b16 %v833
        %v881 = vunpack.c.l.b16 %v834
        %v882 = vunpack.c.l.b16 %v835
        %v883 = vunpack.c.l.b16 %v836
        %v884 = vunpack.c.l.b16 %v837
        %v885 = vunpack.c.l.b16 %v838
        %v886 = vunpack.c.l.b16 %v839
        %v887 = vunpack.c.l.b16 %v840
        %v888 = vunpack.c.l.b16 %v841
        %v889 = vunpack.c.l.b16 %v842
        %v890 = vunpack.c.l.b16 %v843
        %v891 = vunpack.c.l.b16 %v844
        %v892 = vunpack.c.l.b16 %v845
        %v893 = vunpack.c.l.b16 %v846
        %v894 = vunpack.c.l.b16 %v847
        %v895 = vpack.c.b16 %v880, %v879
        %v896 = vpack.c.b16 %v882, %v881
        %v897 = vpack.c.b16 %v884, %v883
        %v898 = vpack.c.b16 %v886, %v885
        %v899 = vpack.c.b16 %v888, %v887
        %v900 = vpack.c.b16 %v890, %v889
        %v901 = vpack.c.b16 %v892, %v891
        %v902 = vpack.c.b16 %v894, %v893
        %911 = vmatprep.subr.bf16.mxu0 0
        %912 = vmatpush1.bf16.msra.mxu0 %v895
        %913 = vmatprep.subr.bf16.mxu0 0
        %914 = vmatpush1.bf16.msra.mxu0 %v896
        %915 = vmatprep.subr.bf16.mxu0 0
        %916 = vmatpush1.bf16.msra.mxu0 %v897
        %917 = vmatprep.subr.bf16.mxu0 0
        %918 = vmatpush1.bf16.msra.mxu0 %v898
        %919 = vmatprep.subr.bf16.mxu0 0
        %920 = vmatpush1.bf16.msra.mxu0 %v899
        %921 = vmatprep.subr.bf16.mxu0 0
        %922 = vmatpush1.bf16.msra.mxu0 %v900
        %923 = vmatprep.subr.bf16.mxu0 0
        %924 = vmatpush1.bf16.msra.mxu0 %v901
        %925 = vmatprep.subr.bf16.mxu0 0
        %926 = vmatpush1.bf16.msra.mxu0 %v902
        %927 = vmatprep.subr.bf16.mxu0 0
        %928 = vmatpush1.bf16.msra.mxu0 0
        %929 = vmatprep.subr.bf16.mxu0 0
        %930 = vmatpush1.bf16.msra.mxu0 0
        %931 = vmatprep.subr.bf16.mxu0 0
        %932 = vmatpush1.bf16.msra.mxu0 0
        %933 = vmatprep.subr.bf16.mxu0 0
        %934 = vmatpush1.bf16.msra.mxu0 0
        %935 = vmatprep.subr.bf16.mxu0 0
        %936 = vmatpush1.bf16.msra.mxu0 0
        %937 = vmatprep.subr.bf16.mxu0 0
        %938 = vmatpush1.bf16.msra.mxu0 0
        %939 = vmatprep.subr.bf16.mxu0 0
        %940 = vmatpush1.bf16.msra.mxu0 0
        %941 = vmatprep.subr.bf16.mxu0 0
        %942 = vmatpush1.bf16.msra.mxu0 0
        %943 = vmatprep.mubr.bf16.mxu0 0
        %944 = vmatmul.mubr.bf16.gmra.mrb[0].mxu0 %v849
        %v945 = vpop.f32.mrb[0].mxu0
        %v946 = vadd.f32 %v861, %v945
        %v947 = vpop.f32.mrb[0].mxu0
        %v948 = vpop.f32.mrb[0].mxu0
        %v949 = vadd.f32 %v861, %v948
        %v950 = vpop.f32.mrb[0].mxu0
        %951 = vmatprep.mubr.bf16.mxu0 0
        %952 = vmatmul.mubr.bf16.gmra.mrb[0].mxu0 %v850
        %v953 = vpop.f32.mrb[0].mxu0
        %v954 = vadd.f32 %v861, %v953
        %v955 = vpop.f32.mrb[0].mxu0
        %v956 = vpop.f32.mrb[0].mxu0
        %v957 = vadd.f32 %v861, %v956
        %v958 = vpop.f32.mrb[0].mxu0
        %959 = vmatprep.mubr.bf16.mxu0 0
        %960 = vmatmul.mubr.bf16.gmra.mrb[0].mxu0 %v851
        %v961 = vpop.f32.mrb[0].mxu0
        %v962 = vadd.f32 %v861, %v961
        %v963 = vpop.f32.mrb[0].mxu0
        %v964 = vpop.f32.mrb[0].mxu0
        %v965 = vadd.f32 %v861, %v964
        %v966 = vpop.f32.mrb[0].mxu0
        %967 = vmatprep.mubr.bf16.mxu0 0
        %968 = vmatmul.mubr.bf16.gmra.mrb[0].mxu0 %v852
        %v969 = vpop.f32.mrb[0].mxu0
        %v970 = vadd.f32 %v861, %v969
        %v971 = vpop.f32.mrb[0].mxu0
        %v972 = vpop.f32.mrb[0].mxu0
        %v973 = vadd.f32 %v861, %v972
        %v974 = vpop.f32.mrb[0].mxu0
        %975 = vmatprep.mubr.bf16.mxu0 0
        %976 = vmatmul.mubr.bf16.gmra.mrb[0].mxu0 %v853
        %v977 = vpop.f32.mrb[0].mxu0
        %v978 = vadd.f32 %v861, %v977
        %v979 = vpop.f32.mrb[0].mxu0
        %v980 = vpop.f32.mrb[0].mxu0
        %v981 = vadd.f32 %v861, %v980
        %v982 = vpop.f32.mrb[0].mxu0
        %983 = vmatprep.mubr.bf16.mxu0 0
        %984 = vmatmul.mubr.bf16.gmra.mrb[0].mxu0 %v854
        %v985 = vpop.f32.mrb[0].mxu0
        %v986 = vadd.f32 %v861, %v985
        %v987 = vpop.f32.mrb[0].mxu0
        %v988 = vpop.f32.mrb[0].mxu0
        %v989 = vadd.f32 %v861, %v988
        %v990 = vpop.f32.mrb[0].mxu0
        %991 = vmatprep.mubr.bf16.mxu0 0
        %992 = vmatmul.mubr.bf16.gmra.mrb[0].mxu0 %v855
        %v993 = vpop.f32.mrb[0].mxu0
        %v994 = vadd.f32 %v861, %v993
        %v995 = vpop.f32.mrb[0].mxu0
        %v996 = vpop.f32.mrb[0].mxu0
        %v997 = vadd.f32 %v861, %v996
        %v998 = vpop.f32.mrb[0].mxu0
        %999 = vmatprep.mubr.bf16.mxu0 0
        %1000 = vmatmul.mubr.bf16.gmra.mrb[0].mxu0 %v856
        %v1001 = vpop.f32.mrb[0].mxu0
        %v1002 = vadd.f32 %v861, %v1001
        %v1003 = vpop.f32.mrb[0].mxu0
        %v1004 = vpop.f32.mrb[0].mxu0
        %v1005 = vadd.f32 %v861, %v1004
        %v1006 = vpop.f32.mrb[0].mxu0
        %1007 = vdwg.mxu0
        %v1008 = vtanh.pop %v946
        %v1009 = vtanh.pop %v949
        %v1010 = vtanh.pop %v954
        %v1011 = vtanh.pop %v957
        %v1012 = vtanh.pop %v962
        %v1013 = vtanh.pop %v965
        %v1014 = vtanh.pop %v970
        %v1015 = vtanh.pop %v973
        %v1016 = vtanh.pop %v978
        %v1017 = vtanh.pop %v981
        %v1018 = vtanh.pop %v986
        %v1019 = vtanh.pop %v989
        %v1020 = vtanh.pop %v994
        %v1021 = vtanh.pop %v997
        %v1022 = vtanh.pop %v1002
        %v1023 = vtanh.pop %v1005
        %v1024 = vld [vmem:[#allocation10] sm:$0xf]
        %v1025 = vld [vmem:[#allocation10 + $0x4] sm:$0xf]
        %v1026 = vld [vmem:[#allocation10 + $0x8] sm:$0xf]
        %v1027 = vld [vmem:[#allocation10 + $0xc] sm:$0xf]
        %v1028 = vld [vmem:[#allocation10 + $0x10] sm:$0xf]
        %v1029 = vld [vmem:[#allocation10 + $0x14] sm:$0xf]
        %v1030 = vld [vmem:[#allocation10 + $0x18] sm:$0xf]
        %v1031 = vld [vmem:[#allocation10 + $0x1c] sm:$0xf]
        %v1032 = vld [vmem:[#allocation10 + $0x20] sm:$0xf]
        %v1033 = vld [vmem:[#allocation10 + $0x24] sm:$0xf]
        %v1034 = vld [vmem:[#allocation10 + $0x28] sm:$0xf]
        %v1035 = vld [vmem:[#allocation10 + $0x2c] sm:$0xf]
        %v1036 = vld [vmem:[#allocation10 + $0x30] sm:$0xf]
        %v1037 = vld [vmem:[#allocation10 + $0x34] sm:$0xf]
        %v1038 = vld [vmem:[#allocation10 + $0x38] sm:$0xf]
        %v1039 = vld [vmem:[#allocation10 + $0x3c] sm:$0xf]
        %v1040 = vld [vmem:[%s7] sm:$0x1]
        %v1041 = vpack.c.bf16 %v1009, %v1008
        %v1042 = vpack.c.bf16 %v1011, %v1010
        %v1043 = vpack.c.bf16 %v1013, %v1012
        %v1044 = vpack.c.bf16 %v1015, %v1014
        %v1045 = vpack.c.bf16 %v1017, %v1016
        %v1046 = vpack.c.bf16 %v1019, %v1018
        %v1047 = vpack.c.bf16 %v1021, %v1020
        %v1048 = vpack.c.bf16 %v1023, %v1022
        %v1050 = vlaneseq
        %v1051 = vshrl.u32 %v1050, 7
        %v1052 = vsub.s32 0, %v1051
        %v1053 = vrot.slane %v1040, %v1052
        %v1071 = vunpack.c.l.b16 %v1024
        %v1072 = vunpack.c.l.b16 %v1025
        %v1073 = vunpack.c.l.b16 %v1026
        %v1074 = vunpack.c.l.b16 %v1027
        %v1075 = vunpack.c.l.b16 %v1028
        %v1076 = vunpack.c.l.b16 %v1029
        %v1077 = vunpack.c.l.b16 %v1030
        %v1078 = vunpack.c.l.b16 %v1031
        %v1079 = vunpack.c.l.b16 %v1032
        %v1080 = vunpack.c.l.b16 %v1033
        %v1081 = vunpack.c.l.b16 %v1034
        %v1082 = vunpack.c.l.b16 %v1035
        %v1083 = vunpack.c.l.b16 %v1036
        %v1084 = vunpack.c.l.b16 %v1037
        %v1085 = vunpack.c.l.b16 %v1038
        %v1086 = vunpack.c.l.b16 %v1039
        %v1087 = vpack.c.b16 %v1072, %v1071
        %v1088 = vpack.c.b16 %v1074, %v1073
        %v1089 = vpack.c.b16 %v1076, %v1075
        %v1090 = vpack.c.b16 %v1078, %v1077
        %v1091 = vpack.c.b16 %v1080, %v1079
        %v1092 = vpack.c.b16 %v1082, %v1081
        %v1093 = vpack.c.b16 %v1084, %v1083
        %v1094 = vpack.c.b16 %v1086, %v1085
        %1103 = vmatprep.subr.bf16.mxu0 0
        %1104 = vmatpush1.bf16.msra.mxu0 %v1087
        %1105 = vmatprep.subr.bf16.mxu0 0
        %1106 = vmatpush1.bf16.msra.mxu0 %v1088
        %1107 = vmatprep.subr.bf16.mxu0 0
        %1108 = vmatpush1.bf16.msra.mxu0 %v1089
        %1109 = vmatprep.subr.bf16.mxu0 0
        %1110 = vmatpush1.bf16.msra.mxu0 %v1090
        %1111 = vmatprep.subr.bf16.mxu0 0
        %1112 = vmatpush1.bf16.msra.mxu0 %v1091
        %1113 = vmatprep.subr.bf16.mxu0 0
        %1114 = vmatpush1.bf16.msra.mxu0 %v1092
        %1115 = vmatprep.subr.bf16.mxu0 0
        %1116 = vmatpush1.bf16.msra.mxu0 %v1093
        %1117 = vmatprep.subr.bf16.mxu0 0
        %1118 = vmatpush1.bf16.msra.mxu0 %v1094
        %1119 = vmatprep.subr.bf16.mxu0 0
        %1120 = vmatpush1.bf16.msra.mxu0 0
        %1121 = vmatprep.subr.bf16.mxu0 0
        %1122 = vmatpush1.bf16.msra.mxu0 0
        %1123 = vmatprep.subr.bf16.mxu0 0
        %1124 = vmatpush1.bf16.msra.mxu0 0
        %1125 = vmatprep.subr.bf16.mxu0 0
        %1126 = vmatpush1.bf16.msra.mxu0 0
        %1127 = vmatprep.subr.bf16.mxu0 0
        %1128 = vmatpush1.bf16.msra.mxu0 0
        %1129 = vmatprep.subr.bf16.mxu0 0
        %1130 = vmatpush1.bf16.msra.mxu0 0
        %1131 = vmatprep.subr.bf16.mxu0 0
        %1132 = vmatpush1.bf16.msra.mxu0 0
        %1133 = vmatprep.subr.bf16.mxu0 0
        %1134 = vmatpush1.bf16.msra.mxu0 0
        %1135 = vmatprep.mubr.bf16.mxu0 0
        %1136 = vmatmul.mubr.bf16.gmra.mrb[0].mxu0 %v1041
        %v1137 = vpop.f32.mrb[0].mxu0
        %v1138 = vadd.f32 %v1053, %v1137
        %v1139 = vpop.f32.mrb[0].mxu0
        %v1140 = vpop.f32.mrb[0].mxu0
        %v1141 = vadd.f32 %v1053, %v1140
        %v1142 = vpop.f32.mrb[0].mxu0
        %1143 = vmatprep.mubr.bf16.mxu0 0
        %1144 = vmatmul.mubr.bf16.gmra.mrb[0].mxu0 %v1042
        %v1145 = vpop.f32.mrb[0].mxu0
        %v1146 = vadd.f32 %v1053, %v1145
        %v1147 = vpop.f32.mrb[0].mxu0
        %v1148 = vpop.f32.mrb[0].mxu0
        %v1149 = vadd.f32 %v1053, %v1148
        %v1150 = vpop.f32.mrb[0].mxu0
        %1151 = vmatprep.mubr.bf16.mxu0 0
        %1152 = vmatmul.mubr.bf16.gmra.mrb[0].mxu0 %v1043
        %v1153 = vpop.f32.mrb[0].mxu0
        %v1154 = vadd.f32 %v1053, %v1153
        %v1155 = vpop.f32.mrb[0].mxu0
        %v1156 = vpop.f32.mrb[0].mxu0
        %v1157 = vadd.f32 %v1053, %v1156
        %v1158 = vpop.f32.mrb[0].mxu0
        %1159 = vmatprep.mubr.bf16.mxu0 0
        %1160 = vmatmul.mubr.bf16.gmra.mrb[0].mxu0 %v1044
        %v1161 = vpop.f32.mrb[0].mxu0
        %v1162 = vadd.f32 %v1053, %v1161
        %v1163 = vpop.f32.mrb[0].mxu0
        %v1164 = vpop.f32.mrb[0].mxu0
        %v1165 = vadd.f32 %v1053, %v1164
        %v1166 = vpop.f32.mrb[0].mxu0
        %1167 = vmatprep.mubr.bf16.mxu0 0
        %1168 = vmatmul.mubr.bf16.gmra.mrb[0].mxu0 %v1045
        %v1169 = vpop.f32.mrb[0].mxu0
        %v1170 = vadd.f32 %v1053, %v1169
        %v1171 = vpop.f32.mrb[0].mxu0
        %v1172 = vpop.f32.mrb[0].mxu0
        %v1173 = vadd.f32 %v1053, %v1172
        %v1174 = vpop.f32.mrb[0].mxu0
        %1175 = vmatprep.mubr.bf16.mxu0 0
        %1176 = vmatmul.mubr.bf16.gmra.mrb[0].mxu0 %v1046
        %v1177 = vpop.f32.mrb[0].mxu0
        %v1178 = vadd.f32 %v1053, %v1177
        %v1179 = vpop.f32.mrb[0].mxu0
        %v1180 = vpop.f32.mrb[0].mxu0
        %v1181 = vadd.f32 %v1053, %v1180
        %v1182 = vpop.f32.mrb[0].mxu0
        %1183 = vmatprep.mubr.bf16.mxu0 0
        %1184 = vmatmul.mubr.bf16.gmra.mrb[0].mxu0 %v1047
        %v1185 = vpop.f32.mrb[0].mxu0
        %v1186 = vadd.f32 %v1053, %v1185
        %v1187 = vpop.f32.mrb[0].mxu0
        %v1188 = vpop.f32.mrb[0].mxu0
        %v1189 = vadd.f32 %v1053, %v1188
        %v1190 = vpop.f32.mrb[0].mxu0
        %1191 = vmatprep.mubr.bf16.mxu0 0
        %1192 = vmatmul.mubr.bf16.gmra.mrb[0].mxu0 %v1048
        %v1193 = vpop.f32.mrb[0].mxu0
        %v1194 = vadd.f32 %v1053, %v1193
        %v1195 = vpop.f32.mrb[0].mxu0
        %v1196 = vpop.f32.mrb[0].mxu0
        %v1197 = vadd.f32 %v1053, %v1196
        %v1198 = vpop.f32.mrb[0].mxu0
        %1199 = vdwg.mxu0
        %v1200 = vtanh.pop %v1138
        %v1201 = vtanh.pop %v1141
        %v1202 = vtanh.pop %v1146
        %v1203 = vtanh.pop %v1149
        %v1204 = vtanh.pop %v1154
        %v1205 = vtanh.pop %v1157
        %v1206 = vtanh.pop %v1162
        %v1207 = vtanh.pop %v1165
        %v1208 = vtanh.pop %v1170
        %v1209 = vtanh.pop %v1173
        %v1210 = vtanh.pop %v1178
        %v1211 = vtanh.pop %v1181
        %v1212 = vtanh.pop %v1186
        %v1213 = vtanh.pop %v1189
        %v1214 = vtanh.pop %v1194
        %v1215 = vtanh.pop %v1197
        %v1216 = vld [vmem:[#allocation11] sm:$0xf]
        %v1217 = vld [vmem:[#allocation11 + $0x4] sm:$0xf]
        %v1218 = vld [vmem:[#allocation11 + $0x8] sm:$0xf]
        %v1219 = vld [vmem:[#allocation11 + $0xc] sm:$0xf]
        %v1220 = vld [vmem:[#allocation11 + $0x10] sm:$0xf]
        %v1221 = vld [vmem:[#allocation11 + $0x14] sm:$0xf]
        %v1222 = vld [vmem:[#allocation11 + $0x18] sm:$0xf]
        %v1223 = vld [vmem:[#allocation11 + $0x1c] sm:$0xf]
        %v1224 = vld [vmem:[#allocation11 + $0x20] sm:$0xf]
        %v1225 = vld [vmem:[#allocation11 + $0x24] sm:$0xf]
        %v1226 = vld [vmem:[#allocation11 + $0x28] sm:$0xf]
        %v1227 = vld [vmem:[#allocation11 + $0x2c] sm:$0xf]
        %v1228 = vld [vmem:[#allocation11 + $0x30] sm:$0xf]
        %v1229 = vld [vmem:[#allocation11 + $0x34] sm:$0xf]
        %v1230 = vld [vmem:[#allocation11 + $0x38] sm:$0xf]
        %v1231 = vld [vmem:[#allocation11 + $0x3c] sm:$0xf]
        %v1232 = vld [vmem:[%s9] sm:$0x1]
        %v1233 = vpack.c.bf16 %v1201, %v1200
        %v1234 = vpack.c.bf16 %v1203, %v1202
        %v1235 = vpack.c.bf16 %v1205, %v1204
        %v1236 = vpack.c.bf16 %v1207, %v1206
        %v1237 = vpack.c.bf16 %v1209, %v1208
        %v1238 = vpack.c.bf16 %v1211, %v1210
        %v1239 = vpack.c.bf16 %v1213, %v1212
        %v1240 = vpack.c.bf16 %v1215, %v1214
        %v1242 = vlaneseq
        %v1243 = vshrl.u32 %v1242, 7
        %v1244 = vsub.s32 0, %v1243
        %v1245 = vrot.slane %v1232, %v1244
        %v1263 = vunpack.c.l.b16 %v1216
        %v1264 = vunpack.c.l.b16 %v1217
        %v1265 = vunpack.c.l.b16 %v1218
        %v1266 = vunpack.c.l.b16 %v1219
        %v1267 = vunpack.c.l.b16 %v1220
        %v1268 = vunpack.c.l.b16 %v1221
        %v1269 = vunpack.c.l.b16 %v1222
        %v1270 = vunpack.c.l.b16 %v1223
        %v1271 = vunpack.c.l.b16 %v1224
        %v1272 = vunpack.c.l.b16 %v1225
        %v1273 = vunpack.c.l.b16 %v1226
        %v1274 = vunpack.c.l.b16 %v1227
        %v1275 = vunpack.c.l.b16 %v1228
        %v1276 = vunpack.c.l.b16 %v1229
        %v1277 = vunpack.c.l.b16 %v1230
        %v1278 = vunpack.c.l.b16 %v1231
        %v1279 = vpack.c.b16 %v1264, %v1263
        %v1280 = vpack.c.b16 %v1266, %v1265
        %v1281 = vpack.c.b16 %v1268, %v1267
        %v1282 = vpack.c.b16 %v1270, %v1269
        %v1283 = vpack.c.b16 %v1272, %v1271
        %v1284 = vpack.c.b16 %v1274, %v1273
        %v1285 = vpack.c.b16 %v1276, %v1275
        %v1286 = vpack.c.b16 %v1278, %v1277
        %1295 = vmatprep.subr.bf16.mxu0 0
        %1296 = vmatpush1.bf16.msra.mxu0 %v1279
        %1297 = vmatprep.subr.bf16.mxu0 0
        %1298 = vmatpush1.bf16.msra.mxu0 %v1280
        %1299 = vmatprep.subr.bf16.mxu0 0
        %1300 = vmatpush1.bf16.msra.mxu0 %v1281
        %1301 = vmatprep.subr.bf16.mxu0 0
        %1302 = vmatpush1.bf16.msra.mxu0 %v1282
        %1303 = vmatprep.subr.bf16.mxu0 0
        %1304 = vmatpush1.bf16.msra.mxu0 %v1283
        %1305 = vmatprep.subr.bf16.mxu0 0
        %1306 = vmatpush1.bf16.msra.mxu0 %v1284
        %1307 = vmatprep.subr.bf16.mxu0 0
        %1308 = vmatpush1.bf16.msra.mxu0 %v1285
        %1309 = vmatprep.subr.bf16.mxu0 0
        %1310 = vmatpush1.bf16.msra.mxu0 %v1286
        %1311 = vmatprep.subr.bf16.mxu0 0
        %1312 = vmatpush1.bf16.msra.mxu0 0
        %1313 = vmatprep.subr.bf16.mxu0 0
        %1314 = vmatpush1.bf16.msra.mxu0 0
        %1315 = vmatprep.subr.bf16.mxu0 0
        %1316 = vmatpush1.bf16.msra.mxu0 0
        %1317 = vmatprep.subr.bf16.mxu0 0
        %1318 = vmatpush1.bf16.msra.mxu0 0
        %1319 = vmatprep.subr.bf16.mxu0 0
        %1320 = vmatpush1.bf16.msra.mxu0 0
        %1321 = vmatprep.subr.bf16.mxu0 0
        %1322 = vmatpush1.bf16.msra.mxu0 0
        %1323 = vmatprep.subr.bf16.mxu0 0
        %1324 = vmatpush1.bf16.msra.mxu0 0
        %1325 = vmatprep.subr.bf16.mxu0 0
        %1326 = vmatpush1.bf16.msra.mxu0 0
        %1327 = vmatprep.mubr.bf16.mxu0 0
        %1328 = vmatmul.mubr.bf16.gmra.mrb[0].mxu0 %v1233
        %v1329 = vpop.f32.mrb[0].mxu0
        %v1330 = vadd.f32 %v1245, %v1329
        %v1331 = vpop.f32.mrb[0].mxu0
        %v1332 = vpop.f32.mrb[0].mxu0
        %v1333 = vadd.f32 %v1245, %v1332
        %v1334 = vpop.f32.mrb[0].mxu0
        %1335 = vmatprep.mubr.bf16.mxu0 0
        %1336 = vmatmul.mubr.bf16.gmra.mrb[0].mxu0 %v1234
        %v1337 = vpop.f32.mrb[0].mxu0
        %v1338 = vadd.f32 %v1245, %v1337
        %v1339 = vpop.f32.mrb[0].mxu0
        %v1340 = vpop.f32.mrb[0].mxu0
        %v1341 = vadd.f32 %v1245, %v1340
        %v1342 = vpop.f32.mrb[0].mxu0
        %1343 = vmatprep.mubr.bf16.mxu0 0
        %1344 = vmatmul.mubr.bf16.gmra.mrb[0].mxu0 %v1235
        %v1345 = vpop.f32.mrb[0].mxu0
        %v1346 = vadd.f32 %v1245, %v1345
        %v1347 = vpop.f32.mrb[0].mxu0
        %v1348 = vpop.f32.mrb[0].mxu0
        %v1349 = vadd.f32 %v1245, %v1348
        %v1350 = vpop.f32.mrb[0].mxu0
        %1351 = vmatprep.mubr.bf16.mxu0 0
        %1352 = vmatmul.mubr.bf16.gmra.mrb[0].mxu0 %v1236
        %v1353 = vpop.f32.mrb[0].mxu0
        %v1354 = vadd.f32 %v1245, %v1353
        %v1355 = vpop.f32.mrb[0].mxu0
        %v1356 = vpop.f32.mrb[0].mxu0
        %v1357 = vadd.f32 %v1245, %v1356
        %v1358 = vpop.f32.mrb[0].mxu0
        %1359 = vmatprep.mubr.bf16.mxu0 0
        %1360 = vmatmul.mubr.bf16.gmra.mrb[0].mxu0 %v1237
        %v1361 = vpop.f32.mrb[0].mxu0
        %v1362 = vadd.f32 %v1245, %v1361
        %v1363 = vpop.f32.mrb[0].mxu0
        %v1364 = vpop.f32.mrb[0].mxu0
        %v1365 = vadd.f32 %v1245, %v1364
        %v1366 = vpop.f32.mrb[0].mxu0
        %1367 = vmatprep.mubr.bf16.mxu0 0
        %1368 = vmatmul.mubr.bf16.gmra.mrb[0].mxu0 %v1238
        %v1369 = vpop.f32.mrb[0].mxu0
        %v1370 = vadd.f32 %v1245, %v1369
        %v1371 = vpop.f32.mrb[0].mxu0
        %v1372 = vpop.f32.mrb[0].mxu0
        %v1373 = vadd.f32 %v1245, %v1372
        %v1374 = vpop.f32.mrb[0].mxu0
        %1375 = vmatprep.mubr.bf16.mxu0 0
        %1376 = vmatmul.mubr.bf16.gmra.mrb[0].mxu0 %v1239
        %v1377 = vpop.f32.mrb[0].mxu0
        %v1378 = vadd.f32 %v1245, %v1377
        %v1379 = vpop.f32.mrb[0].mxu0
        %v1380 = vpop.f32.mrb[0].mxu0
        %v1381 = vadd.f32 %v1245, %v1380
        %v1382 = vpop.f32.mrb[0].mxu0
        %1383 = vmatprep.mubr.bf16.mxu0 0
        %1384 = vmatmul.mubr.bf16.gmra.mrb[0].mxu0 %v1240
        %v1385 = vpop.f32.mrb[0].mxu0
        %v1386 = vadd.f32 %v1245, %v1385
        %v1387 = vpop.f32.mrb[0].mxu0
        %v1388 = vpop.f32.mrb[0].mxu0
        %v1389 = vadd.f32 %v1245, %v1388
        %v1390 = vpop.f32.mrb[0].mxu0
        %1391 = vdwg.mxu0
        %1392 = vst [vmem:[%s475] sm:$0xff] %v1330
        %1393 = vst [vmem:[%s475 + $0x8] sm:$0xff] %v1333
        %1394 = vst [vmem:[%s475 + $0x10] sm:$0xff] %v1338
        %1395 = vst [vmem:[%s475 + $0x18] sm:$0xff] %v1341
        %1396 = vst [vmem:[%s475 + $0x20] sm:$0xff] %v1346
        %1397 = vst [vmem:[%s475 + $0x28] sm:$0xff] %v1349
        %1398 = vst [vmem:[%s475 + $0x30] sm:$0xff] %v1354
        %1399 = vst [vmem:[%s475 + $0x38] sm:$0xff] %v1357
        %1400 = vst [vmem:[%s475 + $0x40] sm:$0xff] %v1362
        %1401 = vst [vmem:[%s475 + $0x48] sm:$0xff] %v1365
        %1402 = vst [vmem:[%s475 + $0x50] sm:$0xff] %v1370
        %1403 = vst [vmem:[%s475 + $0x58] sm:$0xff] %v1373
        %1404 = vst [vmem:[%s475 + $0x60] sm:$0xff] %v1378
        %1405 = vst [vmem:[%s475 + $0x68] sm:$0xff] %v1381
        %1406 = vst [vmem:[%s475 + $0x70] sm:$0xff] %v1386
        %1407 = vst [vmem:[%s475 + $0x78] sm:$0xff] %v1389
        %s1408 = sand.u32 %s260, 1
        %s1409 = scalar_lea.sflag [#allocation4], %s1408
        %s1410 = sand.u32 %s260, 1
        %s1411 = smul.addr %s1410, 128
        %s1412 = scalar_lea.vmem [#allocation13], %s1411
        // Predicated region
        $region85: #{tpu_custom_call.1} parent=59 // pred_check
          %p1413 = pneg %p270
        $region86: #{tpu_custom_call.1} parent=59 // pred_check_branch
          %1415 = sbr.rel (%p1413) target = $region88
        $region87: #{tpu_custom_call.1} parent=59 // pred_region
          %s1416 = smul.u32 16, %s32
          %s1418 = ssub.s32 2048, 2048
          %1419 = vsyncadd %s1409, %s1418
          %s1420 = smul.addr %s1416, 128
          %s1421 = scalar_lea.hbm %s10, %s1420
          %s1422 = sshll.u32 %s1412, 4
          %s1423 = int_to_ptr.vmem [resolvable:$true] %s1422
          %1428 = dma.vmem_to_hbm [thread:$0]  %s1423, 2048, %s1421, %s1409, 128, 128, 8
        $region88: #{tpu_custom_call.1} parent=59 // pred_fallthru
          _
      $region60: #{tpu_custom_call.1} parent=5 // pred_fallthru
        _
      %p1429 = scmp.le.s32.totalorder 2, %s27
      // Predicated region
      $region89: #{tpu_custom_call.1} parent=5 // pred_check
        %p1430 = pneg %p1429
      $region90: #{tpu_custom_call.1} parent=5 // pred_check_branch
        %1432 = sbr.rel (%p1430) target = $region92
      $region91: #{tpu_custom_call.1} parent=5 // pred_region
        %s1433 = ssub.s32 %s27, 2
        // Predicated region
        $region93: #{tpu_custom_call.1} parent=91 // pred_check
          %p1434 = pneg %p276
        $region94: #{tpu_custom_call.1} parent=91 // pred_check_branch
          %1436 = sbr.rel (%p1434) target = $region96
        $region95: #{tpu_custom_call.1} parent=91 // pred_region
          %s1437 = sand.u32 %s261, 1
          %s1438 = scalar_lea.sflag [#allocation4], %s1437
          %s1439 = sand.u32 %s261, 1
          %s1440 = smul.addr %s1439, 128
          %s1441 = scalar_lea.vmem [#allocation13], %s1440
          %1442 = dma.done %s1438, 2048
        $region96: #{tpu_custom_call.1} parent=91 // pred_fallthru
          _
      $region92: #{tpu_custom_call.1} parent=5 // pred_fallthru
        _
    $region6: #{tpu_custom_call.1} parent=1 // loop_footer
      %s31 = sadd.s32 1, %s27
    $region7: #{tpu_custom_call.1} parent=1 // loop_footer_branch
      %26 = sbr.rel target = $region3
    $region8: #{tpu_custom_call.1} parent=1 // loop_exit
      _
    %1443 = vsyncpa [#allocation3], 1
    %s1444 = scalar_lea.sflag [#allocation3], 1
    %1445 = vsyncpa %s1444, 1
    %1446 = vsyncpa [#allocation6], 1
    %s1447 = scalar_lea.sflag [#allocation6], 1
    %1448 = vsyncpa %s1447, 1
    %1449 = vsyncpa [#allocation9], 1
    %1450 = vsyncpa [#allocation12], 1
    %1451 = vsyncpa [#allocation4], 1
    %s1452 = scalar_lea.sflag [#allocation4], 1
    %1453 = vsyncpa %s1452, 1

</llo_original>
